<compile_context>
chip_gen: v6e
topology: v6e:2x2x1
jax: 0.10.0
libtpu: 0.0.40
codegen_flags: <defaults>
</compile_context>

<pallas_src>
import functools
import math

import jax
import jax.numpy as jnp
from jax.experimental import pallas as pl
from jax.experimental.pallas import tpu as pltpu

TEXT_DIM = 768
INV_SQRT2 = 1.0 / math.sqrt(2.0)


# ----------------------------------------------------------------------------
# Fused kernel: self-attn + LN(text) + cross-attn + feed-forward + 1x1 conv.
# One grid step per n_b merged batch elements; every matmul runs on the MXU in
# bf16 with f32 accumulation; all elementwise math stays in f32.
# ----------------------------------------------------------------------------
def transformer_fused_kernel(
    img_ref, txt_ref,
    wqkv1_ref, bqkv1_ref,          # packed self-attn QKV  (C, 3C) / (1, 3C)
    wq2_ref, bq2_ref,              # cross-attn Q          (C, C)  / (1, C)
    wkv2_ref, bkv2_ref,            # packed cross-attn KV  (768, 2C) / (1, 2C)
    lnw_ref, lnb_ref,              # LayerNorm affine      (1, 768)
    w1_ref, b1_ref, w2_ref, b2_ref,  # feed-forward
    convw_ref, convb_ref,          # dense 1x1 conv        (C, C) / (C, 1)
    out_ref,                       # (1, C, n_b*S) f32 — lane-dense packed
    img2_scratch,                  # (n_b*S, C) f32 VMEM scratch for strided reads
    *, n_b, seq, k,
):
  img = img_ref[...]               # (n_b*S, C)   f32
  txt = txt_ref[...]               # (n_b*T, 768) f32
  c = img.shape[-1]
  t = txt.shape[0] // n_b

  def proj(x, w_ref, b_ref):       # bf16 MXU matmul, f32 accumulate + f32 bias
    return jnp.dot(x.astype(jnp.bfloat16), w_ref[...],
                   preferred_element_type=jnp.float32) + b_ref[...]

  def attend(q, key, v):           # softmax scale already folded into Q weights
    s = jax.lax.dot_general(
        q.astype(jnp.bfloat16), key.astype(jnp.bfloat16),
        dimension_numbers=(((1,), (1,)), ((), ())),
        preferred_element_type=jnp.float32)
    m = jnp.max(s, axis=-1, keepdims=True)
    p = jnp.exp(s - m)
    p = p * pl.reciprocal(jnp.sum(p, axis=-1, keepdims=True), approx=True)
    return jnp.dot(p.astype(jnp.bfloat16), v.astype(jnp.bfloat16),
                   preferred_element_type=jnp.float32)

  # --- self-attention (block-diagonal across the merged batches) + residual --
  qkv = proj(img, wqkv1_ref, bqkv1_ref)                     # (n_b*S, 3C)
  att1 = [
      attend(qkv[i * seq:(i + 1) * seq, :c],
             qkv[i * seq:(i + 1) * seq, c:2 * c],
             qkv[i * seq:(i + 1) * seq, 2 * c:])
      for i in range(n_b)
  ]
  img = img + jnp.concatenate(att1, axis=0)

  # --- LayerNorm((768,), eps=1e-5, affine) on text (f32, row-wise) -----------
  mu = jnp.mean(txt, axis=-1, keepdims=True)
  var = jnp.mean(jnp.square(txt - mu), axis=-1, keepdims=True)
  txt_n = (txt - mu) * jax.lax.rsqrt(var + 1e-5) * lnw_ref[...] + lnb_ref[...]

  # --- cross-attention image -> text (block-diagonal) + residual -------------
  q2 = proj(img, wq2_ref, bq2_ref)                          # (n_b*S, C)
  kv2 = proj(txt_n, wkv2_ref, bkv2_ref)                     # (n_b*T, 2C)
  att2 = [
      attend(q2[i * seq:(i + 1) * seq],
             kv2[i * t:(i + 1) * t, :c],
             kv2[i * t:(i + 1) * t, c:])
      for i in range(n_b)
  ]
  img = img + jnp.concatenate(att2, axis=0)

  # --- feed-forward: Linear -> GELU(erf) -> Dropout(0.0) -> Linear, residual -
  # TODO(synk): on v5e, consider tanh-GELU if a bundle dump shows the EUP slot
  # binding at production S (exact erf kept here to match torch numerics).
  h = proj(img, w1_ref, b1_ref)                             # (n_b*S, 8C)
  h = 0.5 * h * (1.0 + jax.lax.erf(h * INV_SQRT2))
  img2 = proj(h, w2_ref, b2_ref) + img                      # (n_b*S, C) f32

  # --- fused 1x1 conv on the row-major (C, S) view of each batch's img2 ------
  # torch's (S, C) -> (C, S) reshape is a flat reinterpretation: row i of the
  # (C, S) view, block r, equals img2 rows i*k + r.  Store img2 to VMEM scratch
  # and take k strided sublane reads per sub-batch; conv weight stays dense.
  img2_scratch[...] = img2
  convw = convw_ref[...]                                    # (C, C) bf16
  convb = convb_ref[...]                                    # (C, 1) f32
  for i in range(n_b):
    base = i * seq
    for r in range(k):
      xr = img2_scratch[pl.ds(base + r, c, stride=k), :]    # (C, C) f32
      blk = jnp.dot(convw, xr.astype(jnp.bfloat16),
                    preferred_element_type=jnp.float32) + convb
      out_ref[0, :, base + r * c:base + (r + 1) * c] = blk


# ----------------------------------------------------------------------------
# BlockSpec helpers.
# ----------------------------------------------------------------------------
def _full_spec(arr):
  # Grid-invariant weights: the block index never changes, so single-buffer.
  nd = arr.ndim
  imap = lambda i, _nd=nd: (0,) * _nd
  try:
    return pl.BlockSpec(arr.shape, imap, pipeline_mode=pl.Buffered(1))
  except (AttributeError, TypeError):      # older jax without pipeline_mode
    return pl.BlockSpec(arr.shape, imap)


def _pick_batch_per_step(batch):
  # Merge 2-4 batch elements per grid step to fill the MXU M dimension and
  # amortize per-step overhead, but keep >=2 parallel grid steps when possible
  # so both v7x TensorCores get work.
  for n_b in (4, 3, 2):
    if batch >= 2 * n_b and batch % n_b == 0:
      return n_b
  return 1


# ----------------------------------------------------------------------------
# Advisory cost estimate so XLA schedules neighbors around the custom call.
# ----------------------------------------------------------------------------
def _cost_estimate(b, s, t, c):
  flops = 2 * b * (
      s * c * 3 * c            # packed self-attn QKV projection
      + 2 * s * s * c          # self-attn scores + PV
      + s * c * c              # cross-attn Q projection
      + t * TEXT_DIM * 2 * c   # packed cross-attn KV projection
      + 2 * s * t * c          # cross-attn scores + PV
      + 2 * s * c * 8 * c      # feed-forward
      + s * c * c)             # 1x1 conv
  transcendentals = b * (s * s + s * t     # softmax exp
                         + 8 * s * c       # erf GELU
                         + 2 * s + t)      # softmax recip + LN rsqrt
  weight_bytes = (2 * (3 * c * c + c * c + 2 * TEXT_DIM * c + 16 * c * c + c * c)
                  + 4 * (2 * TEXT_DIM + 14 * c))
  bytes_accessed = 4 * b * (2 * s * c + t * TEXT_DIM) + weight_bytes
  return pl.CostEstimate(flops=int(flops),
                         transcendentals=int(transcendentals),
                         bytes_accessed=int(bytes_accessed))


# ----------------------------------------------------------------------------
# One-time parameter preparation: pack / transpose / fold scale / cast to bf16.
# ----------------------------------------------------------------------------
def prepare_params(p, height, width):
  c = p["wq1"].shape[0]
  s = height * width
  # TODO(synk): when (H*W) % C != 0, fall back to an unfused 1x1-conv pallas_call.
  assert s % c == 0, "fused 1x1-conv path requires (H*W) % C == 0"
  scale = 1.0 / math.sqrt(c)
  bf = jnp.bfloat16

  pp = {}
  pp["w_qkv1"] = jnp.concatenate(
      [p["wq1"].T * scale, p["wk1"].T, p["wv1"].T], axis=1).astype(bf)  # (C,3C)
  pp["b_qkv1"] = jnp.concatenate(
      [p["bq1"] * scale, p["bk1"], p["bv1"]], axis=1)                   # (1,3C)
  pp["w_q2"] = (p["wq2"].T * scale).astype(bf)                          # (C,C)
  pp["b_q2"] = p["bq2"] * scale                                         # (1,C)
  pp["w_kv2"] = jnp.concatenate(
      [p["wk2"].T, p["wv2"].T], axis=1).astype(bf)                      # (768,2C)
  pp["b_kv2"] = jnp.concatenate([p["bk2"], p["bv2"]], axis=1)           # (1,2C)
  pp["ln_w"] = p["ln_w"]
  pp["ln_b"] = p["ln_b"]
  pp["w1"] = p["w1"].T.astype(bf)                                       # (C,8C)
  pp["b1"] = p["b1"]
  pp["w2"] = p["w2"].T.astype(bf)                                       # (8C,C)
  pp["b2"] = p["b2"]
  pp["conv_w"] = p["conv_w"].astype(bf)                                 # (C,C) dense
  pp["conv_b"] = p["conv_b"].reshape(c, 1)                              # (C,1)
  return pp


# ----------------------------------------------------------------------------
# Forward wrapper (jitted): one pallas_call, merged-batch grid axis.
# ----------------------------------------------------------------------------
def transformer_forward(image, text, pp):
  b, c, h, w = image.shape
  s = h * w
  t = text.shape[1]
  assert s % c == 0, "fused 1x1-conv path requires (H*W) % C == 0"
  k = s // c

  n_b = _pick_batch_per_step(b)
  steps = b // n_b

  # torch: image.reshape(batch, H*W, C) — row-major reinterpretation; also
  # flatten the batch axis so each grid step gets a contiguous token block.
  img_tokens = image.reshape(b * s, c)
  txt_tokens = text.reshape(b * t, TEXT_DIM)

  weight_args = (
      pp["w_qkv1"], pp["b_qkv1"], pp["w_q2"], pp["b_q2"],
      pp["w_kv2"], pp["b_kv2"], pp["ln_w"], pp["ln_b"],
      pp["w1"], pp["b1"], pp["w2"], pp["b2"],
      pp["conv_w"], pp["conv_b"],
  )
  in_specs = [
      pl.BlockSpec((n_b * s, c), lambda i: (i, 0)),
      pl.BlockSpec((n_b * t, TEXT_DIM), lambda i: (i, 0)),
  ]
  in_specs += [_full_spec(a) for a in weight_args]

  kernel = functools.partial(transformer_fused_kernel, n_b=n_b, seq=s, k=k)

  out = pl.pallas_call(
      kernel,
      out_shape=jax.ShapeDtypeStruct((steps, c, n_b * s), jnp.float32),
      grid=(steps,),
      in_specs=in_specs,
      out_specs=pl.BlockSpec((1, c, n_b * s), lambda i: (i, 0, 0)),
      scratch_shapes=[pltpu.VMEM((n_b * s, c), jnp.float32)],
      compiler_params=pltpu.CompilerParams(
          dimension_semantics=("parallel",)),
      cost_estimate=_cost_estimate(b, s, t, c),
  )(img_tokens, txt_tokens, *weight_args)

  # Each step packs n_b batches' (C, S) conv outputs lane-densely as (C, n_b*S);
  # unpack to the torch output layout (B, C, H, W) (row-major reinterpret).
  out = jnp.transpose(out.reshape(steps, c, n_b, s), (0, 2, 1, 3))
  return out.reshape(b, c, h, w)


transformer_forward = jax.jit(transformer_forward)


# ----------------------------------------------------------------------------
# Deterministic parameter init (shapes follow the PyTorch __init__).
# ----------------------------------------------------------------------------
def init_params(key, c):
  keys = jax.random.split(key, 9)

  def lin(kk, out_dim, in_dim):
    kw, kb = jax.random.split(kk)
    wt = jax.random.normal(kw, (out_dim, in_dim), jnp.float32) * 0.02
    bias = jax.random.normal(kb, (1, out_dim), jnp.float32) * 0.02
    return wt, bias

  p = {}
  p["wq1"], p["bq1"] = lin(keys[0], c, c)          # queries1
  p["wk1"], p["bk1"] = lin(keys[1], c, c)          # keys1
  p["wv1"], p["bv1"] = lin(keys[2], c, c)          # values1
  p["wq2"], p["bq2"] = lin(keys[3], c, c)          # queries2
  p["wk2"], p["bk2"] = lin(keys[4], c, TEXT_DIM)   # keys2
  p["wv2"], p["bv2"] = lin(keys[5], c, TEXT_DIM)   # values2
  p["ln_w"] = jnp.ones((1, TEXT_DIM), jnp.float32)  # LayerNorm default init
  p["ln_b"] = jnp.zeros((1, TEXT_DIM), jnp.float32)
  p["w1"], p["b1"] = lin(keys[6], 8 * c, c)        # feedforward[0]
  p["w2"], p["b2"] = lin(keys[7], c, 8 * c)        # feedforward[3]
  cw, cb = lin(keys[8], c, c)                      # out: Conv2d(c, c, 1x1)
  p["conv_w"] = cw
  p["conv_b"] = cb.reshape(c)
  return p


# ----------------------------------------------------------------------------
# Pure-JAX f32 reference (mirrors the PyTorch forward) for a sanity check.
# ----------------------------------------------------------------------------
def reference_forward(image, text, p):
  b, c, h, w = image.shape
  s = h * w
  x = image.reshape(b, s, c)

  def lin(v, wk, bk):
    return v @ p[wk].T + p[bk]

  def sdpa(q, kk, v):
    scale = 1.0 / jnp.sqrt(jnp.float32(q.shape[-1]))
    sc = jnp.einsum("bqd,bkd->bqk", q, kk) * scale
    return jnp.einsum("bqk,bkd->bqd", jax.nn.softmax(sc, axis=-1), v)

  x = x + sdpa(lin(x, "wq1", "bq1"), lin(x, "wk1", "bk1"), lin(x, "wv1", "bv1"))

  mu = jnp.mean(text, axis=-1, keepdims=True)
  var = jnp.mean(jnp.square(text - mu), axis=-1, keepdims=True)
  tn = (text - mu) / jnp.sqrt(var + 1e-5) * p["ln_w"] + p["ln_b"]

  x = x + sdpa(lin(x, "wq2", "bq2"), lin(tn, "wk2", "bk2"), lin(tn, "wv2", "bv2"))

  hdn = jax.nn.gelu(lin(x, "w1", "b1"), approximate=False)
  x2 = lin(hdn, "w2", "b2") + x

  xc = x2.reshape(b, c, s)
  out = jnp.einsum("oi,bip->bop", p["conv_w"], xc) + p["conv_b"][None, :, None]
  return out.reshape(b, c, h, w)


if __name__ == "__main__":
  B, C, H, W, T = 4, 32, 8, 8, 8
  key = jax.random.PRNGKey(0)
  k_img, k_txt, k_par = jax.random.split(key, 3)

  image = jax.random.normal(k_img, (B, C, H, W), jnp.float32)
  text = jax.random.normal(k_txt, (B, T, TEXT_DIM), jnp.float32)
  params = init_params(k_par, C)
  prepped = prepare_params(params, H, W)

  out = transformer_forward(image, text, prepped)
  out = jax.block_until_ready(out)
  assert out.shape == (B, C, H, W)

  ref = reference_forward(image, text, params)
  # bf16 MXU inputs + approx reciprocal in the softmax shift numerics slightly
  # vs the pure-f32 reference; 5e-3 is ample headroom (observed err ~1e-3).
  if not jnp.allclose(out, ref, rtol=5e-3, atol=5e-3):
    err = float(jnp.max(jnp.abs(out - ref)))
    raise AssertionError(f"Pallas kernel output mismatch (max abs err {err})")

  print("KERNEL_OK")
</pallas_src>

<mosaic_0001>
module attributes {stable_mosaic.version = 11 : i64} {
  func.func @transformer_fused_kernel(%arg0: i32, %arg1: memref<128x32xf32, #tpu.memory_space<vmem>>, %arg2: memref<16x768xf32, #tpu.memory_space<vmem>>, %arg3: memref<32x96xbf16, #tpu.memory_space<vmem>>, %arg4: memref<1x96xf32, #tpu.memory_space<vmem>>, %arg5: memref<32x32xbf16, #tpu.memory_space<vmem>>, %arg6: memref<1x32xf32, #tpu.memory_space<vmem>>, %arg7: memref<768x64xbf16, #tpu.memory_space<vmem>>, %arg8: memref<1x64xf32, #tpu.memory_space<vmem>>, %arg9: memref<1x768xf32, #tpu.memory_space<vmem>>, %arg10: memref<1x768xf32, #tpu.memory_space<vmem>>, %arg11: memref<32x256xbf16, #tpu.memory_space<vmem>>, %arg12: memref<1x256xf32, #tpu.memory_space<vmem>>, %arg13: memref<256x32xbf16, #tpu.memory_space<vmem>>, %arg14: memref<1x32xf32, #tpu.memory_space<vmem>>, %arg15: memref<32x32xbf16, #tpu.memory_space<vmem>>, %arg16: memref<32x1xf32, #tpu.memory_space<vmem>>, %arg17: memref<1x32x128xf32, #tpu.memory_space<vmem>>, %arg18: memref<128x32xf32, #tpu.memory_space<vmem>>) attributes {dimension_semantics = [#tpu.dimension_semantics<parallel>], iteration_bounds = array<i64: 2>, scalar_prefetch = 0 : i64, scratch_operands = 1 : i64, tpu.core_type = #tpu.core_type<tc>, window_params = [{transform_indices = @transform_0, window_bounds = array<i64: 128, 32>}, {transform_indices = @transform_1, window_bounds = array<i64: 16, 768>}, {pipeline_mode = #tpu.pipeline_mode<synchronous>, transform_indices = @transform_2, window_bounds = array<i64: 32, 96>}, {pipeline_mode = #tpu.pipeline_mode<synchronous>, transform_indices = @transform_3, window_bounds = array<i64: 1, 96>}, {pipeline_mode = #tpu.pipeline_mode<synchronous>, transform_indices = @transform_4, window_bounds = array<i64: 32, 32>}, {pipeline_mode = #tpu.pipeline_mode<synchronous>, transform_indices = @transform_5, window_bounds = array<i64: 1, 32>}, {pipeline_mode = #tpu.pipeline_mode<synchronous>, transform_indices = @transform_6, window_bounds = array<i64: 768, 64>}, {pipeline_mode = #tpu.pipeline_mode<synchronous>, transform_indices = @transform_7, window_bounds = array<i64: 1, 64>}, {pipeline_mode = #tpu.pipeline_mode<synchronous>, transform_indices = @transform_8, window_bounds = array<i64: 1, 768>}, {pipeline_mode = #tpu.pipeline_mode<synchronous>, transform_indices = @transform_9, window_bounds = array<i64: 1, 768>}, {pipeline_mode = #tpu.pipeline_mode<synchronous>, transform_indices = @transform_10, window_bounds = array<i64: 32, 256>}, {pipeline_mode = #tpu.pipeline_mode<synchronous>, transform_indices = @transform_11, window_bounds = array<i64: 1, 256>}, {pipeline_mode = #tpu.pipeline_mode<synchronous>, transform_indices = @transform_12, window_bounds = array<i64: 256, 32>}, {pipeline_mode = #tpu.pipeline_mode<synchronous>, transform_indices = @transform_13, window_bounds = array<i64: 1, 32>}, {pipeline_mode = #tpu.pipeline_mode<synchronous>, transform_indices = @transform_14, window_bounds = array<i64: 32, 32>}, {pipeline_mode = #tpu.pipeline_mode<synchronous>, transform_indices = @transform_15, window_bounds = array<i64: 32, 1>}, {transform_indices = @transform_16, window_bounds = array<i64: 1, 32, 128>}]} {
    %c0 = arith.constant 0 : index
    %c0_0 = arith.constant 0 : index
    %0 = vector.load %arg1[%c0, %c0_0] : memref<128x32xf32, #tpu.memory_space<vmem>>, vector<128x32xf32>
    %c0_1 = arith.constant 0 : index
    %c0_2 = arith.constant 0 : index
    %1 = vector.load %arg2[%c0_1, %c0_2] : memref<16x768xf32, #tpu.memory_space<vmem>>, vector<16x768xf32>
    %2 = arith.truncf %0 : vector<128x32xf32> to vector<128x32xbf16>
    %c0_3 = arith.constant 0 : index
    %c0_4 = arith.constant 0 : index
    %3 = vector.load %arg3[%c0_3, %c0_4] : memref<32x96xbf16, #tpu.memory_space<vmem>>, vector<32x96xbf16>
    %cst = arith.constant dense<0.000000e+00> : vector<128x96xf32>
    %4 = tpu.matmul %2, %3, %cst {dimension_numbers = #tpu.dot_dimension_numbers<[1], [0], [0], [1], [0, 0, 1, 1], [], []>} : vector<128x32xbf16>, vector<32x96xbf16>, vector<128x96xf32> -> vector<128x96xf32>
    %c0_5 = arith.constant 0 : index
    %c0_6 = arith.constant 0 : index
    %5 = vector.load %arg4[%c0_5, %c0_6] : memref<1x96xf32, #tpu.memory_space<vmem>>, vector<1x96xf32>
    %6 = vector.broadcast %5 : vector<1x96xf32> to vector<128x96xf32>
    %7 = arith.addf %4, %6 : vector<128x96xf32>
    %8 = vector.extract_strided_slice %7 {offsets = [0, 0], sizes = [64, 32], strides = [1, 1]} : vector<128x96xf32> to vector<64x32xf32>
    %9 = vector.extract_strided_slice %7 {offsets = [0, 32], sizes = [64, 32], strides = [1, 1]} : vector<128x96xf32> to vector<64x32xf32>
    %10 = vector.extract_strided_slice %7 {offsets = [0, 64], sizes = [64, 32], strides = [1, 1]} : vector<128x96xf32> to vector<64x32xf32>
    %11 = arith.truncf %8 : vector<64x32xf32> to vector<64x32xbf16>
    %12 = arith.truncf %9 : vector<64x32xf32> to vector<64x32xbf16>
    %cst_7 = arith.constant dense<0.000000e+00> : vector<64x64xf32>
    %13 = tpu.matmul %11, %12, %cst_7 {dimension_numbers = #tpu.dot_dimension_numbers<[1], [1], [0], [0], [0, 0, 1, 0], [], []>} : vector<64x32xbf16>, vector<64x32xbf16>, vector<64x64xf32> -> vector<64x64xf32>
    %cst_8 = arith.constant dense<0xFF800000> : vector<64xf32>
    %14 = vector.multi_reduction <maximumf>, %13, %cst_8 [1] : vector<64x64xf32> to vector<64xf32>
    %15 = vector.shape_cast %14 : vector<64xf32> to vector<64x1xf32>
    %16 = vector.broadcast %15 : vector<64x1xf32> to vector<64x64xf32>
    %17 = arith.subf %13, %16 : vector<64x64xf32>
    %18 = math.exp %17 : vector<64x64xf32>
    %cst_9 = arith.constant dense<0.000000e+00> : vector<64xf32>
    %19 = vector.multi_reduction <add>, %18, %cst_9 [1] : vector<64x64xf32> to vector<64xf32>
    %20 = vector.shape_cast %19 : vector<64xf32> to vector<64x1xf32>
    %21 = tpu.reciprocal %20 {approx = true} : vector<64x1xf32> -> vector<64x1xf32>
    %22 = vector.broadcast %21 : vector<64x1xf32> to vector<64x64xf32>
    %23 = arith.mulf %18, %22 : vector<64x64xf32>
    %24 = arith.truncf %23 : vector<64x64xf32> to vector<64x64xbf16>
    %25 = arith.truncf %10 : vector<64x32xf32> to vector<64x32xbf16>
    %cst_10 = arith.constant dense<0.000000e+00> : vector<64x32xf32>
    %26 = tpu.matmul %24, %25, %cst_10 {dimension_numbers = #tpu.dot_dimension_numbers<[1], [0], [0], [1], [0, 0, 1, 1], [], []>} : vector<64x64xbf16>, vector<64x32xbf16>, vector<64x32xf32> -> vector<64x32xf32>
    %27 = vector.extract_strided_slice %7 {offsets = [64, 0], sizes = [64, 32], strides = [1, 1]} : vector<128x96xf32> to vector<64x32xf32>
    %28 = vector.extract_strided_slice %7 {offsets = [64, 32], sizes = [64, 32], strides = [1, 1]} : vector<128x96xf32> to vector<64x32xf32>
    %29 = vector.extract_strided_slice %7 {offsets = [64, 64], sizes = [64, 32], strides = [1, 1]} : vector<128x96xf32> to vector<64x32xf32>
    %30 = arith.truncf %27 : vector<64x32xf32> to vector<64x32xbf16>
    %31 = arith.truncf %28 : vector<64x32xf32> to vector<64x32xbf16>
    %cst_11 = arith.constant dense<0.000000e+00> : vector<64x64xf32>
    %32 = tpu.matmul %30, %31, %cst_11 {dimension_numbers = #tpu.dot_dimension_numbers<[1], [1], [0], [0], [0, 0, 1, 0], [], []>} : vector<64x32xbf16>, vector<64x32xbf16>, vector<64x64xf32> -> vector<64x64xf32>
    %cst_12 = arith.constant dense<0xFF800000> : vector<64xf32>
    %33 = vector.multi_reduction <maximumf>, %32, %cst_12 [1] : vector<64x64xf32> to vector<64xf32>
    %34 = vector.shape_cast %33 : vector<64xf32> to vector<64x1xf32>
    %35 = vector.broadcast %34 : vector<64x1xf32> to vector<64x64xf32>
    %36 = arith.subf %32, %35 : vector<64x64xf32>
    %37 = math.exp %36 : vector<64x64xf32>
    %cst_13 = arith.constant dense<0.000000e+00> : vector<64xf32>
    %38 = vector.multi_reduction <add>, %37, %cst_13 [1] : vector<64x64xf32> to vector<64xf32>
    %39 = vector.shape_cast %38 : vector<64xf32> to vector<64x1xf32>
    %40 = tpu.reciprocal %39 {approx = true} : vector<64x1xf32> -> vector<64x1xf32>
    %41 = vector.broadcast %40 : vector<64x1xf32> to vector<64x64xf32>
    %42 = arith.mulf %37, %41 : vector<64x64xf32>
    %43 = arith.truncf %42 : vector<64x64xf32> to vector<64x64xbf16>
    %44 = arith.truncf %29 : vector<64x32xf32> to vector<64x32xbf16>
    %cst_14 = arith.constant dense<0.000000e+00> : vector<64x32xf32>
    %45 = tpu.matmul %43, %44, %cst_14 {dimension_numbers = #tpu.dot_dimension_numbers<[1], [0], [0], [1], [0, 0, 1, 1], [], []>} : vector<64x64xbf16>, vector<64x32xbf16>, vector<64x32xf32> -> vector<64x32xf32>
    %46 = tpu.concatenate %26, %45 in 0 : vector<64x32xf32>, vector<64x32xf32> -> vector<128x32xf32>
    %47 = arith.addf %0, %46 : vector<128x32xf32>
    %cst_15 = arith.constant dense<0.000000e+00> : vector<16xf32>
    %48 = vector.multi_reduction <add>, %1, %cst_15 [1] : vector<16x768xf32> to vector<16xf32>
    %49 = vector.shape_cast %48 : vector<16xf32> to vector<16x1xf32>
    %cst_16 = arith.constant 7.680000e+02 : f32
    %50 = vector.broadcast %cst_16 : f32 to vector<16x1xf32>
    %51 = arith.divf %49, %50 : vector<16x1xf32>
    %52 = vector.broadcast %51 : vector<16x1xf32> to vector<16x768xf32>
    %53 = arith.subf %1, %52 : vector<16x768xf32>
    %54 = arith.mulf %53, %53 : vector<16x768xf32>
    %cst_17 = arith.constant dense<0.000000e+00> : vector<16xf32>
    %55 = vector.multi_reduction <add>, %54, %cst_17 [1] : vector<16x768xf32> to vector<16xf32>
    %56 = vector.shape_cast %55 : vector<16xf32> to vector<16x1xf32>
    %cst_18 = arith.constant 7.680000e+02 : f32
    %57 = vector.broadcast %cst_18 : f32 to vector<16x1xf32>
    %58 = arith.divf %56, %57 : vector<16x1xf32>
    %59 = vector.broadcast %51 : vector<16x1xf32> to vector<16x768xf32>
    %60 = arith.subf %1, %59 : vector<16x768xf32>
    %cst_19 = arith.constant 9.99999974E-6 : f32
    %61 = vector.broadcast %cst_19 : f32 to vector<16x1xf32>
    %62 = arith.addf %58, %61 : vector<16x1xf32>
    %63 = math.rsqrt %62 : vector<16x1xf32>
    %64 = vector.broadcast %63 : vector<16x1xf32> to vector<16x768xf32>
    %65 = arith.mulf %60, %64 : vector<16x768xf32>
    %c0_20 = arith.constant 0 : index
    %c0_21 = arith.constant 0 : index
    %66 = vector.load %arg9[%c0_20, %c0_21] : memref<1x768xf32, #tpu.memory_space<vmem>>, vector<1x768xf32>
    %67 = vector.broadcast %66 : vector<1x768xf32> to vector<16x768xf32>
    %68 = arith.mulf %65, %67 : vector<16x768xf32>
    %c0_22 = arith.constant 0 : index
    %c0_23 = arith.constant 0 : index
    %69 = vector.load %arg10[%c0_22, %c0_23] : memref<1x768xf32, #tpu.memory_space<vmem>>, vector<1x768xf32>
    %70 = vector.broadcast %69 : vector<1x768xf32> to vector<16x768xf32>
    %71 = arith.addf %68, %70 : vector<16x768xf32>
    %72 = arith.truncf %47 : vector<128x32xf32> to vector<128x32xbf16>
    %c0_24 = arith.constant 0 : index
    %c0_25 = arith.constant 0 : index
    %73 = vector.load %arg5[%c0_24, %c0_25] : memref<32x32xbf16, #tpu.memory_space<vmem>>, vector<32x32xbf16>
    %cst_26 = arith.constant dense<0.000000e+00> : vector<128x32xf32>
    %74 = tpu.matmul %72, %73, %cst_26 {dimension_numbers = #tpu.dot_dimension_numbers<[1], [0], [0], [1], [0, 0, 1, 1], [], []>} : vector<128x32xbf16>, vector<32x32xbf16>, vector<128x32xf32> -> vector<128x32xf32>
    %c0_27 = arith.constant 0 : index
    %c0_28 = arith.constant 0 : index
    %75 = vector.load %arg6[%c0_27, %c0_28] : memref<1x32xf32, #tpu.memory_space<vmem>>, vector<1x32xf32>
    %76 = vector.broadcast %75 : vector<1x32xf32> to vector<128x32xf32>
    %77 = arith.addf %74, %76 : vector<128x32xf32>
    %78 = arith.truncf %71 : vector<16x768xf32> to vector<16x768xbf16>
    %c0_29 = arith.constant 0 : index
    %c0_30 = arith.constant 0 : index
    %79 = vector.load %arg7[%c0_29, %c0_30] : memref<768x64xbf16, #tpu.memory_space<vmem>>, vector<768x64xbf16>
    %cst_31 = arith.constant dense<0.000000e+00> : vector<16x64xf32>
    %80 = tpu.matmul %78, %79, %cst_31 {dimension_numbers = #tpu.dot_dimension_numbers<[1], [0], [0], [1], [0, 0, 1, 1], [], []>} : vector<16x768xbf16>, vector<768x64xbf16>, vector<16x64xf32> -> vector<16x64xf32>
    %c0_32 = arith.constant 0 : index
    %c0_33 = arith.constant 0 : index
    %81 = vector.load %arg8[%c0_32, %c0_33] : memref<1x64xf32, #tpu.memory_space<vmem>>, vector<1x64xf32>
    %82 = vector.broadcast %81 : vector<1x64xf32> to vector<16x64xf32>
    %83 = arith.addf %80, %82 : vector<16x64xf32>
    %84 = vector.extract_strided_slice %77 {offsets = [0, 0], sizes = [64, 32], strides = [1, 1]} : vector<128x32xf32> to vector<64x32xf32>
    %85 = vector.extract_strided_slice %83 {offsets = [0, 0], sizes = [8, 32], strides = [1, 1]} : vector<16x64xf32> to vector<8x32xf32>
    %86 = vector.extract_strided_slice %83 {offsets = [0, 32], sizes = [8, 32], strides = [1, 1]} : vector<16x64xf32> to vector<8x32xf32>
    %87 = arith.truncf %84 : vector<64x32xf32> to vector<64x32xbf16>
    %88 = arith.truncf %85 : vector<8x32xf32> to vector<8x32xbf16>
    %cst_34 = arith.constant dense<0.000000e+00> : vector<64x8xf32>
    %89 = tpu.matmul %87, %88, %cst_34 {dimension_numbers = #tpu.dot_dimension_numbers<[1], [1], [0], [0], [0, 0, 1, 0], [], []>} : vector<64x32xbf16>, vector<8x32xbf16>, vector<64x8xf32> -> vector<64x8xf32>
    %cst_35 = arith.constant dense<0xFF800000> : vector<64xf32>
    %90 = vector.multi_reduction <maximumf>, %89, %cst_35 [1] : vector<64x8xf32> to vector<64xf32>
    %91 = vector.shape_cast %90 : vector<64xf32> to vector<64x1xf32>
    %92 = vector.broadcast %91 : vector<64x1xf32> to vector<64x8xf32>
    %93 = arith.subf %89, %92 : vector<64x8xf32>
    %94 = math.exp %93 : vector<64x8xf32>
    %cst_36 = arith.constant dense<0.000000e+00> : vector<64xf32>
    %95 = vector.multi_reduction <add>, %94, %cst_36 [1] : vector<64x8xf32> to vector<64xf32>
    %96 = vector.shape_cast %95 : vector<64xf32> to vector<64x1xf32>
    %97 = tpu.reciprocal %96 {approx = true} : vector<64x1xf32> -> vector<64x1xf32>
    %98 = vector.broadcast %97 : vector<64x1xf32> to vector<64x8xf32>
    %99 = arith.mulf %94, %98 : vector<64x8xf32>
    %100 = arith.truncf %99 : vector<64x8xf32> to vector<64x8xbf16>
    %101 = arith.truncf %86 : vector<8x32xf32> to vector<8x32xbf16>
    %cst_37 = arith.constant dense<0.000000e+00> : vector<64x32xf32>
    %102 = tpu.matmul %100, %101, %cst_37 {dimension_numbers = #tpu.dot_dimension_numbers<[1], [0], [0], [1], [0, 0, 1, 1], [], []>} : vector<64x8xbf16>, vector<8x32xbf16>, vector<64x32xf32> -> vector<64x32xf32>
    %103 = vector.extract_strided_slice %77 {offsets = [64, 0], sizes = [64, 32], strides = [1, 1]} : vector<128x32xf32> to vector<64x32xf32>
    %104 = vector.extract_strided_slice %83 {offsets = [8, 0], sizes = [8, 32], strides = [1, 1]} : vector<16x64xf32> to vector<8x32xf32>
    %105 = vector.extract_strided_slice %83 {offsets = [8, 32], sizes = [8, 32], strides = [1, 1]} : vector<16x64xf32> to vector<8x32xf32>
    %106 = arith.truncf %103 : vector<64x32xf32> to vector<64x32xbf16>
    %107 = arith.truncf %104 : vector<8x32xf32> to vector<8x32xbf16>
    %cst_38 = arith.constant dense<0.000000e+00> : vector<64x8xf32>
    %108 = tpu.matmul %106, %107, %cst_38 {dimension_numbers = #tpu.dot_dimension_numbers<[1], [1], [0], [0], [0, 0, 1, 0], [], []>} : vector<64x32xbf16>, vector<8x32xbf16>, vector<64x8xf32> -> vector<64x8xf32>
    %cst_39 = arith.constant dense<0xFF800000> : vector<64xf32>
    %109 = vector.multi_reduction <maximumf>, %108, %cst_39 [1] : vector<64x8xf32> to vector<64xf32>
    %110 = vector.shape_cast %109 : vector<64xf32> to vector<64x1xf32>
    %111 = vector.broadcast %110 : vector<64x1xf32> to vector<64x8xf32>
    %112 = arith.subf %108, %111 : vector<64x8xf32>
    %113 = math.exp %112 : vector<64x8xf32>
    %cst_40 = arith.constant dense<0.000000e+00> : vector<64xf32>
    %114 = vector.multi_reduction <add>, %113, %cst_40 [1] : vector<64x8xf32> to vector<64xf32>
    %115 = vector.shape_cast %114 : vector<64xf32> to vector<64x1xf32>
    %116 = tpu.reciprocal %115 {approx = true} : vector<64x1xf32> -> vector<64x1xf32>
    %117 = vector.broadcast %116 : vector<64x1xf32> to vector<64x8xf32>
    %118 = arith.mulf %113, %117 : vector<64x8xf32>
    %119 = arith.truncf %118 : vector<64x8xf32> to vector<64x8xbf16>
    %120 = arith.truncf %105 : vector<8x32xf32> to vector<8x32xbf16>
    %cst_41 = arith.constant dense<0.000000e+00> : vector<64x32xf32>
    %121 = tpu.matmul %119, %120, %cst_41 {dimension_numbers = #tpu.dot_dimension_numbers<[1], [0], [0], [1], [0, 0, 1, 1], [], []>} : vector<64x8xbf16>, vector<8x32xbf16>, vector<64x32xf32> -> vector<64x32xf32>
    %122 = tpu.concatenate %102, %121 in 0 : vector<64x32xf32>, vector<64x32xf32> -> vector<128x32xf32>
    %123 = arith.addf %47, %122 : vector<128x32xf32>
    %124 = arith.truncf %123 : vector<128x32xf32> to vector<128x32xbf16>
    %c0_42 = arith.constant 0 : index
    %c0_43 = arith.constant 0 : index
    %125 = vector.load %arg11[%c0_42, %c0_43] : memref<32x256xbf16, #tpu.memory_space<vmem>>, vector<32x256xbf16>
    %cst_44 = arith.constant dense<0.000000e+00> : vector<128x256xf32>
    %126 = tpu.matmul %124, %125, %cst_44 {dimension_numbers = #tpu.dot_dimension_numbers<[1], [0], [0], [1], [0, 0, 1, 1], [], []>} : vector<128x32xbf16>, vector<32x256xbf16>, vector<128x256xf32> -> vector<128x256xf32>
    %c0_45 = arith.constant 0 : index
    %c0_46 = arith.constant 0 : index
    %127 = vector.load %arg12[%c0_45, %c0_46] : memref<1x256xf32, #tpu.memory_space<vmem>>, vector<1x256xf32>
    %128 = vector.broadcast %127 : vector<1x256xf32> to vector<128x256xf32>
    %129 = arith.addf %126, %128 : vector<128x256xf32>
    %cst_47 = arith.constant 5.000000e-01 : f32
    %130 = vector.broadcast %cst_47 : f32 to vector<128x256xf32>
    %131 = arith.mulf %130, %129 : vector<128x256xf32>
    %cst_48 = arith.constant 0.707106769 : f32
    %132 = vector.broadcast %cst_48 : f32 to vector<128x256xf32>
    %133 = arith.mulf %129, %132 : vector<128x256xf32>
    %134 = math.erf %133 : vector<128x256xf32>
    %cst_49 = arith.constant 1.000000e+00 : f32
    %135 = vector.broadcast %cst_49 : f32 to vector<128x256xf32>
    %136 = arith.addf %135, %134 : vector<128x256xf32>
    %137 = arith.mulf %131, %136 : vector<128x256xf32>
    %138 = arith.truncf %137 : vector<128x256xf32> to vector<128x256xbf16>
    %c0_50 = arith.constant 0 : index
    %c0_51 = arith.constant 0 : index
    %139 = vector.load %arg13[%c0_50, %c0_51] : memref<256x32xbf16, #tpu.memory_space<vmem>>, vector<256x32xbf16>
    %cst_52 = arith.constant dense<0.000000e+00> : vector<128x32xf32>
    %140 = tpu.matmul %138, %139, %cst_52 {dimension_numbers = #tpu.dot_dimension_numbers<[1], [0], [0], [1], [0, 0, 1, 1], [], []>} : vector<128x256xbf16>, vector<256x32xbf16>, vector<128x32xf32> -> vector<128x32xf32>
    %c0_53 = arith.constant 0 : index
    %c0_54 = arith.constant 0 : index
    %141 = vector.load %arg14[%c0_53, %c0_54] : memref<1x32xf32, #tpu.memory_space<vmem>>, vector<1x32xf32>
    %142 = vector.broadcast %141 : vector<1x32xf32> to vector<128x32xf32>
    %143 = arith.addf %140, %142 : vector<128x32xf32>
    %144 = arith.addf %143, %123 : vector<128x32xf32>
    %c0_55 = arith.constant 0 : index
    %c0_56 = arith.constant 0 : index
    %145 = vector.load %arg18[%c0_55, %c0_56] : memref<128x32xf32, #tpu.memory_space<vmem>>, vector<128x32xf32>
    tpu.vector_store %arg18[%c0_55, %c0_56], %144 {strides = array<i32>} : memref<128x32xf32, #tpu.memory_space<vmem>>, vector<128x32xf32>,
    %c0_57 = arith.constant 0 : index
    %c0_58 = arith.constant 0 : index
    %146 = vector.load %arg15[%c0_57, %c0_58] : memref<32x32xbf16, #tpu.memory_space<vmem>>, vector<32x32xbf16>
    %c0_59 = arith.constant 0 : index
    %c0_60 = arith.constant 0 : index
    %147 = vector.load %arg16[%c0_59, %c0_60] : memref<32x1xf32, #tpu.memory_space<vmem>>, vector<32x1xf32>
    %c0_61 = arith.constant 0 : index
    %c0_62 = arith.constant 0 : index
    %148 = tpu.strided_load %arg18[%c0_61, %c0_62] {strides = array<i32: 2, 1>} : memref<128x32xf32, #tpu.memory_space<vmem>>, vector<32x32xf32>
    %149 = arith.truncf %148 : vector<32x32xf32> to vector<32x32xbf16>
    %cst_63 = arith.constant dense<0.000000e+00> : vector<32x32xf32>
    %150 = tpu.matmul %146, %149, %cst_63 {dimension_numbers = #tpu.dot_dimension_numbers<[1], [0], [0], [1], [0, 0, 1, 1], [], []>} : vector<32x32xbf16>, vector<32x32xbf16>, vector<32x32xf32> -> vector<32x32xf32>
    %151 = vector.broadcast %147 : vector<32x1xf32> to vector<32x32xf32>
    %152 = arith.addf %150, %151 : vector<32x32xf32>
    %c0_64 = arith.constant 0 : index
    %c0_65 = arith.constant 0 : index
    %c0_66 = arith.constant 0 : index
    %153 = vector.load %arg17[%c0_64, %c0_65, %c0_66] : memref<1x32x128xf32, #tpu.memory_space<vmem>>, vector<1x32x32xf32>
    %154 = vector.shape_cast %153 : vector<1x32x32xf32> to vector<32x32xf32>
    %155 = vector.shape_cast %152 : vector<32x32xf32> to vector<1x32x32xf32>
    tpu.vector_store %arg17[%c0_64, %c0_65, %c0_66], %155 {strides = array<i32>} : memref<1x32x128xf32, #tpu.memory_space<vmem>>, vector<1x32x32xf32>,
    %c1 = arith.constant 1 : index
    %c0_67 = arith.constant 0 : index
    %156 = tpu.strided_load %arg18[%c1, %c0_67] {strides = array<i32: 2, 1>} : memref<128x32xf32, #tpu.memory_space<vmem>>, vector<32x32xf32>
    %157 = arith.truncf %156 : vector<32x32xf32> to vector<32x32xbf16>
    %cst_68 = arith.constant dense<0.000000e+00> : vector<32x32xf32>
    %158 = tpu.matmul %146, %157, %cst_68 {dimension_numbers = #tpu.dot_dimension_numbers<[1], [0], [0], [1], [0, 0, 1, 1], [], []>} : vector<32x32xbf16>, vector<32x32xbf16>, vector<32x32xf32> -> vector<32x32xf32>
    %159 = vector.broadcast %147 : vector<32x1xf32> to vector<32x32xf32>
    %160 = arith.addf %158, %159 : vector<32x32xf32>
    %c0_69 = arith.constant 0 : index
    %c0_70 = arith.constant 0 : index
    %c32 = arith.constant 32 : index
    %161 = vector.load %arg17[%c0_69, %c0_70, %c32] : memref<1x32x128xf32, #tpu.memory_space<vmem>>, vector<1x32x32xf32>
    %162 = vector.shape_cast %161 : vector<1x32x32xf32> to vector<32x32xf32>
    %163 = vector.shape_cast %160 : vector<32x32xf32> to vector<1x32x32xf32>
    tpu.vector_store %arg17[%c0_69, %c0_70, %c32], %163 {strides = array<i32>} : memref<1x32x128xf32, #tpu.memory_space<vmem>>, vector<1x32x32xf32>,
    %c64 = arith.constant 64 : index
    %c0_71 = arith.constant 0 : index
    %164 = tpu.strided_load %arg18[%c64, %c0_71] {strides = array<i32: 2, 1>} : memref<128x32xf32, #tpu.memory_space<vmem>>, vector<32x32xf32>
    %165 = arith.truncf %164 : vector<32x32xf32> to vector<32x32xbf16>
    %cst_72 = arith.constant dense<0.000000e+00> : vector<32x32xf32>
    %166 = tpu.matmul %146, %165, %cst_72 {dimension_numbers = #tpu.dot_dimension_numbers<[1], [0], [0], [1], [0, 0, 1, 1], [], []>} : vector<32x32xbf16>, vector<32x32xbf16>, vector<32x32xf32> -> vector<32x32xf32>
    %167 = vector.broadcast %147 : vector<32x1xf32> to vector<32x32xf32>
    %168 = arith.addf %166, %167 : vector<32x32xf32>
    %c0_73 = arith.constant 0 : index
    %c0_74 = arith.constant 0 : index
    %c64_75 = arith.constant 64 : index
    %169 = vector.load %arg17[%c0_73, %c0_74, %c64_75] : memref<1x32x128xf32, #tpu.memory_space<vmem>>, vector<1x32x32xf32>
    %170 = vector.shape_cast %169 : vector<1x32x32xf32> to vector<32x32xf32>
    %171 = vector.shape_cast %168 : vector<32x32xf32> to vector<1x32x32xf32>
    tpu.vector_store %arg17[%c0_73, %c0_74, %c64_75], %171 {strides = array<i32>} : memref<1x32x128xf32, #tpu.memory_space<vmem>>, vector<1x32x32xf32>,
    %c65 = arith.constant 65 : index
    %c0_76 = arith.constant 0 : index
    %172 = tpu.strided_load %arg18[%c65, %c0_76] {strides = array<i32: 2, 1>} : memref<128x32xf32, #tpu.memory_space<vmem>>, vector<32x32xf32>
    %173 = arith.truncf %172 : vector<32x32xf32> to vector<32x32xbf16>
    %cst_77 = arith.constant dense<0.000000e+00> : vector<32x32xf32>
    %174 = tpu.matmul %146, %173, %cst_77 {dimension_numbers = #tpu.dot_dimension_numbers<[1], [0], [0], [1], [0, 0, 1, 1], [], []>} : vector<32x32xbf16>, vector<32x32xbf16>, vector<32x32xf32> -> vector<32x32xf32>
    %175 = vector.broadcast %147 : vector<32x1xf32> to vector<32x32xf32>
    %176 = arith.addf %174, %175 : vector<32x32xf32>
    %c0_78 = arith.constant 0 : index
    %c0_79 = arith.constant 0 : index
    %c96 = arith.constant 96 : index
    %177 = vector.load %arg17[%c0_78, %c0_79, %c96] : memref<1x32x128xf32, #tpu.memory_space<vmem>>, vector<1x32x32xf32>
    %178 = vector.shape_cast %177 : vector<1x32x32xf32> to vector<32x32xf32>
    %179 = vector.shape_cast %176 : vector<32x32xf32> to vector<1x32x32xf32>
    tpu.vector_store %arg17[%c0_78, %c0_79, %c96], %179 {strides = array<i32>} : memref<1x32x128xf32, #tpu.memory_space<vmem>>, vector<1x32x32xf32>,
    return
  }
  func.func @transform_0(%arg0: i32) -> (i32, i32) {
    %c0_i32 = arith.constant 0 : i32
    %c0_i32_0 = arith.constant 0 : i32
    return %arg0, %c0_i32 : i32, i32
  }
  func.func @transform_1(%arg0: i32) -> (i32, i32) {
    %c0_i32 = arith.constant 0 : i32
    %c0_i32_0 = arith.constant 0 : i32
    return %arg0, %c0_i32 : i32, i32
  }
  func.func @transform_2(%arg0: i32) -> (i32, i32) {
    %c0_i32 = arith.constant 0 : i32
    %c0_i32_0 = arith.constant 0 : i32
    %c0_i32_1 = arith.constant 0 : i32
    return %c0_i32, %c0_i32_0 : i32, i32
  }
  func.func @transform_3(%arg0: i32) -> (i32, i32) {
    %c0_i32 = arith.constant 0 : i32
    %c0_i32_0 = arith.constant 0 : i32
    %c0_i32_1 = arith.constant 0 : i32
    return %c0_i32, %c0_i32_0 : i32, i32
  }
  func.func @transform_4(%arg0: i32) -> (i32, i32) {
    %c0_i32 = arith.constant 0 : i32
    %c0_i32_0 = arith.constant 0 : i32
    %c0_i32_1 = arith.constant 0 : i32
    return %c0_i32, %c0_i32_0 : i32, i32
  }
  func.func @transform_5(%arg0: i32) -> (i32, i32) {
    %c0_i32 = arith.constant 0 : i32
    %c0_i32_0 = arith.constant 0 : i32
    %c0_i32_1 = arith.constant 0 : i32
    return %c0_i32, %c0_i32_0 : i32, i32
  }
  func.func @transform_6(%arg0: i32) -> (i32, i32) {
    %c0_i32 = arith.constant 0 : i32
    %c0_i32_0 = arith.constant 0 : i32
    %c0_i32_1 = arith.constant 0 : i32
    return %c0_i32, %c0_i32_0 : i32, i32
  }
  func.func @transform_7(%arg0: i32) -> (i32, i32) {
    %c0_i32 = arith.constant 0 : i32
    %c0_i32_0 = arith.constant 0 : i32
    %c0_i32_1 = arith.constant 0 : i32
    return %c0_i32, %c0_i32_0 : i32, i32
  }
  func.func @transform_8(%arg0: i32) -> (i32, i32) {
    %c0_i32 = arith.constant 0 : i32
    %c0_i32_0 = arith.constant 0 : i32
    %c0_i32_1 = arith.constant 0 : i32
    return %c0_i32, %c0_i32_0 : i32, i32
  }
  func.func @transform_9(%arg0: i32) -> (i32, i32) {
    %c0_i32 = arith.constant 0 : i32
    %c0_i32_0 = arith.constant 0 : i32
    %c0_i32_1 = arith.constant 0 : i32
    return %c0_i32, %c0_i32_0 : i32, i32
  }
  func.func @transform_10(%arg0: i32) -> (i32, i32) {
    %c0_i32 = arith.constant 0 : i32
    %c0_i32_0 = arith.constant 0 : i32
    %c0_i32_1 = arith.constant 0 : i32
    return %c0_i32, %c0_i32_0 : i32, i32
  }
  func.func @transform_11(%arg0: i32) -> (i32, i32) {
    %c0_i32 = arith.constant 0 : i32
    %c0_i32_0 = arith.constant 0 : i32
    %c0_i32_1 = arith.constant 0 : i32
    return %c0_i32, %c0_i32_0 : i32, i32
  }
  func.func @transform_12(%arg0: i32) -> (i32, i32) {
    %c0_i32 = arith.constant 0 : i32
    %c0_i32_0 = arith.constant 0 : i32
    %c0_i32_1 = arith.constant 0 : i32
    return %c0_i32, %c0_i32_0 : i32, i32
  }
  func.func @transform_13(%arg0: i32) -> (i32, i32) {
    %c0_i32 = arith.constant 0 : i32
    %c0_i32_0 = arith.constant 0 : i32
    %c0_i32_1 = arith.constant 0 : i32
    return %c0_i32, %c0_i32_0 : i32, i32
  }
  func.func @transform_14(%arg0: i32) -> (i32, i32) {
    %c0_i32 = arith.constant 0 : i32
    %c0_i32_0 = arith.constant 0 : i32
    %c0_i32_1 = arith.constant 0 : i32
    return %c0_i32, %c0_i32_0 : i32, i32
  }
  func.func @transform_15(%arg0: i32) -> (i32, i32) {
    %c0_i32 = arith.constant 0 : i32
    %c0_i32_0 = arith.constant 0 : i32
    %c0_i32_1 = arith.constant 0 : i32
    return %c0_i32, %c0_i32_0 : i32, i32
  }
  func.func @transform_16(%arg0: i32) -> (i32, i32, i32) {
    %c0_i32 = arith.constant 0 : i32
    %c0_i32_0 = arith.constant 0 : i32
    %c0_i32_1 = arith.constant 0 : i32
    return %arg0, %c0_i32, %c0_i32_0 : i32, i32, i32
  }
}

</mosaic_0001>

<llo_original>
// kernel: transformer_forward.1
$region0: #{transformer_forward.1}
  #allocation0 [shape = 'u32[]', space=smem, size = 0x4, offset = 0x4, fixed_abs, tag = 'smem constant byte address 0x4 - core index']
  #allocation1 [shape = 'u32[144,128]{1,0:T(1,128)}', space=vmem, size = 0x12000, scoped, tag = 'internal scratch']
  #allocation2 [shape = 'f32[128,32]{1,0:T(8,128)}', space=vmem, size = 0x10000, scoped, tag = 'scratch operand']
  %s0 = inlined_call_operand.vmem [shape: f32[256,32], index: 0, kind: input, shape index: {}]
  %s1 = inlined_call_operand.vmem [shape: f32[32,768], index: 1, kind: input, shape index: {}]
  %s2 = inlined_call_operand.vmem [shape: bf16[32,96], index: 2, kind: input, shape index: {}]
  %s3 = inlined_call_operand.vmem [shape: f32[1,96], index: 3, kind: input, shape index: {}]
  %s4 = inlined_call_operand.vmem [shape: bf16[32,32], index: 4, kind: input, shape index: {}]
  %s5 = inlined_call_operand.vmem [shape: f32[1,32], index: 5, kind: input, shape index: {}]
  %s6 = inlined_call_operand.vmem [shape: bf16[768,64], index: 6, kind: input, shape index: {}]
  %s7 = inlined_call_operand.vmem [shape: f32[1,64], index: 7, kind: input, shape index: {}]
  %s8 = inlined_call_operand.vmem [shape: f32[1,768], index: 8, kind: input, shape index: {}]
  %s9 = inlined_call_operand.vmem [shape: f32[1,768], index: 9, kind: input, shape index: {}]
  %s10 = inlined_call_operand.vmem [shape: bf16[32,256], index: 10, kind: input, shape index: {}]
  %s11 = inlined_call_operand.vmem [shape: f32[1,256], index: 11, kind: input, shape index: {}]
  %s12 = inlined_call_operand.vmem [shape: bf16[256,32], index: 12, kind: input, shape index: {}]
  %s13 = inlined_call_operand.vmem [shape: f32[1,32], index: 13, kind: input, shape index: {}]
  %s14 = inlined_call_operand.vmem [shape: bf16[32,32], index: 14, kind: input, shape index: {}]
  %s15 = inlined_call_operand.vmem [shape: f32[32,1], index: 15, kind: input, shape index: {}]
  %s16 = inlined_call_operand.vmem [shape: f32[2,32,128], index: 16, kind: output, shape index: {}]
  %s17 = sld [smem:[#allocation0]]
  $region97: #{transformer_forward.1} parent=0
    _
  %s19 = ssub.s32 1, %s17
  %s20 = scalar_select 0, %s19, %s17
  loop: start=0, step=1, limit=4
  $region2: #{transformer_forward.1} parent=0 // loop_pre_header
    _
  $region3: #{transformer_forward.1} parent=0 // loop_header
    %s22 = sphi 0, %s26
    %p23 = scmp.ge.s32.totalorder %s22, 4
    %s32 = sphi 0, %s34
    %s35 = sphi 0, %s32
    %s36 = sphi 0, %s35
    %s52 = sphi 0, %s36
    %s58 = sphi 0, %s60
    %s61 = sphi 0, %s58
    %s62 = sphi 0, %s61
    %s78 = sphi 0, %s62
    %s82 = sphi 0, %s82
    %s84 = sphi 0, %s82
    %s85 = sphi 0, %s84
    %s99 = sphi 0, %s85
    %s103 = sphi 0, %s103
    %s105 = sphi 0, %s103
    %s106 = sphi 0, %s105
    %s120 = sphi 0, %s106
    %s124 = sphi 0, %s124
    %s126 = sphi 0, %s124
    %s127 = sphi 0, %s126
    %s141 = sphi 0, %s127
    %s145 = sphi 0, %s145
    %s147 = sphi 0, %s145
    %s148 = sphi 0, %s147
    %s162 = sphi 0, %s148
    %s166 = sphi 0, %s166
    %s168 = sphi 0, %s166
    %s169 = sphi 0, %s168
    %s183 = sphi 0, %s169
    %s187 = sphi 0, %s187
    %s189 = sphi 0, %s187
    %s190 = sphi 0, %s189
    %s204 = sphi 0, %s190
    %s208 = sphi 0, %s208
    %s210 = sphi 0, %s208
    %s211 = sphi 0, %s210
    %s225 = sphi 0, %s211
    %s229 = sphi 0, %s229
    %s231 = sphi 0, %s229
    %s232 = sphi 0, %s231
    %s246 = sphi 0, %s232
    %s250 = sphi 0, %s250
    %s252 = sphi 0, %s250
    %s253 = sphi 0, %s252
    %s267 = sphi 0, %s253
    %s271 = sphi 0, %s271
    %s273 = sphi 0, %s271
    %s274 = sphi 0, %s273
    %s288 = sphi 0, %s274
    %s292 = sphi 0, %s292
    %s294 = sphi 0, %s292
    %s295 = sphi 0, %s294
    %s309 = sphi 0, %s295
    %s313 = sphi 0, %s313
    %s315 = sphi 0, %s313
    %s316 = sphi 0, %s315
    %s330 = sphi 0, %s316
    %s334 = sphi 0, %s334
    %s336 = sphi 0, %s334
    %s337 = sphi 0, %s336
    %s351 = sphi 0, %s337
    %s355 = sphi 0, %s355
    %s357 = sphi 0, %s355
    %s358 = sphi 0, %s357
    %s372 = sphi 0, %s358
    %s378 = sphi 0, %s380
    %s381 = sphi 0, %s378
    %s382 = sphi 0, %s381
    %s398 = sphi 0, %s382
  $region4: #{transformer_forward.1} parent=0 // loop_header_branch
    %25 = sbr.rel (%p23) target = $region8
  $region5: #{transformer_forward.1} parent=0 // loop_body
    %s27 = ssub.s32 %s22, 1
    %s28 = ssub.s32 %s22, 2
    %s29 = sadd.s32 %s22, 1
    %s30 = ssub.s32 %s22, %s29
    %p31 = scmp.eq.s32.totalorder %s30, 0
    %s33 = sadd.s32 %s32, 1
    %s34 = scalar_select %p31, %s32, %s33
    %p37 = pneg %p31
    %p38 = scmp.eq.s32.totalorder %s22, 1
    %p39 = por %p37, %p38
    %p40 = scmp.ne.s32.totalorder %s32, %s35
    %p41 = scmp.eq.s32.totalorder %s22, 0
    %p42 = por %p40, %p41
    %p43 = scmp.ne.s32.totalorder %s32, %s35
    %p44 = scmp.eq.s32.totalorder %s27, 1
    %p45 = por %p43, %p44
    %p46 = scmp.ne.s32.totalorder %s35, %s36
    %p47 = scmp.eq.s32.totalorder %s27, 0
    %p48 = por %p46, %p47
    %p49 = scmp.ne.s32.totalorder %s35, %s36
    %p50 = scmp.eq.s32.totalorder %s28, 1
    %p51 = por %p49, %p50
    %p53 = scmp.ne.s32.totalorder %s36, %s52
    %p54 = scmp.eq.s32.totalorder %s28, 0
    %p55 = por %p53, %p54
    %s56 = ssub.s32 %s22, %s29
    %p57 = scmp.eq.s32.totalorder %s56, 0
    %s59 = sadd.s32 %s58, 1
    %s60 = scalar_select %p57, %s58, %s59
    %p63 = pneg %p57
    %p64 = scmp.eq.s32.totalorder %s22, 1
    %p65 = por %p63, %p64
    %p66 = scmp.ne.s32.totalorder %s58, %s61
    %p67 = scmp.eq.s32.totalorder %s22, 0
    %p68 = por %p66, %p67
    %p69 = scmp.ne.s32.totalorder %s58, %s61
    %p70 = scmp.eq.s32.totalorder %s27, 1
    %p71 = por %p69, %p70
    %p72 = scmp.ne.s32.totalorder %s61, %s62
    %p73 = scmp.eq.s32.totalorder %s27, 0
    %p74 = por %p72, %p73
    %p75 = scmp.ne.s32.totalorder %s61, %s62
    %p76 = scmp.eq.s32.totalorder %s28, 1
    %p77 = por %p75, %p76
    %p79 = scmp.ne.s32.totalorder %s62, %s78
    %p80 = scmp.eq.s32.totalorder %s28, 0
    %p81 = por %p79, %p80
    %s83 = sadd.s32 %s82, 1
    %p86 = scmp.eq.s32.totalorder %s22, 1
    %p87 = scmp.ne.s32.totalorder %s82, %s84
    %p88 = scmp.eq.s32.totalorder %s22, 0
    %p89 = por %p87, %p88
    %p90 = scmp.ne.s32.totalorder %s82, %s84
    %p91 = scmp.eq.s32.totalorder %s27, 1
    %p92 = por %p90, %p91
    %p93 = scmp.ne.s32.totalorder %s84, %s85
    %p94 = scmp.eq.s32.totalorder %s27, 0
    %p95 = por %p93, %p94
    %p96 = scmp.ne.s32.totalorder %s84, %s85
    %p97 = scmp.eq.s32.totalorder %s28, 1
    %p98 = por %p96, %p97
    %p100 = scmp.ne.s32.totalorder %s85, %s99
    %p101 = scmp.eq.s32.totalorder %s28, 0
    %p102 = por %p100, %p101
    %s104 = sadd.s32 %s103, 1
    %p107 = scmp.eq.s32.totalorder %s22, 1
    %p108 = scmp.ne.s32.totalorder %s103, %s105
    %p109 = scmp.eq.s32.totalorder %s22, 0
    %p110 = por %p108, %p109
    %p111 = scmp.ne.s32.totalorder %s103, %s105
    %p112 = scmp.eq.s32.totalorder %s27, 1
    %p113 = por %p111, %p112
    %p114 = scmp.ne.s32.totalorder %s105, %s106
    %p115 = scmp.eq.s32.totalorder %s27, 0
    %p116 = por %p114, %p115
    %p117 = scmp.ne.s32.totalorder %s105, %s106
    %p118 = scmp.eq.s32.totalorder %s28, 1
    %p119 = por %p117, %p118
    %p121 = scmp.ne.s32.totalorder %s106, %s120
    %p122 = scmp.eq.s32.totalorder %s28, 0
    %p123 = por %p121, %p122
    %s125 = sadd.s32 %s124, 1
    %p128 = scmp.eq.s32.totalorder %s22, 1
    %p129 = scmp.ne.s32.totalorder %s124, %s126
    %p130 = scmp.eq.s32.totalorder %s22, 0
    %p131 = por %p129, %p130
    %p132 = scmp.ne.s32.totalorder %s124, %s126
    %p133 = scmp.eq.s32.totalorder %s27, 1
    %p134 = por %p132, %p133
    %p135 = scmp.ne.s32.totalorder %s126, %s127
    %p136 = scmp.eq.s32.totalorder %s27, 0
    %p137 = por %p135, %p136
    %p138 = scmp.ne.s32.totalorder %s126, %s127
    %p139 = scmp.eq.s32.totalorder %s28, 1
    %p140 = por %p138, %p139
    %p142 = scmp.ne.s32.totalorder %s127, %s141
    %p143 = scmp.eq.s32.totalorder %s28, 0
    %p144 = por %p142, %p143
    %s146 = sadd.s32 %s145, 1
    %p149 = scmp.eq.s32.totalorder %s22, 1
    %p150 = scmp.ne.s32.totalorder %s145, %s147
    %p151 = scmp.eq.s32.totalorder %s22, 0
    %p152 = por %p150, %p151
    %p153 = scmp.ne.s32.totalorder %s145, %s147
    %p154 = scmp.eq.s32.totalorder %s27, 1
    %p155 = por %p153, %p154
    %p156 = scmp.ne.s32.totalorder %s147, %s148
    %p157 = scmp.eq.s32.totalorder %s27, 0
    %p158 = por %p156, %p157
    %p159 = scmp.ne.s32.totalorder %s147, %s148
    %p160 = scmp.eq.s32.totalorder %s28, 1
    %p161 = por %p159, %p160
    %p163 = scmp.ne.s32.totalorder %s148, %s162
    %p164 = scmp.eq.s32.totalorder %s28, 0
    %p165 = por %p163, %p164
    %s167 = sadd.s32 %s166, 1
    %p170 = scmp.eq.s32.totalorder %s22, 1
    %p171 = scmp.ne.s32.totalorder %s166, %s168
    %p172 = scmp.eq.s32.totalorder %s22, 0
    %p173 = por %p171, %p172
    %p174 = scmp.ne.s32.totalorder %s166, %s168
    %p175 = scmp.eq.s32.totalorder %s27, 1
    %p176 = por %p174, %p175
    %p177 = scmp.ne.s32.totalorder %s168, %s169
    %p178 = scmp.eq.s32.totalorder %s27, 0
    %p179 = por %p177, %p178
    %p180 = scmp.ne.s32.totalorder %s168, %s169
    %p181 = scmp.eq.s32.totalorder %s28, 1
    %p182 = por %p180, %p181
    %p184 = scmp.ne.s32.totalorder %s169, %s183
    %p185 = scmp.eq.s32.totalorder %s28, 0
    %p186 = por %p184, %p185
    %s188 = sadd.s32 %s187, 1
    %p191 = scmp.eq.s32.totalorder %s22, 1
    %p192 = scmp.ne.s32.totalorder %s187, %s189
    %p193 = scmp.eq.s32.totalorder %s22, 0
    %p194 = por %p192, %p193
    %p195 = scmp.ne.s32.totalorder %s187, %s189
    %p196 = scmp.eq.s32.totalorder %s27, 1
    %p197 = por %p195, %p196
    %p198 = scmp.ne.s32.totalorder %s189, %s190
    %p199 = scmp.eq.s32.totalorder %s27, 0
    %p200 = por %p198, %p199
    %p201 = scmp.ne.s32.totalorder %s189, %s190
    %p202 = scmp.eq.s32.totalorder %s28, 1
    %p203 = por %p201, %p202
    %p205 = scmp.ne.s32.totalorder %s190, %s204
    %p206 = scmp.eq.s32.totalorder %s28, 0
    %p207 = por %p205, %p206
    %s209 = sadd.s32 %s208, 1
    %p212 = scmp.eq.s32.totalorder %s22, 1
    %p213 = scmp.ne.s32.totalorder %s208, %s210
    %p214 = scmp.eq.s32.totalorder %s22, 0
    %p215 = por %p213, %p214
    %p216 = scmp.ne.s32.totalorder %s208, %s210
    %p217 = scmp.eq.s32.totalorder %s27, 1
    %p218 = por %p216, %p217
    %p219 = scmp.ne.s32.totalorder %s210, %s211
    %p220 = scmp.eq.s32.totalorder %s27, 0
    %p221 = por %p219, %p220
    %p222 = scmp.ne.s32.totalorder %s210, %s211
    %p223 = scmp.eq.s32.totalorder %s28, 1
    %p224 = por %p222, %p223
    %p226 = scmp.ne.s32.totalorder %s211, %s225
    %p227 = scmp.eq.s32.totalorder %s28, 0
    %p228 = por %p226, %p227
    %s230 = sadd.s32 %s229, 1
    %p233 = scmp.eq.s32.totalorder %s22, 1
    %p234 = scmp.ne.s32.totalorder %s229, %s231
    %p235 = scmp.eq.s32.totalorder %s22, 0
    %p236 = por %p234, %p235
    %p237 = scmp.ne.s32.totalorder %s229, %s231
    %p238 = scmp.eq.s32.totalorder %s27, 1
    %p239 = por %p237, %p238
    %p240 = scmp.ne.s32.totalorder %s231, %s232
    %p241 = scmp.eq.s32.totalorder %s27, 0
    %p242 = por %p240, %p241
    %p243 = scmp.ne.s32.totalorder %s231, %s232
    %p244 = scmp.eq.s32.totalorder %s28, 1
    %p245 = por %p243, %p244
    %p247 = scmp.ne.s32.totalorder %s232, %s246
    %p248 = scmp.eq.s32.totalorder %s28, 0
    %p249 = por %p247, %p248
    %s251 = sadd.s32 %s250, 1
    %p254 = scmp.eq.s32.totalorder %s22, 1
    %p255 = scmp.ne.s32.totalorder %s250, %s252
    %p256 = scmp.eq.s32.totalorder %s22, 0
    %p257 = por %p255, %p256
    %p258 = scmp.ne.s32.totalorder %s250, %s252
    %p259 = scmp.eq.s32.totalorder %s27, 1
    %p260 = por %p258, %p259
    %p261 = scmp.ne.s32.totalorder %s252, %s253
    %p262 = scmp.eq.s32.totalorder %s27, 0
    %p263 = por %p261, %p262
    %p264 = scmp.ne.s32.totalorder %s252, %s253
    %p265 = scmp.eq.s32.totalorder %s28, 1
    %p266 = por %p264, %p265
    %p268 = scmp.ne.s32.totalorder %s253, %s267
    %p269 = scmp.eq.s32.totalorder %s28, 0
    %p270 = por %p268, %p269
    %s272 = sadd.s32 %s271, 1
    %p275 = scmp.eq.s32.totalorder %s22, 1
    %p276 = scmp.ne.s32.totalorder %s271, %s273
    %p277 = scmp.eq.s32.totalorder %s22, 0
    %p278 = por %p276, %p277
    %p279 = scmp.ne.s32.totalorder %s271, %s273
    %p280 = scmp.eq.s32.totalorder %s27, 1
    %p281 = por %p279, %p280
    %p282 = scmp.ne.s32.totalorder %s273, %s274
    %p283 = scmp.eq.s32.totalorder %s27, 0
    %p284 = por %p282, %p283
    %p285 = scmp.ne.s32.totalorder %s273, %s274
    %p286 = scmp.eq.s32.totalorder %s28, 1
    %p287 = por %p285, %p286
    %p289 = scmp.ne.s32.totalorder %s274, %s288
    %p290 = scmp.eq.s32.totalorder %s28, 0
    %p291 = por %p289, %p290
    %s293 = sadd.s32 %s292, 1
    %p296 = scmp.eq.s32.totalorder %s22, 1
    %p297 = scmp.ne.s32.totalorder %s292, %s294
    %p298 = scmp.eq.s32.totalorder %s22, 0
    %p299 = por %p297, %p298
    %p300 = scmp.ne.s32.totalorder %s292, %s294
    %p301 = scmp.eq.s32.totalorder %s27, 1
    %p302 = por %p300, %p301
    %p303 = scmp.ne.s32.totalorder %s294, %s295
    %p304 = scmp.eq.s32.totalorder %s27, 0
    %p305 = por %p303, %p304
    %p306 = scmp.ne.s32.totalorder %s294, %s295
    %p307 = scmp.eq.s32.totalorder %s28, 1
    %p308 = por %p306, %p307
    %p310 = scmp.ne.s32.totalorder %s295, %s309
    %p311 = scmp.eq.s32.totalorder %s28, 0
    %p312 = por %p310, %p311
    %s314 = sadd.s32 %s313, 1
    %p317 = scmp.eq.s32.totalorder %s22, 1
    %p318 = scmp.ne.s32.totalorder %s313, %s315
    %p319 = scmp.eq.s32.totalorder %s22, 0
    %p320 = por %p318, %p319
    %p321 = scmp.ne.s32.totalorder %s313, %s315
    %p322 = scmp.eq.s32.totalorder %s27, 1
    %p323 = por %p321, %p322
    %p324 = scmp.ne.s32.totalorder %s315, %s316
    %p325 = scmp.eq.s32.totalorder %s27, 0
    %p326 = por %p324, %p325
    %p327 = scmp.ne.s32.totalorder %s315, %s316
    %p328 = scmp.eq.s32.totalorder %s28, 1
    %p329 = por %p327, %p328
    %p331 = scmp.ne.s32.totalorder %s316, %s330
    %p332 = scmp.eq.s32.totalorder %s28, 0
    %p333 = por %p331, %p332
    %s335 = sadd.s32 %s334, 1
    %p338 = scmp.eq.s32.totalorder %s22, 1
    %p339 = scmp.ne.s32.totalorder %s334, %s336
    %p340 = scmp.eq.s32.totalorder %s22, 0
    %p341 = por %p339, %p340
    %p342 = scmp.ne.s32.totalorder %s334, %s336
    %p343 = scmp.eq.s32.totalorder %s27, 1
    %p344 = por %p342, %p343
    %p345 = scmp.ne.s32.totalorder %s336, %s337
    %p346 = scmp.eq.s32.totalorder %s27, 0
    %p347 = por %p345, %p346
    %p348 = scmp.ne.s32.totalorder %s336, %s337
    %p349 = scmp.eq.s32.totalorder %s28, 1
    %p350 = por %p348, %p349
    %p352 = scmp.ne.s32.totalorder %s337, %s351
    %p353 = scmp.eq.s32.totalorder %s28, 0
    %p354 = por %p352, %p353
    %s356 = sadd.s32 %s355, 1
    %p359 = scmp.eq.s32.totalorder %s22, 1
    %p360 = scmp.ne.s32.totalorder %s355, %s357
    %p361 = scmp.eq.s32.totalorder %s22, 0
    %p362 = por %p360, %p361
    %p363 = scmp.ne.s32.totalorder %s355, %s357
    %p364 = scmp.eq.s32.totalorder %s27, 1
    %p365 = por %p363, %p364
    %p366 = scmp.ne.s32.totalorder %s357, %s358
    %p367 = scmp.eq.s32.totalorder %s27, 0
    %p368 = por %p366, %p367
    %p369 = scmp.ne.s32.totalorder %s357, %s358
    %p370 = scmp.eq.s32.totalorder %s28, 1
    %p371 = por %p369, %p370
    %p373 = scmp.ne.s32.totalorder %s358, %s372
    %p374 = scmp.eq.s32.totalorder %s28, 0
    %p375 = por %p373, %p374
    %s376 = ssub.s32 %s22, %s29
    %p377 = scmp.eq.s32.totalorder %s376, 0
    %s379 = sadd.s32 %s378, 1
    %s380 = scalar_select %p377, %s378, %s379
    %p383 = pneg %p377
    %p384 = scmp.eq.s32.totalorder %s22, 1
    %p385 = por %p383, %p384
    %p386 = scmp.ne.s32.totalorder %s378, %s381
    %p387 = scmp.eq.s32.totalorder %s22, 0
    %p388 = por %p386, %p387
    %p389 = scmp.ne.s32.totalorder %s378, %s381
    %p390 = scmp.eq.s32.totalorder %s27, 1
    %p391 = por %p389, %p390
    %p392 = scmp.ne.s32.totalorder %s381, %s382
    %p393 = scmp.eq.s32.totalorder %s27, 0
    %p394 = por %p392, %p393
    %p395 = scmp.ne.s32.totalorder %s381, %s382
    %p396 = scmp.eq.s32.totalorder %s28, 1
    %p397 = por %p395, %p396
    %p399 = scmp.ne.s32.totalorder %s382, %s398
    %p400 = scmp.eq.s32.totalorder %s28, 0
    %p401 = por %p399, %p400
    %p402 = scmp.le.s32.totalorder 1, %s22
    %p403 = scmp.lt.s32.totalorder %s22, 3
    %p404 = pnand %p402, %p403
    %p405 = pneg %p404
    // Predicated region
    $region9: #{transformer_forward.1} parent=5 // pred_check
      _
    $region10: #{transformer_forward.1} parent=5 // pred_check_branch
      %407 = sbr.rel (%p404) target = $region12
    $region11: #{transformer_forward.1} parent=5 // pred_region
      %s408 = ssub.s32 %s22, 1
      // Predicated region
      $region13: #{transformer_forward.1} parent=11 // pred_check
        %p409 = pneg %p95
      $region14: #{transformer_forward.1} parent=11 // pred_check_branch
        %411 = sbr.rel (%p409) target = $region16
      $region15: #{transformer_forward.1} parent=11 // pred_region
        _
      $region16: #{transformer_forward.1} parent=11 // pred_fallthru
        _
      // Predicated region
      $region17: #{transformer_forward.1} parent=11 // pred_check
        %p412 = pneg %p116
      $region18: #{transformer_forward.1} parent=11 // pred_check_branch
        %414 = sbr.rel (%p412) target = $region20
      $region19: #{transformer_forward.1} parent=11 // pred_region
        _
      $region20: #{transformer_forward.1} parent=11 // pred_fallthru
        _
      // Predicated region
      $region21: #{transformer_forward.1} parent=11 // pred_check
        %p415 = pneg %p137
      $region22: #{transformer_forward.1} parent=11 // pred_check_branch
        %417 = sbr.rel (%p415) target = $region24
      $region23: #{transformer_forward.1} parent=11 // pred_region
        _
      $region24: #{transformer_forward.1} parent=11 // pred_fallthru
        _
      // Predicated region
      $region25: #{transformer_forward.1} parent=11 // pred_check
        %p418 = pneg %p158
      $region26: #{transformer_forward.1} parent=11 // pred_check_branch
        %420 = sbr.rel (%p418) target = $region28
      $region27: #{transformer_forward.1} parent=11 // pred_region
        _
      $region28: #{transformer_forward.1} parent=11 // pred_fallthru
        _
      // Predicated region
      $region29: #{transformer_forward.1} parent=11 // pred_check
        %p421 = pneg %p179
      $region30: #{transformer_forward.1} parent=11 // pred_check_branch
        %423 = sbr.rel (%p421) target = $region32
      $region31: #{transformer_forward.1} parent=11 // pred_region
        _
      $region32: #{transformer_forward.1} parent=11 // pred_fallthru
        _
      // Predicated region
      $region33: #{transformer_forward.1} parent=11 // pred_check
        %p424 = pneg %p200
      $region34: #{transformer_forward.1} parent=11 // pred_check_branch
        %426 = sbr.rel (%p424) target = $region36
      $region35: #{transformer_forward.1} parent=11 // pred_region
        _
      $region36: #{transformer_forward.1} parent=11 // pred_fallthru
        _
      // Predicated region
      $region37: #{transformer_forward.1} parent=11 // pred_check
        %p427 = pneg %p221
      $region38: #{transformer_forward.1} parent=11 // pred_check_branch
        %429 = sbr.rel (%p427) target = $region40
      $region39: #{transformer_forward.1} parent=11 // pred_region
        _
      $region40: #{transformer_forward.1} parent=11 // pred_fallthru
        _
      // Predicated region
      $region41: #{transformer_forward.1} parent=11 // pred_check
        %p430 = pneg %p242
      $region42: #{transformer_forward.1} parent=11 // pred_check_branch
        %432 = sbr.rel (%p430) target = $region44
      $region43: #{transformer_forward.1} parent=11 // pred_region
        _
      $region44: #{transformer_forward.1} parent=11 // pred_fallthru
        _
      // Predicated region
      $region45: #{transformer_forward.1} parent=11 // pred_check
        %p433 = pneg %p263
      $region46: #{transformer_forward.1} parent=11 // pred_check_branch
        %435 = sbr.rel (%p433) target = $region48
      $region47: #{transformer_forward.1} parent=11 // pred_region
        _
      $region48: #{transformer_forward.1} parent=11 // pred_fallthru
        _
      // Predicated region
      $region49: #{transformer_forward.1} parent=11 // pred_check
        %p436 = pneg %p284
      $region50: #{transformer_forward.1} parent=11 // pred_check_branch
        %438 = sbr.rel (%p436) target = $region52
      $region51: #{transformer_forward.1} parent=11 // pred_region
        _
      $region52: #{transformer_forward.1} parent=11 // pred_fallthru
        _
      // Predicated region
      $region53: #{transformer_forward.1} parent=11 // pred_check
        %p439 = pneg %p305
      $region54: #{transformer_forward.1} parent=11 // pred_check_branch
        %441 = sbr.rel (%p439) target = $region56
      $region55: #{transformer_forward.1} parent=11 // pred_region
        _
      $region56: #{transformer_forward.1} parent=11 // pred_fallthru
        _
      // Predicated region
      $region57: #{transformer_forward.1} parent=11 // pred_check
        %p442 = pneg %p326
      $region58: #{transformer_forward.1} parent=11 // pred_check_branch
        %444 = sbr.rel (%p442) target = $region60
      $region59: #{transformer_forward.1} parent=11 // pred_region
        _
      $region60: #{transformer_forward.1} parent=11 // pred_fallthru
        _
      // Predicated region
      $region61: #{transformer_forward.1} parent=11 // pred_check
        %p445 = pneg %p347
      $region62: #{transformer_forward.1} parent=11 // pred_check_branch
        %447 = sbr.rel (%p445) target = $region64
      $region63: #{transformer_forward.1} parent=11 // pred_region
        _
      $region64: #{transformer_forward.1} parent=11 // pred_fallthru
        _
      // Predicated region
      $region65: #{transformer_forward.1} parent=11 // pred_check
        %p448 = pneg %p368
      $region66: #{transformer_forward.1} parent=11 // pred_check_branch
        %450 = sbr.rel (%p448) target = $region68
      $region67: #{transformer_forward.1} parent=11 // pred_region
        _
      $region68: #{transformer_forward.1} parent=11 // pred_fallthru
        _
    $region12: #{transformer_forward.1} parent=5 // pred_fallthru
      _
    %p451 = scmp.lt.s32.totalorder %s22, 2
    // Predicated region
    $region69: #{transformer_forward.1} parent=5 // pred_check
      %p452 = pneg %p451
    $region70: #{transformer_forward.1} parent=5 // pred_check_branch
      %454 = sbr.rel (%p452) target = $region72
    $region71: #{transformer_forward.1} parent=5 // pred_region
      // Predicated region
      $region73: #{transformer_forward.1} parent=71 // pred_check
        %p455 = pneg %p42
      $region74: #{transformer_forward.1} parent=71 // pred_check_branch
        %457 = sbr.rel (%p455) target = $region76
      $region75: #{transformer_forward.1} parent=71 // pred_region
        %s458 = smul.u32 16, %s22
        %p459 = scmp.lt.s32.totalorder %s458, 31
        %s460 = scalar_select %p459, %s458, 31
        %s461 = smul.addr %s460, 8
        %s462 = scalar_lea.vmem %s0, %s461
        %s463 = smul.u32 16, %s22
      $region76: #{transformer_forward.1} parent=71 // pred_fallthru
        _
      // Predicated region
      $region77: #{transformer_forward.1} parent=71 // pred_check
        %p464 = pneg %p68
      $region78: #{transformer_forward.1} parent=71 // pred_check_branch
        %466 = sbr.rel (%p464) target = $region80
      $region79: #{transformer_forward.1} parent=71 // pred_region
        %s467 = smul.u32 2, %s22
        %p468 = scmp.lt.s32.totalorder %s467, 3
        %s469 = scalar_select %p468, %s467, 3
        %s470 = smul.addr %s469, 6
        %s471 = smul.addr %s470, 8
        %s472 = scalar_lea.vmem %s1, %s471
        %s473 = smul.u32 2, %s22
      $region80: #{transformer_forward.1} parent=71 // pred_fallthru
        _
    $region72: #{transformer_forward.1} parent=5 // pred_fallthru
      _
    %p474 = scmp.le.s32.totalorder 1, %s22
    %p475 = scmp.lt.s32.totalorder %s22, 3
    %p476 = pnand %p474, %p475
    %p477 = pneg %p476
    // Predicated region
    $region81: #{transformer_forward.1} parent=5 // pred_check
      _
    $region82: #{transformer_forward.1} parent=5 // pred_check_branch
      %479 = sbr.rel (%p476) target = $region84
    $region83: #{transformer_forward.1} parent=5 // pred_region
      %s480 = ssub.s32 %s22, 1
      %s481 = smul.u32 16, %s27
      %p482 = scmp.lt.s32.totalorder %s481, 31
      %s483 = scalar_select %p482, %s481, 31
      %s484 = smul.addr %s483, 8
      %s485 = scalar_lea.vmem %s0, %s484
      %p486 = pneg %p48
      %p487 = pneg %p45
      %s488 = smul.u32 2, %s27
      %p489 = scmp.lt.s32.totalorder %s488, 3
      %s490 = scalar_select %p489, %s488, 3
      %s491 = smul.addr %s490, 6
      %s492 = smul.addr %s491, 8
      %s493 = scalar_lea.vmem %s1, %s492
      %p494 = pneg %p74
      %p495 = pneg %p71
      %p496 = pneg %p95
      %p497 = pneg %p92
      %p498 = pneg %p116
      %p499 = pneg %p113
      %p500 = pneg %p137
      %p501 = pneg %p134
      %p502 = pneg %p158
      %p503 = pneg %p155
      %p504 = pneg %p179
      %p505 = pneg %p176
      %p506 = pneg %p200
      %p507 = pneg %p197
      %p508 = pneg %p221
      %p509 = pneg %p218
      %p510 = pneg %p242
      %p511 = pneg %p239
      %p512 = pneg %p263
      %p513 = pneg %p260
      %p514 = pneg %p284
      %p515 = pneg %p281
      %p516 = pneg %p305
      %p517 = pneg %p302
      %p518 = pneg %p326
      %p519 = pneg %p323
      %p520 = pneg %p347
      %p521 = pneg %p344
      %p522 = pneg %p368
      %p523 = pneg %p365
      %p524 = pneg %p394
      %p525 = pneg %p391
      %p526 = scmp.lt.s32.totalorder %s27, 1
      %s527 = scalar_select %p526, %s27, 1
      %s528 = smul.addr %s527, 4
      %s529 = smul.addr %s528, 8
      %s530 = scalar_lea.vmem %s16, %s529
      %s531 = smul.u32 16, %s27
      %p532 = scmp.lt.s32.totalorder %s531, 31
      %s533 = scalar_select %p532, %s531, 31
      %s534 = smul.addr %s533, 8
      %s535 = scalar_lea.vmem %s0, %s534
      %s536 = smul.u32 16, %s27
      %s537 = smul.u32 2, %s27
      %p538 = scmp.lt.s32.totalorder %s537, 3
      %s539 = scalar_select %p538, %s537, 3
      %s540 = smul.addr %s539, 6
      %s541 = smul.addr %s540, 8
      %s542 = scalar_lea.vmem %s1, %s541
      %s543 = smul.u32 2, %s27
      %p544 = scmp.lt.s32.totalorder %s27, 1
      %s545 = scalar_select %p544, %s27, 1
      %s546 = smul.addr %s545, 4
      %s547 = smul.addr %s546, 8
      %s548 = scalar_lea.vmem %s16, %s547
      %v550 = vld [vmem:[%s535] sm:$0xff]
      %v551 = vld [vmem:[%s535 + $0x8] sm:$0xff]
      %v552 = vld [vmem:[%s535 + $0x10] sm:$0xff]
      %v553 = vld [vmem:[%s535 + $0x18] sm:$0xff]
      %v554 = vld [vmem:[%s535 + $0x20] sm:$0xff]
      %v555 = vld [vmem:[%s535 + $0x28] sm:$0xff]
      %v556 = vld [vmem:[%s535 + $0x30] sm:$0xff]
      %v557 = vld [vmem:[%s535 + $0x38] sm:$0xff]
      %v558 = vld [vmem:[%s535 + $0x40] sm:$0xff]
      %v559 = vld [vmem:[%s535 + $0x48] sm:$0xff]
      %v560 = vld [vmem:[%s535 + $0x50] sm:$0xff]
      %v561 = vld [vmem:[%s535 + $0x58] sm:$0xff]
      %v562 = vld [vmem:[%s535 + $0x60] sm:$0xff]
      %v563 = vld [vmem:[%s535 + $0x68] sm:$0xff]
      %v564 = vld [vmem:[%s535 + $0x70] sm:$0xff]
      %v565 = vld [vmem:[%s535 + $0x78] sm:$0xff]
      %v566 = vld [vmem:[%s542] sm:$0xff]
      %v567 = vld [vmem:[%s542 + $0x8] sm:$0xff]
      %v568 = vld [vmem:[%s542 + $0x10] sm:$0xff]
      %v569 = vld [vmem:[%s542 + $0x18] sm:$0xff]
      %v570 = vld [vmem:[%s542 + $0x20] sm:$0xff]
      %v571 = vld [vmem:[%s542 + $0x28] sm:$0xff]
      %v572 = vld [vmem:[%s542 + $0x30] sm:$0xff]
      %v573 = vld [vmem:[%s542 + $0x38] sm:$0xff]
      %v574 = vld [vmem:[%s542 + $0x40] sm:$0xff]
      %v575 = vld [vmem:[%s542 + $0x48] sm:$0xff]
      %v576 = vld [vmem:[%s542 + $0x50] sm:$0xff]
      %v577 = vld [vmem:[%s542 + $0x58] sm:$0xff]
      %v578 = vpack.c.bf16 %v551, %v550
      %v579 = vpack.c.bf16 %v553, %v552
      %v580 = vpack.c.bf16 %v555, %v554
      %v581 = vpack.c.bf16 %v557, %v556
      %v582 = vpack.c.bf16 %v559, %v558
      %v583 = vpack.c.bf16 %v561, %v560
      %v584 = vpack.c.bf16 %v563, %v562
      %v585 = vpack.c.bf16 %v565, %v564
      %v586 = vld [vmem:[%s2] sm:$0xf]
      %v587 = vld [vmem:[%s2 + $0x4] sm:$0xf]
      %v588 = vld [vmem:[%s2 + $0x8] sm:$0xf]
      %v589 = vld [vmem:[%s2 + $0xc] sm:$0xf]
      %v590 = vld [vmem:[%s3] sm:$0x1]
      %v592 = vlaneseq
      %v593 = vshrl.u32 %v592, 7
      %v594 = vsub.s32 0, %v593
      %v595 = vrot.slane %v590, %v594
      %v601 = vunpack.c.l.b16 %v586
      %v602 = vunpack.c.l.b16 %v587
      %v603 = vunpack.c.l.b16 %v588
      %v604 = vunpack.c.l.b16 %v589
      %v605 = vpack.c.b16 %v602, %v601
      %v606 = vpack.c.b16 %v604, %v603
      %vm609 = vcmask 261120
      %v611 = vsel %vm609, %v578, 0
      %v614 = vsel %vm609, %v579, 0
      %v617 = vsel %vm609, %v580, 0
      %v620 = vsel %vm609, %v581, 0
      %v623 = vsel %vm609, %v582, 0
      %v626 = vsel %vm609, %v583, 0
      %v629 = vsel %vm609, %v584, 0
      %v632 = vsel %vm609, %v585, 0
      %634 = vmatprep.subr.bf16.mxu0 0
      %635 = vmatpush1.bf16.msra.mxu0 0
      %636 = vmatprep.subr.bf16.mxu0 0
      %637 = vmatpush1.bf16.msra.mxu0 0
      %638 = vmatprep.subr.bf16.mxu0 0
      %639 = vmatpush1.bf16.msra.mxu0 0
      %640 = vmatprep.subr.bf16.mxu0 0
      %641 = vmatpush1.bf16.msra.mxu0 0
      %642 = vmatprep.subr.bf16.mxu0 0
      %643 = vmatpush1.bf16.msra.mxu0 0
      %644 = vmatprep.subr.bf16.mxu0 0
      %645 = vmatpush1.bf16.msra.mxu0 0
      %646 = vmatprep.subr.bf16.mxu0 0
      %647 = vmatpush1.bf16.msra.mxu0 %v606
      %648 = vmatprep.subr.bf16.mxu0 0
      %649 = vmatpush1.bf16.msra.mxu0 %v605
      %650 = vmatprep.subr.bf16.mxu0 0
      %651 = vmatpush2.bf16.msra.mxu0 0
      %652 = vmatprep.subr.bf16.mxu0 0
      %653 = vmatpush2.bf16.msra.mxu0 0
      %654 = vmatprep.subr.bf16.mxu0 0
      %655 = vmatpush2.bf16.msra.mxu0 0
      %656 = vmatprep.subr.bf16.mxu0 0
      %657 = vmatpush2.bf16.msra.mxu0 0
      %658 = vmatprep.subr.bf16.mxu0 0
      %659 = vmatpush2.bf16.msra.mxu0 0
      %660 = vmatprep.subr.bf16.mxu0 0
      %661 = vmatpush2.bf16.msra.mxu0 0
      %662 = vmatprep.subr.bf16.mxu0 0
      %663 = vmatpush2.bf16.msra.mxu0 0
      %664 = vmatprep.subr.bf16.mxu0 0
      %665 = vmatpush2.bf16.msra.mxu0 0
      %666 = vmatprep.mubr.bf16.mxu0 0
      %667 = vmatmul.mubr.bf16.gmra.mxu0 %v611
      %v668 = vpop.f32.mrf.mxu0
      %v669 = vadd.f32 %v595, %v668
      %v670 = vpop.f32.mrf.mxu0
      %v671 = vpop.f32.mrf.mxu0
      %v672 = vadd.f32 %v595, %v671
      %v673 = vpop.f32.mrf.mxu0
      %674 = vmatprep.mubr.bf16.mxu0 0
      %675 = vmatmul.mubr.bf16.gmra.mxu0 %v614
      %v676 = vpop.f32.mrf.mxu0
      %v677 = vadd.f32 %v595, %v676
      %v678 = vpop.f32.mrf.mxu0
      %v679 = vpop.f32.mrf.mxu0
      %v680 = vadd.f32 %v595, %v679
      %v681 = vpop.f32.mrf.mxu0
      %682 = vmatprep.mubr.bf16.mxu0 0
      %683 = vmatmul.mubr.bf16.gmra.mxu0 %v617
      %v684 = vpop.f32.mrf.mxu0
      %v685 = vadd.f32 %v595, %v684
      %v686 = vpop.f32.mrf.mxu0
      %v687 = vpop.f32.mrf.mxu0
      %v688 = vadd.f32 %v595, %v687
      %v689 = vpop.f32.mrf.mxu0
      %690 = vmatprep.mubr.bf16.mxu0 0
      %691 = vmatmul.mubr.bf16.gmra.mxu0 %v620
      %v692 = vpop.f32.mrf.mxu0
      %v693 = vadd.f32 %v595, %v692
      %v694 = vpop.f32.mrf.mxu0
      %v695 = vpop.f32.mrf.mxu0
      %v696 = vadd.f32 %v595, %v695
      %v697 = vpop.f32.mrf.mxu0
      %698 = vmatprep.mubr.bf16.mxu0 0
      %699 = vmatmul.mubr.bf16.gmra.mxu0 %v623
      %v700 = vpop.f32.mrf.mxu0
      %v701 = vadd.f32 %v595, %v700
      %v702 = vpop.f32.mrf.mxu0
      %v703 = vpop.f32.mrf.mxu0
      %v704 = vadd.f32 %v595, %v703
      %v705 = vpop.f32.mrf.mxu0
      %706 = vmatprep.mubr.bf16.mxu0 0
      %707 = vmatmul.mubr.bf16.gmra.mxu0 %v626
      %v708 = vpop.f32.mrf.mxu0
      %v709 = vadd.f32 %v595, %v708
      %v710 = vpop.f32.mrf.mxu0
      %v711 = vpop.f32.mrf.mxu0
      %v712 = vadd.f32 %v595, %v711
      %v713 = vpop.f32.mrf.mxu0
      %714 = vmatprep.mubr.bf16.mxu0 0
      %715 = vmatmul.mubr.bf16.gmra.mxu0 %v629
      %v716 = vpop.f32.mrf.mxu0
      %v717 = vadd.f32 %v595, %v716
      %v718 = vpop.f32.mrf.mxu0
      %v719 = vpop.f32.mrf.mxu0
      %v720 = vadd.f32 %v595, %v719
      %v721 = vpop.f32.mrf.mxu0
      %722 = vmatprep.mubr.bf16.mxu0 0
      %723 = vmatmul.mubr.bf16.gmra.mxu0 %v632
      %v724 = vpop.f32.mrf.mxu0
      %v725 = vadd.f32 %v595, %v724
      %v726 = vpop.f32.mrf.mxu0
      %v727 = vpop.f32.mrf.mxu0
      %v728 = vadd.f32 %v595, %v727
      %v729 = vpop.f32.mrf.mxu0
      %730 = vdwg.mxu0
      %v731 = vpack.c.bf16 %v672, %v669
      %v732 = vpack.c.bf16 %v680, %v677
      %v733 = vpack.c.bf16 %v688, %v685
      %v734 = vpack.c.bf16 %v696, %v693
      %739 = vrot.lane.b32.xlu0 %v731, 96
      %v740 = vpop.permute.xlu0 %739
      %741 = vrot.lane.b32.xlu0 %v732, 96
      %v742 = vpop.permute.xlu0 %741
      %743 = vrot.lane.b32.xlu0 %v733, 96
      %v744 = vpop.permute.xlu0 %743
      %745 = vrot.lane.b32.xlu0 %v734, 96
      %v746 = vpop.permute.xlu0 %745
      %v748 = vsel %vm609, %v731, 0
      %v751 = vsel %vm609, %v732, 0
      %v754 = vsel %vm609, %v733, 0
      %v757 = vsel %vm609, %v734, 0
      %v760 = vsel %vm609, %v740, 0
      %v763 = vsel %vm609, %v742, 0
      %v766 = vsel %vm609, %v744, 0
      %v769 = vsel %vm609, %v746, 0
      %771 = vmatprep.subr.bf16.mxu0 0
      %772 = vmatpush1.bf16.xpose.msra.mxu0 0
      %773 = vmatprep.subr.bf16.mxu0 0
      %774 = vmatpush1.bf16.xpose.msra.mxu0 0
      %775 = vmatprep.subr.bf16.mxu0 0
      %776 = vmatpush1.bf16.xpose.msra.mxu0 0
      %777 = vmatprep.subr.bf16.mxu0 0
      %778 = vmatpush1.bf16.xpose.msra.mxu0 0
      %779 = vmatprep.subr.bf16.mxu0 0
      %780 = vmatpush1.bf16.xpose.msra.mxu0 %v769
      %781 = vmatprep.subr.bf16.mxu0 0
      %782 = vmatpush1.bf16.xpose.msra.mxu0 %v766
      %783 = vmatprep.subr.bf16.mxu0 0
      %784 = vmatpush1.bf16.xpose.msra.mxu0 %v763
      %785 = vmatprep.subr.bf16.mxu0 0
      %786 = vmatpush1.bf16.xpose.msra.mxu0 %v760
      %787 = vmatprep.subr.bf16.mxu0 0
      %788 = vmatpush2.bf16.xpose.msra.mxu0 0
      %789 = vmatprep.subr.bf16.mxu0 0
      %790 = vmatpush2.bf16.xpose.msra.mxu0 0
      %791 = vmatprep.subr.bf16.mxu0 0
      %792 = vmatpush2.bf16.xpose.msra.mxu0 0
      %793 = vmatprep.subr.bf16.mxu0 0
      %794 = vmatpush2.bf16.xpose.msra.mxu0 0
      %795 = vmatprep.subr.bf16.mxu0 0
      %796 = vmatpush2.bf16.xpose.msra.mxu0 0
      %797 = vmatprep.subr.bf16.mxu0 0
      %798 = vmatpush2.bf16.xpose.msra.mxu0 0
      %799 = vmatprep.subr.bf16.mxu0 0
      %800 = vmatpush2.bf16.xpose.msra.mxu0 0
      %801 = vmatprep.subr.bf16.mxu0 0
      %802 = vmatpush2.bf16.xpose.msra.mxu0 0
      %803 = vmatprep.mubr.bf16.mxu0 0
      %804 = vmatmul.mubr.bf16.gmra.mxu0 %v748
      %v805 = vpop.f32.mrf.mxu0
      %v806 = vadd.f32 0.0, %v805
      %v807 = vpop.f32.mrf.mxu0
      %v808 = vpop.f32.mrf.mxu0
      %v809 = vadd.f32 0.0, %v808
      %v810 = vpop.f32.mrf.mxu0
      %811 = vmatprep.mubr.bf16.mxu0 0
      %812 = vmatmul.mubr.bf16.gmra.mxu0 %v751
      %v813 = vpop.f32.mrf.mxu0
      %v814 = vadd.f32 0.0, %v813
      %v815 = vpop.f32.mrf.mxu0
      %v816 = vpop.f32.mrf.mxu0
      %v817 = vadd.f32 0.0, %v816
      %v818 = vpop.f32.mrf.mxu0
      %819 = vmatprep.mubr.bf16.mxu0 0
      %820 = vmatmul.mubr.bf16.gmra.mxu0 %v754
      %v821 = vpop.f32.mrf.mxu0
      %v822 = vadd.f32 0.0, %v821
      %v823 = vpop.f32.mrf.mxu0
      %v824 = vpop.f32.mrf.mxu0
      %v825 = vadd.f32 0.0, %v824
      %v826 = vpop.f32.mrf.mxu0
      %827 = vmatprep.mubr.bf16.mxu0 0
      %828 = vmatmul.mubr.bf16.gmra.mxu0 %v757
      %v829 = vpop.f32.mrf.mxu0
      %v830 = vadd.f32 0.0, %v829
      %v831 = vpop.f32.mrf.mxu0
      %v832 = vpop.f32.mrf.mxu0
      %v833 = vadd.f32 0.0, %v832
      %v834 = vpop.f32.mrf.mxu0
      %835 = vdwg.mxu0
      %vm836 = vcmask 523264
      %v837 = vsel %vm836, %v806, -inf
      %838 = vmax.xlane.f32.xlu0 %v837
      %v839 = vpop.xlane.xlu0 %838
      %v840 = vsel %vm836, %v809, -inf
      %841 = vmax.xlane.f32.xlu0 %v840
      %v842 = vpop.xlane.xlu0 %841
      %v843 = vsel %vm836, %v814, -inf
      %844 = vmax.xlane.f32.xlu0 %v843
      %v845 = vpop.xlane.xlu0 %844
      %v846 = vsel %vm836, %v817, -inf
      %847 = vmax.xlane.f32.xlu0 %v846
      %v848 = vpop.xlane.xlu0 %847
      %v849 = vsel %vm836, %v822, -inf
      %850 = vmax.xlane.f32.xlu0 %v849
      %v851 = vpop.xlane.xlu0 %850
      %v852 = vsel %vm836, %v825, -inf
      %853 = vmax.xlane.f32.xlu0 %v852
      %v854 = vpop.xlane.xlu0 %853
      %v855 = vsel %vm836, %v830, -inf
      %856 = vmax.xlane.f32.xlu0 %v855
      %v857 = vpop.xlane.xlu0 %856
      %v858 = vsel %vm836, %v833, -inf
      %859 = vmax.xlane.f32.xlu0 %v858
      %v860 = vpop.xlane.xlu0 %859
      %v861 = vsub.f32 %v806, %v839
      %v862 = vsub.f32 %v809, %v842
      %v863 = vsub.f32 %v814, %v845
      %v864 = vsub.f32 %v817, %v848
      %v865 = vsub.f32 %v822, %v851
      %v866 = vsub.f32 %v825, %v854
      %v867 = vsub.f32 %v830, %v857
      %v868 = vsub.f32 %v833, %v860
      %v869 = vmul.f32 %v861, 1.442695
      %v870 = vpow.pop %v869
      %v871 = vmul.f32 %v862, 1.442695
      %v872 = vpow.pop %v871
      %v873 = vmul.f32 %v863, 1.442695
      %v874 = vpow.pop %v873
      %v875 = vmul.f32 %v864, 1.442695
      %v876 = vpow.pop %v875
      %v877 = vmul.f32 %v865, 1.442695
      %v878 = vpow.pop %v877
      %v879 = vmul.f32 %v866, 1.442695
      %v880 = vpow.pop %v879
      %v881 = vmul.f32 %v867, 1.442695
      %v882 = vpow.pop %v881
      %v883 = vmul.f32 %v868, 1.442695
      %v884 = vpow.pop %v883
      %v885 = vsel %vm836, %v870, 0.0
      %886 = vadd.xlane.f32.xlu0 %v885
      %v887 = vpop.xlane.xlu0 %886
      %v888 = vsel %vm836, %v872, 0.0
      %889 = vadd.xlane.f32.xlu0 %v888
      %v890 = vpop.xlane.xlu0 %889
      %v891 = vsel %vm836, %v874, 0.0
      %892 = vadd.xlane.f32.xlu0 %v891
      %v893 = vpop.xlane.xlu0 %892
      %v894 = vsel %vm836, %v876, 0.0
      %895 = vadd.xlane.f32.xlu0 %v894
      %v896 = vpop.xlane.xlu0 %895
      %v897 = vsel %vm836, %v878, 0.0
      %898 = vadd.xlane.f32.xlu0 %v897
      %v899 = vpop.xlane.xlu0 %898
      %v900 = vsel %vm836, %v880, 0.0
      %901 = vadd.xlane.f32.xlu0 %v900
      %v902 = vpop.xlane.xlu0 %901
      %v903 = vsel %vm836, %v882, 0.0
      %904 = vadd.xlane.f32.xlu0 %v903
      %v905 = vpop.xlane.xlu0 %904
      %v906 = vsel %vm836, %v884, 0.0
      %907 = vadd.xlane.f32.xlu0 %v906
      %v908 = vpop.xlane.xlu0 %907
      %v909 = vrcp.pop %v887
      %v910 = vrcp.pop %v890
      %v911 = vrcp.pop %v893
      %v912 = vrcp.pop %v896
      %v913 = vrcp.pop %v899
      %v914 = vrcp.pop %v902
      %v915 = vrcp.pop %v905
      %v916 = vrcp.pop %v908
      %v917 = vmul.f32 %v870, %v909
      %v918 = vmul.f32 %v872, %v910
      %v919 = vmul.f32 %v874, %v911
      %v920 = vmul.f32 %v876, %v912
      %v921 = vmul.f32 %v878, %v913
      %v922 = vmul.f32 %v880, %v914
      %v923 = vmul.f32 %v882, %v915
      %v924 = vmul.f32 %v884, %v916
      %v925 = vpack.c.bf16 %v918, %v917
      %v926 = vpack.c.bf16 %v920, %v919
      %v927 = vpack.c.bf16 %v922, %v921
      %v928 = vpack.c.bf16 %v924, %v923
      %929 = vrot.lane.b32.xlu0 %v731, 64
      %v930 = vpop.permute.xlu0 %929
      %931 = vrot.lane.b32.xlu0 %v732, 64
      %v932 = vpop.permute.xlu0 %931
      %933 = vrot.lane.b32.xlu0 %v733, 64
      %v934 = vpop.permute.xlu0 %933
      %935 = vrot.lane.b32.xlu0 %v734, 64
      %v936 = vpop.permute.xlu0 %935
      %v942 = vsel %vm836, %v925, 0
      %v945 = vsel %vm836, %v926, 0
      %v948 = vsel %vm836, %v927, 0
      %v951 = vsel %vm836, %v928, 0
      %953 = vmatprep.subr.bf16.mxu0 0
      %954 = vmatpush1.bf16.msra.mxu0 0
      %955 = vmatprep.subr.bf16.mxu0 0
      %956 = vmatpush1.bf16.msra.mxu0 0
      %957 = vmatprep.subr.bf16.mxu0 0
      %958 = vmatpush1.bf16.msra.mxu0 0
      %959 = vmatprep.subr.bf16.mxu0 0
      %960 = vmatpush1.bf16.msra.mxu0 0
      %961 = vmatprep.subr.bf16.mxu0 0
      %962 = vmatpush1.bf16.msra.mxu0 %v936
      %963 = vmatprep.subr.bf16.mxu0 0
      %964 = vmatpush1.bf16.msra.mxu0 %v934
      %965 = vmatprep.subr.bf16.mxu0 0
      %966 = vmatpush1.bf16.msra.mxu0 %v932
      %967 = vmatprep.subr.bf16.mxu0 0
      %968 = vmatpush1.bf16.msra.mxu0 %v930
      %969 = vmatprep.subr.bf16.mxu0 0
      %970 = vmatpush2.bf16.msra.mxu0 0
      %971 = vmatprep.subr.bf16.mxu0 0
      %972 = vmatpush2.bf16.msra.mxu0 0
      %973 = vmatprep.subr.bf16.mxu0 0
      %974 = vmatpush2.bf16.msra.mxu0 0
      %975 = vmatprep.subr.bf16.mxu0 0
      %976 = vmatpush2.bf16.msra.mxu0 0
      %977 = vmatprep.subr.bf16.mxu0 0
      %978 = vmatpush2.bf16.msra.mxu0 0
      %979 = vmatprep.subr.bf16.mxu0 0
      %980 = vmatpush2.bf16.msra.mxu0 0
      %981 = vmatprep.subr.bf16.mxu0 0
      %982 = vmatpush2.bf16.msra.mxu0 0
      %983 = vmatprep.subr.bf16.mxu0 0
      %984 = vmatpush2.bf16.msra.mxu0 0
      %985 = vmatprep.mubr.bf16.mxu0 0
      %986 = vmatmul.mubr.bf16.gmra.mxu0 %v942
      %v987 = vpop.f32.mrf.mxu0
      %v988 = vadd.f32 0.0, %v987
      %v989 = vpop.f32.mrf.mxu0
      %v990 = vpop.f32.mrf.mxu0
      %v991 = vadd.f32 0.0, %v990
      %v992 = vpop.f32.mrf.mxu0
      %993 = vmatprep.mubr.bf16.mxu0 0
      %994 = vmatmul.mubr.bf16.gmra.mxu0 %v945
      %v995 = vpop.f32.mrf.mxu0
      %v996 = vadd.f32 0.0, %v995
      %v997 = vpop.f32.mrf.mxu0
      %v998 = vpop.f32.mrf.mxu0
      %v999 = vadd.f32 0.0, %v998
      %v1000 = vpop.f32.mrf.mxu0
      %1001 = vmatprep.mubr.bf16.mxu0 0
      %1002 = vmatmul.mubr.bf16.gmra.mxu0 %v948
      %v1003 = vpop.f32.mrf.mxu0
      %v1004 = vadd.f32 0.0, %v1003
      %v1005 = vpop.f32.mrf.mxu0
      %v1006 = vpop.f32.mrf.mxu0
      %v1007 = vadd.f32 0.0, %v1006
      %v1008 = vpop.f32.mrf.mxu0
      %1009 = vmatprep.mubr.bf16.mxu0 0
      %1010 = vmatmul.mubr.bf16.gmra.mxu0 %v951
      %v1011 = vpop.f32.mrf.mxu0
      %v1012 = vadd.f32 0.0, %v1011
      %v1013 = vpop.f32.mrf.mxu0
      %v1014 = vpop.f32.mrf.mxu0
      %v1015 = vadd.f32 0.0, %v1014
      %v1016 = vpop.f32.mrf.mxu0
      %1017 = vdwg.mxu0
      %v1018 = vpack.c.bf16 %v704, %v701
      %v1019 = vpack.c.bf16 %v712, %v709
      %v1020 = vpack.c.bf16 %v720, %v717
      %v1021 = vpack.c.bf16 %v728, %v725
      %1026 = vrot.lane.b32.xlu0 %v1018, 96
      %v1027 = vpop.permute.xlu0 %1026
      %1028 = vrot.lane.b32.xlu0 %v1019, 96
      %v1029 = vpop.permute.xlu0 %1028
      %1030 = vrot.lane.b32.xlu0 %v1020, 96
      %v1031 = vpop.permute.xlu0 %1030
      %1032 = vrot.lane.b32.xlu0 %v1021, 96
      %v1033 = vpop.permute.xlu0 %1032
      %v1035 = vsel %vm609, %v1018, 0
      %v1038 = vsel %vm609, %v1019, 0
      %v1041 = vsel %vm609, %v1020, 0
      %v1044 = vsel %vm609, %v1021, 0
      %v1047 = vsel %vm609, %v1027, 0
      %v1050 = vsel %vm609, %v1029, 0
      %v1053 = vsel %vm609, %v1031, 0
      %v1056 = vsel %vm609, %v1033, 0
      %1058 = vmatprep.subr.bf16.mxu0 0
      %1059 = vmatpush1.bf16.xpose.msra.mxu0 0
      %1060 = vmatprep.subr.bf16.mxu0 0
      %1061 = vmatpush1.bf16.xpose.msra.mxu0 0
      %1062 = vmatprep.subr.bf16.mxu0 0
      %1063 = vmatpush1.bf16.xpose.msra.mxu0 0
      %1064 = vmatprep.subr.bf16.mxu0 0
      %1065 = vmatpush1.bf16.xpose.msra.mxu0 0
      %1066 = vmatprep.subr.bf16.mxu0 0
      %1067 = vmatpush1.bf16.xpose.msra.mxu0 %v1056
      %1068 = vmatprep.subr.bf16.mxu0 0
      %1069 = vmatpush1.bf16.xpose.msra.mxu0 %v1053
      %1070 = vmatprep.subr.bf16.mxu0 0
      %1071 = vmatpush1.bf16.xpose.msra.mxu0 %v1050
      %1072 = vmatprep.subr.bf16.mxu0 0
      %1073 = vmatpush1.bf16.xpose.msra.mxu0 %v1047
      %1074 = vmatprep.subr.bf16.mxu0 0
      %1075 = vmatpush2.bf16.xpose.msra.mxu0 0
      %1076 = vmatprep.subr.bf16.mxu0 0
      %1077 = vmatpush2.bf16.xpose.msra.mxu0 0
      %1078 = vmatprep.subr.bf16.mxu0 0
      %1079 = vmatpush2.bf16.xpose.msra.mxu0 0
      %1080 = vmatprep.subr.bf16.mxu0 0
      %1081 = vmatpush2.bf16.xpose.msra.mxu0 0
      %1082 = vmatprep.subr.bf16.mxu0 0
      %1083 = vmatpush2.bf16.xpose.msra.mxu0 0
      %1084 = vmatprep.subr.bf16.mxu0 0
      %1085 = vmatpush2.bf16.xpose.msra.mxu0 0
      %1086 = vmatprep.subr.bf16.mxu0 0
      %1087 = vmatpush2.bf16.xpose.msra.mxu0 0
      %1088 = vmatprep.subr.bf16.mxu0 0
      %1089 = vmatpush2.bf16.xpose.msra.mxu0 0
      %1090 = vmatprep.mubr.bf16.mxu0 0
      %1091 = vmatmul.mubr.bf16.gmra.mxu0 %v1035
      %v1092 = vpop.f32.mrf.mxu0
      %v1093 = vadd.f32 0.0, %v1092
      %v1094 = vpop.f32.mrf.mxu0
      %v1095 = vpop.f32.mrf.mxu0
      %v1096 = vadd.f32 0.0, %v1095
      %v1097 = vpop.f32.mrf.mxu0
      %1098 = vmatprep.mubr.bf16.mxu0 0
      %1099 = vmatmul.mubr.bf16.gmra.mxu0 %v1038
      %v1100 = vpop.f32.mrf.mxu0
      %v1101 = vadd.f32 0.0, %v1100
      %v1102 = vpop.f32.mrf.mxu0
      %v1103 = vpop.f32.mrf.mxu0
      %v1104 = vadd.f32 0.0, %v1103
      %v1105 = vpop.f32.mrf.mxu0
      %1106 = vmatprep.mubr.bf16.mxu0 0
      %1107 = vmatmul.mubr.bf16.gmra.mxu0 %v1041
      %v1108 = vpop.f32.mrf.mxu0
      %v1109 = vadd.f32 0.0, %v1108
      %v1110 = vpop.f32.mrf.mxu0
      %v1111 = vpop.f32.mrf.mxu0
      %v1112 = vadd.f32 0.0, %v1111
      %v1113 = vpop.f32.mrf.mxu0
      %1114 = vmatprep.mubr.bf16.mxu0 0
      %1115 = vmatmul.mubr.bf16.gmra.mxu0 %v1044
      %v1116 = vpop.f32.mrf.mxu0
      %v1117 = vadd.f32 0.0, %v1116
      %v1118 = vpop.f32.mrf.mxu0
      %v1119 = vpop.f32.mrf.mxu0
      %v1120 = vadd.f32 0.0, %v1119
      %v1121 = vpop.f32.mrf.mxu0
      %1122 = vdwg.mxu0
      %v1123 = vsel %vm836, %v1093, -inf
      %1124 = vmax.xlane.f32.xlu0 %v1123
      %v1125 = vpop.xlane.xlu0 %1124
      %v1126 = vsel %vm836, %v1096, -inf
      %1127 = vmax.xlane.f32.xlu0 %v1126
      %v1128 = vpop.xlane.xlu0 %1127
      %v1129 = vsel %vm836, %v1101, -inf
      %1130 = vmax.xlane.f32.xlu0 %v1129
      %v1131 = vpop.xlane.xlu0 %1130
      %v1132 = vsel %vm836, %v1104, -inf
      %1133 = vmax.xlane.f32.xlu0 %v1132
      %v1134 = vpop.xlane.xlu0 %1133
      %v1135 = vsel %vm836, %v1109, -inf
      %1136 = vmax.xlane.f32.xlu0 %v1135
      %v1137 = vpop.xlane.xlu0 %1136
      %v1138 = vsel %vm836, %v1112, -inf
      %1139 = vmax.xlane.f32.xlu0 %v1138
      %v1140 = vpop.xlane.xlu0 %1139
      %v1141 = vsel %vm836, %v1117, -inf
      %1142 = vmax.xlane.f32.xlu0 %v1141
      %v1143 = vpop.xlane.xlu0 %1142
      %v1144 = vsel %vm836, %v1120, -inf
      %1145 = vmax.xlane.f32.xlu0 %v1144
      %v1146 = vpop.xlane.xlu0 %1145
      %v1147 = vsub.f32 %v1093, %v1125
      %v1148 = vsub.f32 %v1096, %v1128
      %v1149 = vsub.f32 %v1101, %v1131
      %v1150 = vsub.f32 %v1104, %v1134
      %v1151 = vsub.f32 %v1109, %v1137
      %v1152 = vsub.f32 %v1112, %v1140
      %v1153 = vsub.f32 %v1117, %v1143
      %v1154 = vsub.f32 %v1120, %v1146
      %v1155 = vmul.f32 %v1147, 1.442695
      %v1156 = vpow.pop %v1155
      %v1157 = vmul.f32 %v1148, 1.442695
      %v1158 = vpow.pop %v1157
      %v1159 = vmul.f32 %v1149, 1.442695
      %v1160 = vpow.pop %v1159
      %v1161 = vmul.f32 %v1150, 1.442695
      %v1162 = vpow.pop %v1161
      %v1163 = vmul.f32 %v1151, 1.442695
      %v1164 = vpow.pop %v1163
      %v1165 = vmul.f32 %v1152, 1.442695
      %v1166 = vpow.pop %v1165
      %v1167 = vmul.f32 %v1153, 1.442695
      %v1168 = vpow.pop %v1167
      %v1169 = vmul.f32 %v1154, 1.442695
      %v1170 = vpow.pop %v1169
      %v1171 = vsel %vm836, %v1156, 0.0
      %1172 = vadd.xlane.f32.xlu0 %v1171
      %v1173 = vpop.xlane.xlu0 %1172
      %v1174 = vsel %vm836, %v1158, 0.0
      %1175 = vadd.xlane.f32.xlu0 %v1174
      %v1176 = vpop.xlane.xlu0 %1175
      %v1177 = vsel %vm836, %v1160, 0.0
      %1178 = vadd.xlane.f32.xlu0 %v1177
      %v1179 = vpop.xlane.xlu0 %1178
      %v1180 = vsel %vm836, %v1162, 0.0
      %1181 = vadd.xlane.f32.xlu0 %v1180
      %v1182 = vpop.xlane.xlu0 %1181
      %v1183 = vsel %vm836, %v1164, 0.0
      %1184 = vadd.xlane.f32.xlu0 %v1183
      %v1185 = vpop.xlane.xlu0 %1184
      %v1186 = vsel %vm836, %v1166, 0.0
      %1187 = vadd.xlane.f32.xlu0 %v1186
      %v1188 = vpop.xlane.xlu0 %1187
      %v1189 = vsel %vm836, %v1168, 0.0
      %1190 = vadd.xlane.f32.xlu0 %v1189
      %v1191 = vpop.xlane.xlu0 %1190
      %v1192 = vsel %vm836, %v1170, 0.0
      %1193 = vadd.xlane.f32.xlu0 %v1192
      %v1194 = vpop.xlane.xlu0 %1193
      %v1195 = vrcp.pop %v1173
      %v1196 = vrcp.pop %v1176
      %v1197 = vrcp.pop %v1179
      %v1198 = vrcp.pop %v1182
      %v1199 = vrcp.pop %v1185
      %v1200 = vrcp.pop %v1188
      %v1201 = vrcp.pop %v1191
      %v1202 = vrcp.pop %v1194
      %v1203 = vmul.f32 %v1156, %v1195
      %v1204 = vmul.f32 %v1158, %v1196
      %v1205 = vmul.f32 %v1160, %v1197
      %v1206 = vmul.f32 %v1162, %v1198
      %v1207 = vmul.f32 %v1164, %v1199
      %v1208 = vmul.f32 %v1166, %v1200
      %v1209 = vmul.f32 %v1168, %v1201
      %v1210 = vmul.f32 %v1170, %v1202
      %v1211 = vpack.c.bf16 %v1204, %v1203
      %v1212 = vpack.c.bf16 %v1206, %v1205
      %v1213 = vpack.c.bf16 %v1208, %v1207
      %v1214 = vpack.c.bf16 %v1210, %v1209
      %1215 = vrot.lane.b32.xlu0 %v1018, 64
      %v1216 = vpop.permute.xlu0 %1215
      %1217 = vrot.lane.b32.xlu0 %v1019, 64
      %v1218 = vpop.permute.xlu0 %1217
      %1219 = vrot.lane.b32.xlu0 %v1020, 64
      %v1220 = vpop.permute.xlu0 %1219
      %1221 = vrot.lane.b32.xlu0 %v1021, 64
      %v1222 = vpop.permute.xlu0 %1221
      %v1228 = vsel %vm836, %v1211, 0
      %v1231 = vsel %vm836, %v1212, 0
      %v1234 = vsel %vm836, %v1213, 0
      %v1237 = vsel %vm836, %v1214, 0
      %1239 = vmatprep.subr.bf16.mxu0 0
      %1240 = vmatpush1.bf16.msra.mxu0 0
      %1241 = vmatprep.subr.bf16.mxu0 0
      %1242 = vmatpush1.bf16.msra.mxu0 0
      %1243 = vmatprep.subr.bf16.mxu0 0
      %1244 = vmatpush1.bf16.msra.mxu0 0
      %1245 = vmatprep.subr.bf16.mxu0 0
      %1246 = vmatpush1.bf16.msra.mxu0 0
      %1247 = vmatprep.subr.bf16.mxu0 0
      %1248 = vmatpush1.bf16.msra.mxu0 %v1222
      %1249 = vmatprep.subr.bf16.mxu0 0
      %1250 = vmatpush1.bf16.msra.mxu0 %v1220
      %1251 = vmatprep.subr.bf16.mxu0 0
      %1252 = vmatpush1.bf16.msra.mxu0 %v1218
      %1253 = vmatprep.subr.bf16.mxu0 0
      %1254 = vmatpush1.bf16.msra.mxu0 %v1216
      %1255 = vmatprep.subr.bf16.mxu0 0
      %1256 = vmatpush2.bf16.msra.mxu0 0
      %1257 = vmatprep.subr.bf16.mxu0 0
      %1258 = vmatpush2.bf16.msra.mxu0 0
      %1259 = vmatprep.subr.bf16.mxu0 0
      %1260 = vmatpush2.bf16.msra.mxu0 0
      %1261 = vmatprep.subr.bf16.mxu0 0
      %1262 = vmatpush2.bf16.msra.mxu0 0
      %1263 = vmatprep.subr.bf16.mxu0 0
      %1264 = vmatpush2.bf16.msra.mxu0 0
      %1265 = vmatprep.subr.bf16.mxu0 0
      %1266 = vmatpush2.bf16.msra.mxu0 0
      %1267 = vmatprep.subr.bf16.mxu0 0
      %1268 = vmatpush2.bf16.msra.mxu0 0
      %1269 = vmatprep.subr.bf16.mxu0 0
      %1270 = vmatpush2.bf16.msra.mxu0 0
      %1271 = vmatprep.mubr.bf16.mxu0 0
      %1272 = vmatmul.mubr.bf16.gmra.mxu0 %v1228
      %v1273 = vpop.f32.mrf.mxu0
      %v1274 = vadd.f32 0.0, %v1273
      %v1275 = vpop.f32.mrf.mxu0
      %v1276 = vpop.f32.mrf.mxu0
      %v1277 = vadd.f32 0.0, %v1276
      %v1278 = vpop.f32.mrf.mxu0
      %1279 = vmatprep.mubr.bf16.mxu0 0
      %1280 = vmatmul.mubr.bf16.gmra.mxu0 %v1231
      %v1281 = vpop.f32.mrf.mxu0
      %v1282 = vadd.f32 0.0, %v1281
      %v1283 = vpop.f32.mrf.mxu0
      %v1284 = vpop.f32.mrf.mxu0
      %v1285 = vadd.f32 0.0, %v1284
      %v1286 = vpop.f32.mrf.mxu0
      %1287 = vmatprep.mubr.bf16.mxu0 0
      %1288 = vmatmul.mubr.bf16.gmra.mxu0 %v1234
      %v1289 = vpop.f32.mrf.mxu0
      %v1290 = vadd.f32 0.0, %v1289
      %v1291 = vpop.f32.mrf.mxu0
      %v1292 = vpop.f32.mrf.mxu0
      %v1293 = vadd.f32 0.0, %v1292
      %v1294 = vpop.f32.mrf.mxu0
      %1295 = vmatprep.mubr.bf16.mxu0 0
      %1296 = vmatmul.mubr.bf16.gmra.mxu0 %v1237
      %v1297 = vpop.f32.mrf.mxu0
      %v1298 = vadd.f32 0.0, %v1297
      %v1299 = vpop.f32.mrf.mxu0
      %v1300 = vpop.f32.mrf.mxu0
      %v1301 = vadd.f32 0.0, %v1300
      %v1302 = vpop.f32.mrf.mxu0
      %1303 = vdwg.mxu0
      %v1304 = vadd.f32 %v550, %v988
      %v1305 = vadd.f32 %v551, %v991
      %v1306 = vadd.f32 %v552, %v996
      %v1307 = vadd.f32 %v553, %v999
      %v1308 = vadd.f32 %v554, %v1004
      %v1309 = vadd.f32 %v555, %v1007
      %v1310 = vadd.f32 %v556, %v1012
      %v1311 = vadd.f32 %v557, %v1015
      %v1312 = vadd.f32 %v558, %v1274
      %v1313 = vadd.f32 %v559, %v1277
      %v1314 = vadd.f32 %v560, %v1282
      %v1315 = vadd.f32 %v561, %v1285
      %v1316 = vadd.f32 %v562, %v1290
      %v1317 = vadd.f32 %v563, %v1293
      %v1318 = vadd.f32 %v564, %v1298
      %v1319 = vadd.f32 %v565, %v1301
      %v1320 = vadd.f32 %v566, %v567
      %v1321 = vadd.f32 %v1320, %v568
      %v1322 = vadd.f32 %v1321, %v569
      %v1323 = vadd.f32 %v1322, %v570
      %v1324 = vadd.f32 %v1323, %v571
      %1325 = vadd.xlane.f32.xlu0 %v1324
      %v1326 = vpop.xlane.xlu0 %1325
      %v1327 = vadd.f32 %v572, %v573
      %v1328 = vadd.f32 %v1327, %v574
      %v1329 = vadd.f32 %v1328, %v575
      %v1330 = vadd.f32 %v1329, %v576
      %v1331 = vadd.f32 %v1330, %v577
      %1332 = vadd.xlane.f32.xlu0 %v1331
      %v1333 = vpop.xlane.xlu0 %1332
      %v1334 = vrcp.pop 768.0
      %v1335 = vmul.f32 %v1326, %v1334
      %v1336 = vmul.f32 %v1333, %v1334
      %v1337 = vsub.f32 %v566, %v1335
      %v1338 = vsub.f32 %v567, %v1335
      %v1339 = vsub.f32 %v568, %v1335
      %v1340 = vsub.f32 %v569, %v1335
      %v1341 = vsub.f32 %v570, %v1335
      %v1342 = vsub.f32 %v571, %v1335
      %v1343 = vsub.f32 %v572, %v1336
      %v1344 = vsub.f32 %v573, %v1336
      %v1345 = vsub.f32 %v574, %v1336
      %v1346 = vsub.f32 %v575, %v1336
      %v1347 = vsub.f32 %v576, %v1336
      %v1348 = vsub.f32 %v577, %v1336
      %v1349 = vmul.f32 %v1337, %v1337
      %v1350 = vmul.f32 %v1338, %v1338
      %v1351 = vmul.f32 %v1339, %v1339
      %v1352 = vmul.f32 %v1340, %v1340
      %v1353 = vmul.f32 %v1341, %v1341
      %v1354 = vmul.f32 %v1342, %v1342
      %v1355 = vmul.f32 %v1343, %v1343
      %v1356 = vmul.f32 %v1344, %v1344
      %v1357 = vmul.f32 %v1345, %v1345
      %v1358 = vmul.f32 %v1346, %v1346
      %v1359 = vmul.f32 %v1347, %v1347
      %v1360 = vmul.f32 %v1348, %v1348
      %v1361 = vadd.f32 %v1349, %v1350
      %v1362 = vadd.f32 %v1361, %v1351
      %v1363 = vadd.f32 %v1362, %v1352
      %v1364 = vadd.f32 %v1363, %v1353
      %v1365 = vadd.f32 %v1364, %v1354
      %1366 = vadd.xlane.f32.xlu0 %v1365
      %v1367 = vpop.xlane.xlu0 %1366
      %v1368 = vadd.f32 %v1355, %v1356
      %v1369 = vadd.f32 %v1368, %v1357
      %v1370 = vadd.f32 %v1369, %v1358
      %v1371 = vadd.f32 %v1370, %v1359
      %v1372 = vadd.f32 %v1371, %v1360
      %1373 = vadd.xlane.f32.xlu0 %v1372
      %v1374 = vpop.xlane.xlu0 %1373
      %v1375 = vmul.f32 %v1367, %v1334
      %v1376 = vmul.f32 %v1374, %v1334
      %v1377 = vadd.f32 %v1375, 1e-05
      %v1378 = vadd.f32 %v1376, 1e-05
      %v1379 = vrsqrt.pop %v1377
      %v1380 = vrsqrt.pop %v1378
      %v1381 = vmul.f32 %v1337, %v1379
      %v1382 = vmul.f32 %v1338, %v1379
      %v1383 = vmul.f32 %v1339, %v1379
      %v1384 = vmul.f32 %v1340, %v1379
      %v1385 = vmul.f32 %v1341, %v1379
      %v1386 = vmul.f32 %v1342, %v1379
      %v1387 = vmul.f32 %v1343, %v1380
      %v1388 = vmul.f32 %v1344, %v1380
      %v1389 = vmul.f32 %v1345, %v1380
      %v1390 = vmul.f32 %v1346, %v1380
      %v1391 = vmul.f32 %v1347, %v1380
      %v1392 = vmul.f32 %v1348, %v1380
      %v1393 = vld [vmem:[%s8] sm:$0x3f]
      %v1395 = vlaneseq
      %v1396 = vshrl.u32 %v1395, 7
      %v1397 = vsub.s32 0, %v1396
      %v1398 = vrot.slane %v1393, %v1397
      %v1399 = vlaneseq
      %v1400 = vshrl.u32 %v1399, 7
      %v1401 = vsub.s32 1, %v1400
      %v1402 = vrot.slane %v1393, %v1401
      %v1403 = vlaneseq
      %v1404 = vshrl.u32 %v1403, 7
      %v1405 = vsub.s32 2, %v1404
      %v1406 = vrot.slane %v1393, %v1405
      %v1407 = vlaneseq
      %v1408 = vshrl.u32 %v1407, 7
      %v1409 = vsub.s32 3, %v1408
      %v1410 = vrot.slane %v1393, %v1409
      %v1411 = vlaneseq
      %v1412 = vshrl.u32 %v1411, 7
      %v1413 = vsub.s32 4, %v1412
      %v1414 = vrot.slane %v1393, %v1413
      %v1415 = vlaneseq
      %v1416 = vshrl.u32 %v1415, 7
      %v1417 = vsub.s32 5, %v1416
      %v1418 = vrot.slane %v1393, %v1417
      %v1425 = vmul.f32 %v1381, %v1398
      %v1426 = vmul.f32 %v1382, %v1402
      %v1427 = vmul.f32 %v1383, %v1406
      %v1428 = vmul.f32 %v1384, %v1410
      %v1429 = vmul.f32 %v1385, %v1414
      %v1430 = vmul.f32 %v1386, %v1418
      %v1431 = vmul.f32 %v1387, %v1398
      %v1432 = vmul.f32 %v1388, %v1402
      %v1433 = vmul.f32 %v1389, %v1406
      %v1434 = vmul.f32 %v1390, %v1410
      %v1435 = vmul.f32 %v1391, %v1414
      %v1436 = vmul.f32 %v1392, %v1418
      %v1437 = vld [vmem:[%s9] sm:$0x3f]
      %v1439 = vlaneseq
      %v1440 = vshrl.u32 %v1439, 7
      %v1441 = vsub.s32 0, %v1440
      %v1442 = vrot.slane %v1437, %v1441
      %v1443 = vlaneseq
      %v1444 = vshrl.u32 %v1443, 7
      %v1445 = vsub.s32 1, %v1444
      %v1446 = vrot.slane %v1437, %v1445
      %v1447 = vlaneseq
      %v1448 = vshrl.u32 %v1447, 7
      %v1449 = vsub.s32 2, %v1448
      %v1450 = vrot.slane %v1437, %v1449
      %v1451 = vlaneseq
      %v1452 = vshrl.u32 %v1451, 7
      %v1453 = vsub.s32 3, %v1452
      %v1454 = vrot.slane %v1437, %v1453
      %v1455 = vlaneseq
      %v1456 = vshrl.u32 %v1455, 7
      %v1457 = vsub.s32 4, %v1456
      %v1458 = vrot.slane %v1437, %v1457
      %v1459 = vlaneseq
      %v1460 = vshrl.u32 %v1459, 7
      %v1461 = vsub.s32 5, %v1460
      %v1462 = vrot.slane %v1437, %v1461
      %v1469 = vadd.f32 %v1425, %v1442
      %v1470 = vadd.f32 %v1426, %v1446
      %v1471 = vadd.f32 %v1427, %v1450
      %v1472 = vadd.f32 %v1428, %v1454
      %v1473 = vadd.f32 %v1429, %v1458
      %v1474 = vadd.f32 %v1430, %v1462
      %v1475 = vadd.f32 %v1431, %v1442
      %v1476 = vadd.f32 %v1432, %v1446
      %v1477 = vadd.f32 %v1433, %v1450
      %v1478 = vadd.f32 %v1434, %v1454
      %v1479 = vadd.f32 %v1435, %v1458
      %v1480 = vadd.f32 %v1436, %v1462
      %v1481 = vpack.c.bf16 %v1305, %v1304
      %v1482 = vpack.c.bf16 %v1307, %v1306
      %v1483 = vpack.c.bf16 %v1309, %v1308
      %v1484 = vpack.c.bf16 %v1311, %v1310
      %v1485 = vpack.c.bf16 %v1313, %v1312
      %v1486 = vpack.c.bf16 %v1315, %v1314
      %v1487 = vpack.c.bf16 %v1317, %v1316
      %v1488 = vpack.c.bf16 %v1319, %v1318
      %v1489 = vld [vmem:[%s4] sm:$0xf]
      %v1490 = vld [vmem:[%s4 + $0x4] sm:$0xf]
      %v1491 = vld [vmem:[%s4 + $0x8] sm:$0xf]
      %v1492 = vld [vmem:[%s4 + $0xc] sm:$0xf]
      %v1493 = vld [vmem:[%s5] sm:$0x1]
      %v1495 = vlaneseq
      %v1496 = vshrl.u32 %v1495, 7
      %v1497 = vsub.s32 0, %v1496
      %v1498 = vrot.slane %v1493, %v1497
      %v1504 = vunpack.c.l.b16 %v1489
      %v1505 = vunpack.c.l.b16 %v1490
      %v1506 = vunpack.c.l.b16 %v1491
      %v1507 = vunpack.c.l.b16 %v1492
      %v1508 = vpack.c.b16 %v1505, %v1504
      %v1509 = vpack.c.b16 %v1507, %v1506
      %v1513 = vsel %vm609, %v1481, 0
      %v1516 = vsel %vm609, %v1482, 0
      %v1519 = vsel %vm609, %v1483, 0
      %v1522 = vsel %vm609, %v1484, 0
      %v1525 = vsel %vm609, %v1485, 0
      %v1528 = vsel %vm609, %v1486, 0
      %v1531 = vsel %vm609, %v1487, 0
      %v1534 = vsel %vm609, %v1488, 0
      %1536 = vmatprep.subr.bf16.mxu0 0
      %1537 = vmatpush1.bf16.msra.mxu0 0
      %1538 = vmatprep.subr.bf16.mxu0 0
      %1539 = vmatpush1.bf16.msra.mxu0 0
      %1540 = vmatprep.subr.bf16.mxu0 0
      %1541 = vmatpush1.bf16.msra.mxu0 0
      %1542 = vmatprep.subr.bf16.mxu0 0
      %1543 = vmatpush1.bf16.msra.mxu0 0
      %1544 = vmatprep.subr.bf16.mxu0 0
      %1545 = vmatpush1.bf16.msra.mxu0 0
      %1546 = vmatprep.subr.bf16.mxu0 0
      %1547 = vmatpush1.bf16.msra.mxu0 0
      %1548 = vmatprep.subr.bf16.mxu0 0
      %1549 = vmatpush1.bf16.msra.mxu0 %v1509
      %1550 = vmatprep.subr.bf16.mxu0 0
      %1551 = vmatpush1.bf16.msra.mxu0 %v1508
      %1552 = vmatprep.subr.bf16.mxu0 0
      %1553 = vmatpush2.bf16.msra.mxu0 0
      %1554 = vmatprep.subr.bf16.mxu0 0
      %1555 = vmatpush2.bf16.msra.mxu0 0
      %1556 = vmatprep.subr.bf16.mxu0 0
      %1557 = vmatpush2.bf16.msra.mxu0 0
      %1558 = vmatprep.subr.bf16.mxu0 0
      %1559 = vmatpush2.bf16.msra.mxu0 0
      %1560 = vmatprep.subr.bf16.mxu0 0
      %1561 = vmatpush2.bf16.msra.mxu0 0
      %1562 = vmatprep.subr.bf16.mxu0 0
      %1563 = vmatpush2.bf16.msra.mxu0 0
      %1564 = vmatprep.subr.bf16.mxu0 0
      %1565 = vmatpush2.bf16.msra.mxu0 0
      %1566 = vmatprep.subr.bf16.mxu0 0
      %1567 = vmatpush2.bf16.msra.mxu0 0
      %1568 = vmatprep.mubr.bf16.mxu0 0
      %1569 = vmatmul.mubr.bf16.gmra.mxu0 %v1513
      %v1570 = vpop.f32.mrf.mxu0
      %v1571 = vadd.f32 %v1498, %v1570
      %v1572 = vpop.f32.mrf.mxu0
      %v1573 = vpop.f32.mrf.mxu0
      %v1574 = vadd.f32 %v1498, %v1573
      %v1575 = vpop.f32.mrf.mxu0
      %1576 = vmatprep.mubr.bf16.mxu0 0
      %1577 = vmatmul.mubr.bf16.gmra.mxu0 %v1516
      %v1578 = vpop.f32.mrf.mxu0
      %v1579 = vadd.f32 %v1498, %v1578
      %v1580 = vpop.f32.mrf.mxu0
      %v1581 = vpop.f32.mrf.mxu0
      %v1582 = vadd.f32 %v1498, %v1581
      %v1583 = vpop.f32.mrf.mxu0
      %1584 = vmatprep.mubr.bf16.mxu0 0
      %1585 = vmatmul.mubr.bf16.gmra.mxu0 %v1519
      %v1586 = vpop.f32.mrf.mxu0
      %v1587 = vadd.f32 %v1498, %v1586
      %v1588 = vpop.f32.mrf.mxu0
      %v1589 = vpop.f32.mrf.mxu0
      %v1590 = vadd.f32 %v1498, %v1589
      %v1591 = vpop.f32.mrf.mxu0
      %1592 = vmatprep.mubr.bf16.mxu0 0
      %1593 = vmatmul.mubr.bf16.gmra.mxu0 %v1522
      %v1594 = vpop.f32.mrf.mxu0
      %v1595 = vadd.f32 %v1498, %v1594
      %v1596 = vpop.f32.mrf.mxu0
      %v1597 = vpop.f32.mrf.mxu0
      %v1598 = vadd.f32 %v1498, %v1597
      %v1599 = vpop.f32.mrf.mxu0
      %1600 = vmatprep.mubr.bf16.mxu0 0
      %1601 = vmatmul.mubr.bf16.gmra.mxu0 %v1525
      %v1602 = vpop.f32.mrf.mxu0
      %v1603 = vadd.f32 %v1498, %v1602
      %v1604 = vpop.f32.mrf.mxu0
      %v1605 = vpop.f32.mrf.mxu0
      %v1606 = vadd.f32 %v1498, %v1605
      %v1607 = vpop.f32.mrf.mxu0
      %1608 = vmatprep.mubr.bf16.mxu0 0
      %1609 = vmatmul.mubr.bf16.gmra.mxu0 %v1528
      %v1610 = vpop.f32.mrf.mxu0
      %v1611 = vadd.f32 %v1498, %v1610
      %v1612 = vpop.f32.mrf.mxu0
      %v1613 = vpop.f32.mrf.mxu0
      %v1614 = vadd.f32 %v1498, %v1613
      %v1615 = vpop.f32.mrf.mxu0
      %1616 = vmatprep.mubr.bf16.mxu0 0
      %1617 = vmatmul.mubr.bf16.gmra.mxu0 %v1531
      %v1618 = vpop.f32.mrf.mxu0
      %v1619 = vadd.f32 %v1498, %v1618
      %v1620 = vpop.f32.mrf.mxu0
      %v1621 = vpop.f32.mrf.mxu0
      %v1622 = vadd.f32 %v1498, %v1621
      %v1623 = vpop.f32.mrf.mxu0
      %1624 = vmatprep.mubr.bf16.mxu0 0
      %1625 = vmatmul.mubr.bf16.gmra.mxu0 %v1534
      %v1626 = vpop.f32.mrf.mxu0
      %v1627 = vadd.f32 %v1498, %v1626
      %v1628 = vpop.f32.mrf.mxu0
      %v1629 = vpop.f32.mrf.mxu0
      %v1630 = vadd.f32 %v1498, %v1629
      %v1631 = vpop.f32.mrf.mxu0
      %1632 = vdwg.mxu0
      %v1633 = vpack.c.bf16 %v1475, %v1469
      %v1634 = vpack.c.bf16 %v1476, %v1470
      %v1635 = vpack.c.bf16 %v1477, %v1471
      %v1636 = vpack.c.bf16 %v1478, %v1472
      %v1637 = vpack.c.bf16 %v1479, %v1473
      %v1638 = vpack.c.bf16 %v1480, %v1474
      %v1639 = vld [vmem:[%s6] sm:$0xf]
      %v1640 = vld [vmem:[%s6 + $0x4] sm:$0xf]
      %v1641 = vld [vmem:[%s6 + $0x8] sm:$0xf]
      %v1642 = vld [vmem:[%s6 + $0xc] sm:$0xf]
      %v1643 = vld [vmem:[%s6 + $0x10] sm:$0xf]
      %v1644 = vld [vmem:[%s6 + $0x14] sm:$0xf]
      %v1645 = vld [vmem:[%s6 + $0x18] sm:$0xf]
      %v1646 = vld [vmem:[%s6 + $0x1c] sm:$0xf]
      %v1647 = vld [vmem:[%s6 + $0x20] sm:$0xf]
      %v1648 = vld [vmem:[%s6 + $0x24] sm:$0xf]
      %v1649 = vld [vmem:[%s6 + $0x28] sm:$0xf]
      %v1650 = vld [vmem:[%s6 + $0x2c] sm:$0xf]
      %v1651 = vld [vmem:[%s6 + $0x30] sm:$0xf]
      %v1652 = vld [vmem:[%s6 + $0x34] sm:$0xf]
      %v1653 = vld [vmem:[%s6 + $0x38] sm:$0xf]
      %v1654 = vld [vmem:[%s6 + $0x3c] sm:$0xf]
      %v1655 = vld [vmem:[%s6 + $0x40] sm:$0xf]
      %v1656 = vld [vmem:[%s6 + $0x44] sm:$0xf]
      %v1657 = vld [vmem:[%s6 + $0x48] sm:$0xf]
      %v1658 = vld [vmem:[%s6 + $0x4c] sm:$0xf]
      %v1659 = vld [vmem:[%s6 + $0x50] sm:$0xf]
      %v1660 = vld [vmem:[%s6 + $0x54] sm:$0xf]
      %v1661 = vld [vmem:[%s6 + $0x58] sm:$0xf]
      %v1662 = vld [vmem:[%s6 + $0x5c] sm:$0xf]
      %v1663 = vld [vmem:[%s6 + $0x60] sm:$0xf]
      %v1664 = vld [vmem:[%s6 + $0x64] sm:$0xf]
      %v1665 = vld [vmem:[%s6 + $0x68] sm:$0xf]
      %v1666 = vld [vmem:[%s6 + $0x6c] sm:$0xf]
      %v1667 = vld [vmem:[%s6 + $0x70] sm:$0xf]
      %v1668 = vld [vmem:[%s6 + $0x74] sm:$0xf]
      %v1669 = vld [vmem:[%s6 + $0x78] sm:$0xf]
      %v1670 = vld [vmem:[%s6 + $0x7c] sm:$0xf]
      %v1671 = vld [vmem:[%s6 + $0x80] sm:$0xf]
      %v1672 = vld [vmem:[%s6 + $0x84] sm:$0xf]
      %v1673 = vld [vmem:[%s6 + $0x88] sm:$0xf]
      %v1674 = vld [vmem:[%s6 + $0x8c] sm:$0xf]
      %v1675 = vld [vmem:[%s6 + $0x90] sm:$0xf]
      %v1676 = vld [vmem:[%s6 + $0x94] sm:$0xf]
      %v1677 = vld [vmem:[%s6 + $0x98] sm:$0xf]
      %v1678 = vld [vmem:[%s6 + $0x9c] sm:$0xf]
      %v1679 = vld [vmem:[%s6 + $0xa0] sm:$0xf]
      %v1680 = vld [vmem:[%s6 + $0xa4] sm:$0xf]
      %v1681 = vld [vmem:[%s6 + $0xa8] sm:$0xf]
      %v1682 = vld [vmem:[%s6 + $0xac] sm:$0xf]
      %v1683 = vld [vmem:[%s6 + $0xb0] sm:$0xf]
      %v1684 = vld [vmem:[%s6 + $0xb4] sm:$0xf]
      %v1685 = vld [vmem:[%s6 + $0xb8] sm:$0xf]
      %v1686 = vld [vmem:[%s6 + $0xbc] sm:$0xf]
      %v1687 = vld [vmem:[%s6 + $0xc0] sm:$0xf]
      %v1688 = vld [vmem:[%s6 + $0xc4] sm:$0xf]
      %v1689 = vld [vmem:[%s6 + $0xc8] sm:$0xf]
      %v1690 = vld [vmem:[%s6 + $0xcc] sm:$0xf]
      %v1691 = vld [vmem:[%s6 + $0xd0] sm:$0xf]
      %v1692 = vld [vmem:[%s6 + $0xd4] sm:$0xf]
      %v1693 = vld [vmem:[%s6 + $0xd8] sm:$0xf]
      %v1694 = vld [vmem:[%s6 + $0xdc] sm:$0xf]
      %v1695 = vld [vmem:[%s6 + $0xe0] sm:$0xf]
      %v1696 = vld [vmem:[%s6 + $0xe4] sm:$0xf]
      %v1697 = vld [vmem:[%s6 + $0xe8] sm:$0xf]
      %v1698 = vld [vmem:[%s6 + $0xec] sm:$0xf]
      %v1699 = vld [vmem:[%s6 + $0xf0] sm:$0xf]
      %v1700 = vld [vmem:[%s6 + $0xf4] sm:$0xf]
      %v1701 = vld [vmem:[%s6 + $0xf8] sm:$0xf]
      %v1702 = vld [vmem:[%s6 + $0xfc] sm:$0xf]
      %v1703 = vld [vmem:[%s6 + $0x100] sm:$0xf]
      %v1704 = vld [vmem:[%s6 + $0x104] sm:$0xf]
      %v1705 = vld [vmem:[%s6 + $0x108] sm:$0xf]
      %v1706 = vld [vmem:[%s6 + $0x10c] sm:$0xf]
      %v1707 = vld [vmem:[%s6 + $0x110] sm:$0xf]
      %v1708 = vld [vmem:[%s6 + $0x114] sm:$0xf]
      %v1709 = vld [vmem:[%s6 + $0x118] sm:$0xf]
      %v1710 = vld [vmem:[%s6 + $0x11c] sm:$0xf]
      %v1711 = vld [vmem:[%s6 + $0x120] sm:$0xf]
      %v1712 = vld [vmem:[%s6 + $0x124] sm:$0xf]
      %v1713 = vld [vmem:[%s6 + $0x128] sm:$0xf]
      %v1714 = vld [vmem:[%s6 + $0x12c] sm:$0xf]
      %v1715 = vld [vmem:[%s6 + $0x130] sm:$0xf]
      %v1716 = vld [vmem:[%s6 + $0x134] sm:$0xf]
      %v1717 = vld [vmem:[%s6 + $0x138] sm:$0xf]
      %v1718 = vld [vmem:[%s6 + $0x13c] sm:$0xf]
      %v1719 = vld [vmem:[%s6 + $0x140] sm:$0xf]
      %v1720 = vld [vmem:[%s6 + $0x144] sm:$0xf]
      %v1721 = vld [vmem:[%s6 + $0x148] sm:$0xf]
      %v1722 = vld [vmem:[%s6 + $0x14c] sm:$0xf]
      %v1723 = vld [vmem:[%s6 + $0x150] sm:$0xf]
      %v1724 = vld [vmem:[%s6 + $0x154] sm:$0xf]
      %v1725 = vld [vmem:[%s6 + $0x158] sm:$0xf]
      %v1726 = vld [vmem:[%s6 + $0x15c] sm:$0xf]
      %v1727 = vld [vmem:[%s6 + $0x160] sm:$0xf]
      %v1728 = vld [vmem:[%s6 + $0x164] sm:$0xf]
      %v1729 = vld [vmem:[%s6 + $0x168] sm:$0xf]
      %v1730 = vld [vmem:[%s6 + $0x16c] sm:$0xf]
      %v1731 = vld [vmem:[%s6 + $0x170] sm:$0xf]
      %v1732 = vld [vmem:[%s6 + $0x174] sm:$0xf]
      %v1733 = vld [vmem:[%s6 + $0x178] sm:$0xf]
      %v1734 = vld [vmem:[%s6 + $0x17c] sm:$0xf]
      %v1735 = vld [vmem:[%s7] sm:$0x1]
      %v1737 = vlaneseq
      %v1738 = vshrl.u32 %v1737, 7
      %v1739 = vsub.s32 0, %v1738
      %v1740 = vrot.slane %v1735, %v1739
      %v1838 = vunpack.c.l.b16 %v1639
      %v1839 = vunpack.c.l.b16 %v1640
      %v1840 = vunpack.c.l.b16 %v1641
      %v1841 = vunpack.c.l.b16 %v1642
      %v1842 = vunpack.c.l.b16 %v1643
      %v1843 = vunpack.c.l.b16 %v1644
      %v1844 = vunpack.c.l.b16 %v1645
      %v1845 = vunpack.c.l.b16 %v1646
      %v1846 = vunpack.c.l.b16 %v1647
      %v1847 = vunpack.c.l.b16 %v1648
      %v1848 = vunpack.c.l.b16 %v1649
      %v1849 = vunpack.c.l.b16 %v1650
      %v1850 = vunpack.c.l.b16 %v1651
      %v1851 = vunpack.c.l.b16 %v1652
      %v1852 = vunpack.c.l.b16 %v1653
      %v1853 = vunpack.c.l.b16 %v1654
      %v1854 = vunpack.c.l.b16 %v1655
      %v1855 = vunpack.c.l.b16 %v1656
      %v1856 = vunpack.c.l.b16 %v1657
      %v1857 = vunpack.c.l.b16 %v1658
      %v1858 = vunpack.c.l.b16 %v1659
      %v1859 = vunpack.c.l.b16 %v1660
      %v1860 = vunpack.c.l.b16 %v1661
      %v1861 = vunpack.c.l.b16 %v1662
      %v1862 = vunpack.c.l.b16 %v1663
      %v1863 = vunpack.c.l.b16 %v1664
      %v1864 = vunpack.c.l.b16 %v1665
      %v1865 = vunpack.c.l.b16 %v1666
      %v1866 = vunpack.c.l.b16 %v1667
      %v1867 = vunpack.c.l.b16 %v1668
      %v1868 = vunpack.c.l.b16 %v1669
      %v1869 = vunpack.c.l.b16 %v1670
      %v1870 = vunpack.c.l.b16 %v1671
      %v1871 = vunpack.c.l.b16 %v1672
      %v1872 = vunpack.c.l.b16 %v1673
      %v1873 = vunpack.c.l.b16 %v1674
      %v1874 = vunpack.c.l.b16 %v1675
      %v1875 = vunpack.c.l.b16 %v1676
      %v1876 = vunpack.c.l.b16 %v1677
      %v1877 = vunpack.c.l.b16 %v1678
      %v1878 = vunpack.c.l.b16 %v1679
      %v1879 = vunpack.c.l.b16 %v1680
      %v1880 = vunpack.c.l.b16 %v1681
      %v1881 = vunpack.c.l.b16 %v1682
      %v1882 = vunpack.c.l.b16 %v1683
      %v1883 = vunpack.c.l.b16 %v1684
      %v1884 = vunpack.c.l.b16 %v1685
      %v1885 = vunpack.c.l.b16 %v1686
      %v1886 = vunpack.c.l.b16 %v1687
      %v1887 = vunpack.c.l.b16 %v1688
      %v1888 = vunpack.c.l.b16 %v1689
      %v1889 = vunpack.c.l.b16 %v1690
      %v1890 = vunpack.c.l.b16 %v1691
      %v1891 = vunpack.c.l.b16 %v1692
      %v1892 = vunpack.c.l.b16 %v1693
      %v1893 = vunpack.c.l.b16 %v1694
      %v1894 = vunpack.c.l.b16 %v1695
      %v1895 = vunpack.c.l.b16 %v1696
      %v1896 = vunpack.c.l.b16 %v1697
      %v1897 = vunpack.c.l.b16 %v1698
      %v1898 = vunpack.c.l.b16 %v1699
      %v1899 = vunpack.c.l.b16 %v1700
      %v1900 = vunpack.c.l.b16 %v1701
      %v1901 = vunpack.c.l.b16 %v1702
      %v1902 = vunpack.c.l.b16 %v1703
      %v1903 = vunpack.c.l.b16 %v1704
      %v1904 = vunpack.c.l.b16 %v1705
      %v1905 = vunpack.c.l.b16 %v1706
      %v1906 = vunpack.c.l.b16 %v1707
      %v1907 = vunpack.c.l.b16 %v1708
      %v1908 = vunpack.c.l.b16 %v1709
      %v1909 = vunpack.c.l.b16 %v1710
      %v1910 = vunpack.c.l.b16 %v1711
      %v1911 = vunpack.c.l.b16 %v1712
      %v1912 = vunpack.c.l.b16 %v1713
      %v1913 = vunpack.c.l.b16 %v1714
      %v1914 = vunpack.c.l.b16 %v1715
      %v1915 = vunpack.c.l.b16 %v1716
      %v1916 = vunpack.c.l.b16 %v1717
      %v1917 = vunpack.c.l.b16 %v1718
      %v1918 = vunpack.c.l.b16 %v1719
      %v1919 = vunpack.c.l.b16 %v1720
      %v1920 = vunpack.c.l.b16 %v1721
      %v1921 = vunpack.c.l.b16 %v1722
      %v1922 = vunpack.c.l.b16 %v1723
      %v1923 = vunpack.c.l.b16 %v1724
      %v1924 = vunpack.c.l.b16 %v1725
      %v1925 = vunpack.c.l.b16 %v1726
      %v1926 = vunpack.c.l.b16 %v1727
      %v1927 = vunpack.c.l.b16 %v1728
      %v1928 = vunpack.c.l.b16 %v1729
      %v1929 = vunpack.c.l.b16 %v1730
      %v1930 = vunpack.c.l.b16 %v1731
      %v1931 = vunpack.c.l.b16 %v1732
      %v1932 = vunpack.c.l.b16 %v1733
      %v1933 = vunpack.c.l.b16 %v1734
      %v1934 = vpack.c.b16 %v1839, %v1838
      %v1935 = vpack.c.b16 %v1841, %v1840
      %v1936 = vpack.c.b16 %v1843, %v1842
      %v1937 = vpack.c.b16 %v1845, %v1844
      %v1938 = vpack.c.b16 %v1847, %v1846
      %v1939 = vpack.c.b16 %v1849, %v1848
      %v1940 = vpack.c.b16 %v1851, %v1850
      %v1941 = vpack.c.b16 %v1853, %v1852
      %v1942 = vpack.c.b16 %v1855, %v1854
      %v1943 = vpack.c.b16 %v1857, %v1856
      %v1944 = vpack.c.b16 %v1859, %v1858
      %v1945 = vpack.c.b16 %v1861, %v1860
      %v1946 = vpack.c.b16 %v1863, %v1862
      %v1947 = vpack.c.b16 %v1865, %v1864
      %v1948 = vpack.c.b16 %v1867, %v1866
      %v1949 = vpack.c.b16 %v1869, %v1868
      %v1950 = vpack.c.b16 %v1871, %v1870
      %v1951 = vpack.c.b16 %v1873, %v1872
      %v1952 = vpack.c.b16 %v1875, %v1874
      %v1953 = vpack.c.b16 %v1877, %v1876
      %v1954 = vpack.c.b16 %v1879, %v1878
      %v1955 = vpack.c.b16 %v1881, %v1880
      %v1956 = vpack.c.b16 %v1883, %v1882
      %v1957 = vpack.c.b16 %v1885, %v1884
      %v1958 = vpack.c.b16 %v1887, %v1886
      %v1959 = vpack.c.b16 %v1889, %v1888
      %v1960 = vpack.c.b16 %v1891, %v1890
      %v1961 = vpack.c.b16 %v1893, %v1892
      %v1962 = vpack.c.b16 %v1895, %v1894
      %v1963 = vpack.c.b16 %v1897, %v1896
      %v1964 = vpack.c.b16 %v1899, %v1898
      %v1965 = vpack.c.b16 %v1901, %v1900
      %v1966 = vpack.c.b16 %v1903, %v1902
      %v1967 = vpack.c.b16 %v1905, %v1904
      %v1968 = vpack.c.b16 %v1907, %v1906
      %v1969 = vpack.c.b16 %v1909, %v1908
      %v1970 = vpack.c.b16 %v1911, %v1910
      %v1971 = vpack.c.b16 %v1913, %v1912
      %v1972 = vpack.c.b16 %v1915, %v1914
      %v1973 = vpack.c.b16 %v1917, %v1916
      %v1974 = vpack.c.b16 %v1919, %v1918
      %v1975 = vpack.c.b16 %v1921, %v1920
      %v1976 = vpack.c.b16 %v1923, %v1922
      %v1977 = vpack.c.b16 %v1925, %v1924
      %v1978 = vpack.c.b16 %v1927, %v1926
      %v1979 = vpack.c.b16 %v1929, %v1928
      %v1980 = vpack.c.b16 %v1931, %v1930
      %v1981 = vpack.c.b16 %v1933, %v1932
      %2030 = vmatprep.subr.bf16.mxu0 0
      %2031 = vmatpush1.bf16.msra.mxu0 %v1941
      %2032 = vmatprep.subr.bf16.mxu0 0
      %2033 = vmatpush1.bf16.msra.mxu0 %v1940
      %2034 = vmatprep.subr.bf16.mxu0 0
      %2035 = vmatpush1.bf16.msra.mxu0 %v1939
      %2036 = vmatprep.subr.bf16.mxu0 0
      %2037 = vmatpush1.bf16.msra.mxu0 %v1938
      %2038 = vmatprep.subr.bf16.mxu0 0
      %2039 = vmatpush1.bf16.msra.mxu0 %v1937
      %2040 = vmatprep.subr.bf16.mxu0 0
      %2041 = vmatpush1.bf16.msra.mxu0 %v1936
      %2042 = vmatprep.subr.bf16.mxu0 0
      %2043 = vmatpush1.bf16.msra.mxu0 %v1935
      %2044 = vmatprep.subr.bf16.mxu0 0
      %2045 = vmatpush1.bf16.msra.mxu0 %v1934
      %2046 = vmatprep.subr.bf16.mxu0 0
      %2047 = vmatpush2.bf16.msra.mxu0 %v1949
      %2048 = vmatprep.subr.bf16.mxu0 0
      %2049 = vmatpush2.bf16.msra.mxu0 %v1948
      %2050 = vmatprep.subr.bf16.mxu0 0
      %2051 = vmatpush2.bf16.msra.mxu0 %v1947
      %2052 = vmatprep.subr.bf16.mxu0 0
      %2053 = vmatpush2.bf16.msra.mxu0 %v1946
      %2054 = vmatprep.subr.bf16.mxu0 0
      %2055 = vmatpush2.bf16.msra.mxu0 %v1945
      %2056 = vmatprep.subr.bf16.mxu0 0
      %2057 = vmatpush2.bf16.msra.mxu0 %v1944
      %2058 = vmatprep.subr.bf16.mxu0 0
      %2059 = vmatpush2.bf16.msra.mxu0 %v1943
      %2060 = vmatprep.subr.bf16.mxu0 0
      %2061 = vmatpush2.bf16.msra.mxu0 %v1942
      %2062 = vmatprep.mubr.bf16.mxu0 %v1634
      %2063 = vmatmul.mubr.bf16.gmra.mxu0 %v1633
      %v2064 = vpop.f32.mrf.mxu0
      %v2065 = vadd.f32 %v1740, %v2064
      %v2066 = vpop.f32.mrf.mxu0
      %v2067 = vpop.f32.mrf.mxu0
      %v2068 = vadd.f32 %v1740, %v2067
      %v2069 = vpop.f32.mrf.mxu0
      %2070 = vdwg.mxu0
      %2071 = vmatprep.subr.bf16.mxu0 0
      %2072 = vmatpush1.bf16.msra.mxu0 %v1957
      %2073 = vmatprep.subr.bf16.mxu0 0
      %2074 = vmatpush1.bf16.msra.mxu0 %v1956
      %2075 = vmatprep.subr.bf16.mxu0 0
      %2076 = vmatpush1.bf16.msra.mxu0 %v1955
      %2077 = vmatprep.subr.bf16.mxu0 0
      %2078 = vmatpush1.bf16.msra.mxu0 %v1954
      %2079 = vmatprep.subr.bf16.mxu0 0
      %2080 = vmatpush1.bf16.msra.mxu0 %v1953
      %2081 = vmatprep.subr.bf16.mxu0 0
      %2082 = vmatpush1.bf16.msra.mxu0 %v1952
      %2083 = vmatprep.subr.bf16.mxu0 0
      %2084 = vmatpush1.bf16.msra.mxu0 %v1951
      %2085 = vmatprep.subr.bf16.mxu0 0
      %2086 = vmatpush1.bf16.msra.mxu0 %v1950
      %2087 = vmatprep.subr.bf16.mxu0 0
      %2088 = vmatpush2.bf16.msra.mxu0 %v1965
      %2089 = vmatprep.subr.bf16.mxu0 0
      %2090 = vmatpush2.bf16.msra.mxu0 %v1964
      %2091 = vmatprep.subr.bf16.mxu0 0
      %2092 = vmatpush2.bf16.msra.mxu0 %v1963
      %2093 = vmatprep.subr.bf16.mxu0 0
      %2094 = vmatpush2.bf16.msra.mxu0 %v1962
      %2095 = vmatprep.subr.bf16.mxu0 0
      %2096 = vmatpush2.bf16.msra.mxu0 %v1961
      %2097 = vmatprep.subr.bf16.mxu0 0
      %2098 = vmatpush2.bf16.msra.mxu0 %v1960
      %2099 = vmatprep.subr.bf16.mxu0 0
      %2100 = vmatpush2.bf16.msra.mxu0 %v1959
      %2101 = vmatprep.subr.bf16.mxu0 0
      %2102 = vmatpush2.bf16.msra.mxu0 %v1958
      %2103 = vmatprep.mubr.bf16.mxu0 %v1636
      %2104 = vmatmul.mubr.bf16.gmra.mxu0 %v1635
      %v2105 = vpop.f32.mrf.mxu0
      %v2106 = vadd.f32 %v2065, %v2105
      %v2107 = vpop.f32.mrf.mxu0
      %v2108 = vpop.f32.mrf.mxu0
      %v2109 = vadd.f32 %v2068, %v2108
      %v2110 = vpop.f32.mrf.mxu0
      %2111 = vdwg.mxu0
      %2112 = vmatprep.subr.bf16.mxu0 0
      %2113 = vmatpush1.bf16.msra.mxu0 %v1973
      %2114 = vmatprep.subr.bf16.mxu0 0
      %2115 = vmatpush1.bf16.msra.mxu0 %v1972
      %2116 = vmatprep.subr.bf16.mxu0 0
      %2117 = vmatpush1.bf16.msra.mxu0 %v1971
      %2118 = vmatprep.subr.bf16.mxu0 0
      %2119 = vmatpush1.bf16.msra.mxu0 %v1970
      %2120 = vmatprep.subr.bf16.mxu0 0
      %2121 = vmatpush1.bf16.msra.mxu0 %v1969
      %2122 = vmatprep.subr.bf16.mxu0 0
      %2123 = vmatpush1.bf16.msra.mxu0 %v1968
      %2124 = vmatprep.subr.bf16.mxu0 0
      %2125 = vmatpush1.bf16.msra.mxu0 %v1967
      %2126 = vmatprep.subr.bf16.mxu0 0
      %2127 = vmatpush1.bf16.msra.mxu0 %v1966
      %2128 = vmatprep.subr.bf16.mxu0 0
      %2129 = vmatpush2.bf16.msra.mxu0 %v1981
      %2130 = vmatprep.subr.bf16.mxu0 0
      %2131 = vmatpush2.bf16.msra.mxu0 %v1980
      %2132 = vmatprep.subr.bf16.mxu0 0
      %2133 = vmatpush2.bf16.msra.mxu0 %v1979
      %2134 = vmatprep.subr.bf16.mxu0 0
      %2135 = vmatpush2.bf16.msra.mxu0 %v1978
      %2136 = vmatprep.subr.bf16.mxu0 0
      %2137 = vmatpush2.bf16.msra.mxu0 %v1977
      %2138 = vmatprep.subr.bf16.mxu0 0
      %2139 = vmatpush2.bf16.msra.mxu0 %v1976
      %2140 = vmatprep.subr.bf16.mxu0 0
      %2141 = vmatpush2.bf16.msra.mxu0 %v1975
      %2142 = vmatprep.subr.bf16.mxu0 0
      %2143 = vmatpush2.bf16.msra.mxu0 %v1974
      %2144 = vmatprep.mubr.bf16.mxu0 %v1638
      %2145 = vmatmul.mubr.bf16.gmra.mxu0 %v1637
      %v2146 = vpop.f32.mrf.mxu0
      %v2147 = vadd.f32 %v2106, %v2146
      %v2148 = vpop.f32.mrf.mxu0
      %v2149 = vpop.f32.mrf.mxu0
      %v2150 = vadd.f32 %v2109, %v2149
      %v2151 = vpop.f32.mrf.mxu0
      %2152 = vdwg.mxu0
      %v2153 = vpack.c.bf16 %v1574, %v1571
      %v2154 = vpack.c.bf16 %v1582, %v1579
      %v2155 = vpack.c.bf16 %v1590, %v1587
      %v2156 = vpack.c.bf16 %v1598, %v1595
      %v2157 = vpack.c.bf16 %v2147, %v2147
      %v2159 = vsel %vm609, %v2153, 0
      %v2162 = vsel %vm609, %v2154, 0
      %v2165 = vsel %vm609, %v2155, 0
      %v2168 = vsel %vm609, %v2156, 0
      %v2171 = vsel %vm609, %v2157, 0
      %2173 = vmatprep.subr.bf16.mxu0 0
      %2174 = vmatpush1.bf16.xpose.msra.mxu0 0
      %2175 = vmatprep.subr.bf16.mxu0 0
      %2176 = vmatpush1.bf16.xpose.msra.mxu0 0
      %2177 = vmatprep.subr.bf16.mxu0 0
      %2178 = vmatpush1.bf16.xpose.msra.mxu0 0
      %2179 = vmatprep.subr.bf16.mxu0 0
      %2180 = vmatpush1.bf16.xpose.msra.mxu0 0
      %2181 = vmatprep.subr.bf16.mxu0 0
      %2182 = vmatpush1.bf16.xpose.msra.mxu0 0
      %2183 = vmatprep.subr.bf16.mxu0 0
      %2184 = vmatpush1.bf16.xpose.msra.mxu0 0
      %2185 = vmatprep.subr.bf16.mxu0 0
      %2186 = vmatpush1.bf16.xpose.msra.mxu0 0
      %2187 = vmatprep.subr.bf16.mxu0 0
      %2188 = vmatpush1.bf16.xpose.msra.mxu0 %v2171
      %2189 = vmatprep.subr.bf16.mxu0 0
      %2190 = vmatpush2.bf16.xpose.msra.mxu0 0
      %2191 = vmatprep.subr.bf16.mxu0 0
      %2192 = vmatpush2.bf16.xpose.msra.mxu0 0
      %2193 = vmatprep.subr.bf16.mxu0 0
      %2194 = vmatpush2.bf16.xpose.msra.mxu0 0
      %2195 = vmatprep.subr.bf16.mxu0 0
      %2196 = vmatpush2.bf16.xpose.msra.mxu0 0
      %2197 = vmatprep.subr.bf16.mxu0 0
      %2198 = vmatpush2.bf16.xpose.msra.mxu0 0
      %2199 = vmatprep.subr.bf16.mxu0 0
      %2200 = vmatpush2.bf16.xpose.msra.mxu0 0
      %2201 = vmatprep.subr.bf16.mxu0 0
      %2202 = vmatpush2.bf16.xpose.msra.mxu0 0
      %2203 = vmatprep.subr.bf16.mxu0 0
      %2204 = vmatpush2.bf16.xpose.msra.mxu0 0
      %2205 = vmatprep.mubr.bf16.mxu0 0
      %2206 = vmatmul.mubr.bf16.gmra.mxu0 %v2159
      %v2207 = vpop.f32.mrf.mxu0
      %v2208 = vadd.f32 0.0, %v2207
      %v2209 = vpop.f32.mrf.mxu0
      %v2210 = vpop.f32.mrf.mxu0
      %v2211 = vadd.f32 0.0, %v2210
      %v2212 = vpop.f32.mrf.mxu0
      %2213 = vmatprep.mubr.bf16.mxu0 0
      %2214 = vmatmul.mubr.bf16.gmra.mxu0 %v2162
      %v2215 = vpop.f32.mrf.mxu0
      %v2216 = vadd.f32 0.0, %v2215
      %v2217 = vpop.f32.mrf.mxu0
      %v2218 = vpop.f32.mrf.mxu0
      %v2219 = vadd.f32 0.0, %v2218
      %v2220 = vpop.f32.mrf.mxu0
      %2221 = vmatprep.mubr.bf16.mxu0 0
      %2222 = vmatmul.mubr.bf16.gmra.mxu0 %v2165
      %v2223 = vpop.f32.mrf.mxu0
      %v2224 = vadd.f32 0.0, %v2223
      %v2225 = vpop.f32.mrf.mxu0
      %v2226 = vpop.f32.mrf.mxu0
      %v2227 = vadd.f32 0.0, %v2226
      %v2228 = vpop.f32.mrf.mxu0
      %2229 = vmatprep.mubr.bf16.mxu0 0
      %2230 = vmatmul.mubr.bf16.gmra.mxu0 %v2168
      %v2231 = vpop.f32.mrf.mxu0
      %v2232 = vadd.f32 0.0, %v2231
      %v2233 = vpop.f32.mrf.mxu0
      %v2234 = vpop.f32.mrf.mxu0
      %v2235 = vadd.f32 0.0, %v2234
      %v2236 = vpop.f32.mrf.mxu0
      %2237 = vdwg.mxu0
      %vm2238 = vcmask 64512
      %v2239 = vsel %vm2238, %v2208, -inf
      %2240 = vmax.xlane.f32.xlu0 %v2239
      %v2241 = vpop.xlane.xlu0 %2240
      %v2242 = vsel %vm2238, %v2211, -inf
      %2243 = vmax.xlane.f32.xlu0 %v2242
      %v2244 = vpop.xlane.xlu0 %2243
      %v2245 = vsel %vm2238, %v2216, -inf
      %2246 = vmax.xlane.f32.xlu0 %v2245
      %v2247 = vpop.xlane.xlu0 %2246
      %v2248 = vsel %vm2238, %v2219, -inf
      %2249 = vmax.xlane.f32.xlu0 %v2248
      %v2250 = vpop.xlane.xlu0 %2249
      %v2251 = vsel %vm2238, %v2224, -inf
      %2252 = vmax.xlane.f32.xlu0 %v2251
      %v2253 = vpop.xlane.xlu0 %2252
      %v2254 = vsel %vm2238, %v2227, -inf
      %2255 = vmax.xlane.f32.xlu0 %v2254
      %v2256 = vpop.xlane.xlu0 %2255
      %v2257 = vsel %vm2238, %v2232, -inf
      %2258 = vmax.xlane.f32.xlu0 %v2257
      %v2259 = vpop.xlane.xlu0 %2258
      %v2260 = vsel %vm2238, %v2235, -inf
      %2261 = vmax.xlane.f32.xlu0 %v2260
      %v2262 = vpop.xlane.xlu0 %2261
      %v2263 = vsub.f32 %v2208, %v2241
      %v2264 = vsub.f32 %v2211, %v2244
      %v2265 = vsub.f32 %v2216, %v2247
      %v2266 = vsub.f32 %v2219, %v2250
      %v2267 = vsub.f32 %v2224, %v2253
      %v2268 = vsub.f32 %v2227, %v2256
      %v2269 = vsub.f32 %v2232, %v2259
      %v2270 = vsub.f32 %v2235, %v2262
      %v2271 = vmul.f32 %v2263, 1.442695
      %v2272 = vpow.pop %v2271
      %v2273 = vmul.f32 %v2264, 1.442695
      %v2274 = vpow.pop %v2273
      %v2275 = vmul.f32 %v2265, 1.442695
      %v2276 = vpow.pop %v2275
      %v2277 = vmul.f32 %v2266, 1.442695
      %v2278 = vpow.pop %v2277
      %v2279 = vmul.f32 %v2267, 1.442695
      %v2280 = vpow.pop %v2279
      %v2281 = vmul.f32 %v2268, 1.442695
      %v2282 = vpow.pop %v2281
      %v2283 = vmul.f32 %v2269, 1.442695
      %v2284 = vpow.pop %v2283
      %v2285 = vmul.f32 %v2270, 1.442695
      %v2286 = vpow.pop %v2285
      %v2287 = vsel %vm2238, %v2272, 0.0
      %2288 = vadd.xlane.f32.xlu0 %v2287
      %v2289 = vpop.xlane.xlu0 %2288
      %v2290 = vsel %vm2238, %v2274, 0.0
      %2291 = vadd.xlane.f32.xlu0 %v2290
      %v2292 = vpop.xlane.xlu0 %2291
      %v2293 = vsel %vm2238, %v2276, 0.0
      %2294 = vadd.xlane.f32.xlu0 %v2293
      %v2295 = vpop.xlane.xlu0 %2294
      %v2296 = vsel %vm2238, %v2278, 0.0
      %2297 = vadd.xlane.f32.xlu0 %v2296
      %v2298 = vpop.xlane.xlu0 %2297
      %v2299 = vsel %vm2238, %v2280, 0.0
      %2300 = vadd.xlane.f32.xlu0 %v2299
      %v2301 = vpop.xlane.xlu0 %2300
      %v2302 = vsel %vm2238, %v2282, 0.0
      %2303 = vadd.xlane.f32.xlu0 %v2302
      %v2304 = vpop.xlane.xlu0 %2303
      %v2305 = vsel %vm2238, %v2284, 0.0
      %2306 = vadd.xlane.f32.xlu0 %v2305
      %v2307 = vpop.xlane.xlu0 %2306
      %v2308 = vsel %vm2238, %v2286, 0.0
      %2309 = vadd.xlane.f32.xlu0 %v2308
      %v2310 = vpop.xlane.xlu0 %2309
      %v2311 = vrcp.pop %v2289
      %v2312 = vrcp.pop %v2292
      %v2313 = vrcp.pop %v2295
      %v2314 = vrcp.pop %v2298
      %v2315 = vrcp.pop %v2301
      %v2316 = vrcp.pop %v2304
      %v2317 = vrcp.pop %v2307
      %v2318 = vrcp.pop %v2310
      %v2319 = vmul.f32 %v2272, %v2311
      %v2320 = vmul.f32 %v2274, %v2312
      %v2321 = vmul.f32 %v2276, %v2313
      %v2322 = vmul.f32 %v2278, %v2314
      %v2323 = vmul.f32 %v2280, %v2315
      %v2324 = vmul.f32 %v2282, %v2316
      %v2325 = vmul.f32 %v2284, %v2317
      %v2326 = vmul.f32 %v2286, %v2318
      %v2327 = vpack.c.bf16 %v2320, %v2319
      %v2328 = vpack.c.bf16 %v2322, %v2321
      %v2329 = vpack.c.bf16 %v2324, %v2323
      %v2330 = vpack.c.bf16 %v2326, %v2325
      %2332 = vrot.lane.b32.xlu0 %v2157, 96
      %v2333 = vpop.permute.xlu0 %2332
      %v2335 = vsel %vm2238, %v2327, 0
      %v2338 = vsel %vm2238, %v2328, 0
      %v2341 = vsel %vm2238, %v2329, 0
      %v2344 = vsel %vm2238, %v2330, 0
      %vm2346 = vcmask 1043456
      %v2348 = vsel %vm2346, %v2333, 0
      %2350 = vmatprep.subr.bf16.mxu0 0
      %2351 = vmatpush1.bf16.msra.mxu0 0
      %2352 = vmatprep.subr.bf16.mxu0 0
      %2353 = vmatpush1.bf16.msra.mxu0 0
      %2354 = vmatprep.subr.bf16.mxu0 0
      %2355 = vmatpush1.bf16.msra.mxu0 0
      %2356 = vmatprep.subr.bf16.mxu0 0
      %2357 = vmatpush1.bf16.msra.mxu0 0
      %2358 = vmatprep.subr.bf16.mxu0 0
      %2359 = vmatpush1.bf16.msra.mxu0 0
      %2360 = vmatprep.subr.bf16.mxu0 0
      %2361 = vmatpush1.bf16.msra.mxu0 0
      %2362 = vmatprep.subr.bf16.mxu0 0
      %2363 = vmatpush1.bf16.msra.mxu0 0
      %2364 = vmatprep.subr.bf16.mxu0 0
      %2365 = vmatpush1.bf16.msra.mxu0 %v2348
      %2366 = vmatprep.subr.bf16.mxu0 0
      %2367 = vmatpush2.bf16.msra.mxu0 0
      %2368 = vmatprep.subr.bf16.mxu0 0
      %2369 = vmatpush2.bf16.msra.mxu0 0
      %2370 = vmatprep.subr.bf16.mxu0 0
      %2371 = vmatpush2.bf16.msra.mxu0 0
      %2372 = vmatprep.subr.bf16.mxu0 0
      %2373 = vmatpush2.bf16.msra.mxu0 0
      %2374 = vmatprep.subr.bf16.mxu0 0
      %2375 = vmatpush2.bf16.msra.mxu0 0
      %2376 = vmatprep.subr.bf16.mxu0 0
      %2377 = vmatpush2.bf16.msra.mxu0 0
      %2378 = vmatprep.subr.bf16.mxu0 0
      %2379 = vmatpush2.bf16.msra.mxu0 0
      %2380 = vmatprep.subr.bf16.mxu0 0
      %2381 = vmatpush2.bf16.msra.mxu0 0
      %2382 = vmatprep.mubr.bf16.mxu0 0
      %2383 = vmatmul.mubr.bf16.gmra.mxu0 %v2335
      %v2384 = vpop.f32.mrf.mxu0
      %v2385 = vadd.f32 0.0, %v2384
      %v2386 = vpop.f32.mrf.mxu0
      %v2387 = vpop.f32.mrf.mxu0
      %v2388 = vadd.f32 0.0, %v2387
      %v2389 = vpop.f32.mrf.mxu0
      %2390 = vmatprep.mubr.bf16.mxu0 0
      %2391 = vmatmul.mubr.bf16.gmra.mxu0 %v2338
      %v2392 = vpop.f32.mrf.mxu0
      %v2393 = vadd.f32 0.0, %v2392
      %v2394 = vpop.f32.mrf.mxu0
      %v2395 = vpop.f32.mrf.mxu0
      %v2396 = vadd.f32 0.0, %v2395
      %v2397 = vpop.f32.mrf.mxu0
      %2398 = vmatprep.mubr.bf16.mxu0 0
      %2399 = vmatmul.mubr.bf16.gmra.mxu0 %v2341
      %v2400 = vpop.f32.mrf.mxu0
      %v2401 = vadd.f32 0.0, %v2400
      %v2402 = vpop.f32.mrf.mxu0
      %v2403 = vpop.f32.mrf.mxu0
      %v2404 = vadd.f32 0.0, %v2403
      %v2405 = vpop.f32.mrf.mxu0
      %2406 = vmatprep.mubr.bf16.mxu0 0
      %2407 = vmatmul.mubr.bf16.gmra.mxu0 %v2344
      %v2408 = vpop.f32.mrf.mxu0
      %v2409 = vadd.f32 0.0, %v2408
      %v2410 = vpop.f32.mrf.mxu0
      %v2411 = vpop.f32.mrf.mxu0
      %v2412 = vadd.f32 0.0, %v2411
      %v2413 = vpop.f32.mrf.mxu0
      %2414 = vdwg.mxu0
      %v2415 = vpack.c.bf16 %v1606, %v1603
      %v2416 = vpack.c.bf16 %v1614, %v1611
      %v2417 = vpack.c.bf16 %v1622, %v1619
      %v2418 = vpack.c.bf16 %v1630, %v1627
      %v2419 = vpack.c.bf16 %v2150, %v2150
      %v2421 = vsel %vm609, %v2415, 0
      %v2424 = vsel %vm609, %v2416, 0
      %v2427 = vsel %vm609, %v2417, 0
      %v2430 = vsel %vm609, %v2418, 0
      %v2433 = vsel %vm609, %v2419, 0
      %2435 = vmatprep.subr.bf16.mxu0 0
      %2436 = vmatpush1.bf16.xpose.msra.mxu0 0
      %2437 = vmatprep.subr.bf16.mxu0 0
      %2438 = vmatpush1.bf16.xpose.msra.mxu0 0
      %2439 = vmatprep.subr.bf16.mxu0 0
      %2440 = vmatpush1.bf16.xpose.msra.mxu0 0
      %2441 = vmatprep.subr.bf16.mxu0 0
      %2442 = vmatpush1.bf16.xpose.msra.mxu0 0
      %2443 = vmatprep.subr.bf16.mxu0 0
      %2444 = vmatpush1.bf16.xpose.msra.mxu0 0
      %2445 = vmatprep.subr.bf16.mxu0 0
      %2446 = vmatpush1.bf16.xpose.msra.mxu0 0
      %2447 = vmatprep.subr.bf16.mxu0 0
      %2448 = vmatpush1.bf16.xpose.msra.mxu0 0
      %2449 = vmatprep.subr.bf16.mxu0 0
      %2450 = vmatpush1.bf16.xpose.msra.mxu0 %v2433
      %2451 = vmatprep.subr.bf16.mxu0 0
      %2452 = vmatpush2.bf16.xpose.msra.mxu0 0
      %2453 = vmatprep.subr.bf16.mxu0 0
      %2454 = vmatpush2.bf16.xpose.msra.mxu0 0
      %2455 = vmatprep.subr.bf16.mxu0 0
      %2456 = vmatpush2.bf16.xpose.msra.mxu0 0
      %2457 = vmatprep.subr.bf16.mxu0 0
      %2458 = vmatpush2.bf16.xpose.msra.mxu0 0
      %2459 = vmatprep.subr.bf16.mxu0 0
      %2460 = vmatpush2.bf16.xpose.msra.mxu0 0
      %2461 = vmatprep.subr.bf16.mxu0 0
      %2462 = vmatpush2.bf16.xpose.msra.mxu0 0
      %2463 = vmatprep.subr.bf16.mxu0 0
      %2464 = vmatpush2.bf16.xpose.msra.mxu0 0
      %2465 = vmatprep.subr.bf16.mxu0 0
      %2466 = vmatpush2.bf16.xpose.msra.mxu0 0
      %2467 = vmatprep.mubr.bf16.mxu0 0
      %2468 = vmatmul.mubr.bf16.gmra.mxu0 %v2421
      %v2469 = vpop.f32.mrf.mxu0
      %v2470 = vadd.f32 0.0, %v2469
      %v2471 = vpop.f32.mrf.mxu0
      %v2472 = vpop.f32.mrf.mxu0
      %v2473 = vadd.f32 0.0, %v2472
      %v2474 = vpop.f32.mrf.mxu0
      %2475 = vmatprep.mubr.bf16.mxu0 0
      %2476 = vmatmul.mubr.bf16.gmra.mxu0 %v2424
      %v2477 = vpop.f32.mrf.mxu0
      %v2478 = vadd.f32 0.0, %v2477
      %v2479 = vpop.f32.mrf.mxu0
      %v2480 = vpop.f32.mrf.mxu0
      %v2481 = vadd.f32 0.0, %v2480
      %v2482 = vpop.f32.mrf.mxu0
      %2483 = vmatprep.mubr.bf16.mxu0 0
      %2484 = vmatmul.mubr.bf16.gmra.mxu0 %v2427
      %v2485 = vpop.f32.mrf.mxu0
      %v2486 = vadd.f32 0.0, %v2485
      %v2487 = vpop.f32.mrf.mxu0
      %v2488 = vpop.f32.mrf.mxu0
      %v2489 = vadd.f32 0.0, %v2488
      %v2490 = vpop.f32.mrf.mxu0
      %2491 = vmatprep.mubr.bf16.mxu0 0
      %2492 = vmatmul.mubr.bf16.gmra.mxu0 %v2430
      %v2493 = vpop.f32.mrf.mxu0
      %v2494 = vadd.f32 0.0, %v2493
      %v2495 = vpop.f32.mrf.mxu0
      %v2496 = vpop.f32.mrf.mxu0
      %v2497 = vadd.f32 0.0, %v2496
      %v2498 = vpop.f32.mrf.mxu0
      %2499 = vdwg.mxu0
      %v2500 = vsel %vm2238, %v2470, -inf
      %2501 = vmax.xlane.f32.xlu0 %v2500
      %v2502 = vpop.xlane.xlu0 %2501
      %v2503 = vsel %vm2238, %v2473, -inf
      %2504 = vmax.xlane.f32.xlu0 %v2503
      %v2505 = vpop.xlane.xlu0 %2504
      %v2506 = vsel %vm2238, %v2478, -inf
      %2507 = vmax.xlane.f32.xlu0 %v2506
      %v2508 = vpop.xlane.xlu0 %2507
      %v2509 = vsel %vm2238, %v2481, -inf
      %2510 = vmax.xlane.f32.xlu0 %v2509
      %v2511 = vpop.xlane.xlu0 %2510
      %v2512 = vsel %vm2238, %v2486, -inf
      %2513 = vmax.xlane.f32.xlu0 %v2512
      %v2514 = vpop.xlane.xlu0 %2513
      %v2515 = vsel %vm2238, %v2489, -inf
      %2516 = vmax.xlane.f32.xlu0 %v2515
      %v2517 = vpop.xlane.xlu0 %2516
      %v2518 = vsel %vm2238, %v2494, -inf
      %2519 = vmax.xlane.f32.xlu0 %v2518
      %v2520 = vpop.xlane.xlu0 %2519
      %v2521 = vsel %vm2238, %v2497, -inf
      %2522 = vmax.xlane.f32.xlu0 %v2521
      %v2523 = vpop.xlane.xlu0 %2522
      %v2524 = vsub.f32 %v2470, %v2502
      %v2525 = vsub.f32 %v2473, %v2505
      %v2526 = vsub.f32 %v2478, %v2508
      %v2527 = vsub.f32 %v2481, %v2511
      %v2528 = vsub.f32 %v2486, %v2514
      %v2529 = vsub.f32 %v2489, %v2517
      %v2530 = vsub.f32 %v2494, %v2520
      %v2531 = vsub.f32 %v2497, %v2523
      %v2532 = vmul.f32 %v2524, 1.442695
      %v2533 = vpow.pop %v2532
      %v2534 = vmul.f32 %v2525, 1.442695
      %v2535 = vpow.pop %v2534
      %v2536 = vmul.f32 %v2526, 1.442695
      %v2537 = vpow.pop %v2536
      %v2538 = vmul.f32 %v2527, 1.442695
      %v2539 = vpow.pop %v2538
      %v2540 = vmul.f32 %v2528, 1.442695
      %v2541 = vpow.pop %v2540
      %v2542 = vmul.f32 %v2529, 1.442695
      %v2543 = vpow.pop %v2542
      %v2544 = vmul.f32 %v2530, 1.442695
      %v2545 = vpow.pop %v2544
      %v2546 = vmul.f32 %v2531, 1.442695
      %v2547 = vpow.pop %v2546
      %v2548 = vsel %vm2238, %v2533, 0.0
      %2549 = vadd.xlane.f32.xlu0 %v2548
      %v2550 = vpop.xlane.xlu0 %2549
      %v2551 = vsel %vm2238, %v2535, 0.0
      %2552 = vadd.xlane.f32.xlu0 %v2551
      %v2553 = vpop.xlane.xlu0 %2552
      %v2554 = vsel %vm2238, %v2537, 0.0
      %2555 = vadd.xlane.f32.xlu0 %v2554
      %v2556 = vpop.xlane.xlu0 %2555
      %v2557 = vsel %vm2238, %v2539, 0.0
      %2558 = vadd.xlane.f32.xlu0 %v2557
      %v2559 = vpop.xlane.xlu0 %2558
      %v2560 = vsel %vm2238, %v2541, 0.0
      %2561 = vadd.xlane.f32.xlu0 %v2560
      %v2562 = vpop.xlane.xlu0 %2561
      %v2563 = vsel %vm2238, %v2543, 0.0
      %2564 = vadd.xlane.f32.xlu0 %v2563
      %v2565 = vpop.xlane.xlu0 %2564
      %v2566 = vsel %vm2238, %v2545, 0.0
      %2567 = vadd.xlane.f32.xlu0 %v2566
      %v2568 = vpop.xlane.xlu0 %2567
      %v2569 = vsel %vm2238, %v2547, 0.0
      %2570 = vadd.xlane.f32.xlu0 %v2569
      %v2571 = vpop.xlane.xlu0 %2570
      %v2572 = vrcp.pop %v2550
      %v2573 = vrcp.pop %v2553
      %v2574 = vrcp.pop %v2556
      %v2575 = vrcp.pop %v2559
      %v2576 = vrcp.pop %v2562
      %v2577 = vrcp.pop %v2565
      %v2578 = vrcp.pop %v2568
      %v2579 = vrcp.pop %v2571
      %v2580 = vmul.f32 %v2533, %v2572
      %v2581 = vmul.f32 %v2535, %v2573
      %v2582 = vmul.f32 %v2537, %v2574
      %v2583 = vmul.f32 %v2539, %v2575
      %v2584 = vmul.f32 %v2541, %v2576
      %v2585 = vmul.f32 %v2543, %v2577
      %v2586 = vmul.f32 %v2545, %v2578
      %v2587 = vmul.f32 %v2547, %v2579
      %v2588 = vpack.c.bf16 %v2581, %v2580
      %v2589 = vpack.c.bf16 %v2583, %v2582
      %v2590 = vpack.c.bf16 %v2585, %v2584
      %v2591 = vpack.c.bf16 %v2587, %v2586
      %2593 = vrot.lane.b32.xlu0 %v2419, 96
      %v2594 = vpop.permute.xlu0 %2593
      %v2596 = vsel %vm2238, %v2588, 0
      %v2599 = vsel %vm2238, %v2589, 0
      %v2602 = vsel %vm2238, %v2590, 0
      %v2605 = vsel %vm2238, %v2591, 0
      %v2608 = vsel %vm2346, %v2594, 0
      %2610 = vmatprep.subr.bf16.mxu0 0
      %2611 = vmatpush1.bf16.msra.mxu0 0
      %2612 = vmatprep.subr.bf16.mxu0 0
      %2613 = vmatpush1.bf16.msra.mxu0 0
      %2614 = vmatprep.subr.bf16.mxu0 0
      %2615 = vmatpush1.bf16.msra.mxu0 0
      %2616 = vmatprep.subr.bf16.mxu0 0
      %2617 = vmatpush1.bf16.msra.mxu0 0
      %2618 = vmatprep.subr.bf16.mxu0 0
      %2619 = vmatpush1.bf16.msra.mxu0 0
      %2620 = vmatprep.subr.bf16.mxu0 0
      %2621 = vmatpush1.bf16.msra.mxu0 0
      %2622 = vmatprep.subr.bf16.mxu0 0
      %2623 = vmatpush1.bf16.msra.mxu0 0
      %2624 = vmatprep.subr.bf16.mxu0 0
      %2625 = vmatpush1.bf16.msra.mxu0 %v2608
      %2626 = vmatprep.subr.bf16.mxu0 0
      %2627 = vmatpush2.bf16.msra.mxu0 0
      %2628 = vmatprep.subr.bf16.mxu0 0
      %2629 = vmatpush2.bf16.msra.mxu0 0
      %2630 = vmatprep.subr.bf16.mxu0 0
      %2631 = vmatpush2.bf16.msra.mxu0 0
      %2632 = vmatprep.subr.bf16.mxu0 0
      %2633 = vmatpush2.bf16.msra.mxu0 0
      %2634 = vmatprep.subr.bf16.mxu0 0
      %2635 = vmatpush2.bf16.msra.mxu0 0
      %2636 = vmatprep.subr.bf16.mxu0 0
      %2637 = vmatpush2.bf16.msra.mxu0 0
      %2638 = vmatprep.subr.bf16.mxu0 0
      %2639 = vmatpush2.bf16.msra.mxu0 0
      %2640 = vmatprep.subr.bf16.mxu0 0
      %2641 = vmatpush2.bf16.msra.mxu0 0
      %2642 = vmatprep.mubr.bf16.mxu0 0
      %2643 = vmatmul.mubr.bf16.gmra.mxu0 %v2596
      %v2644 = vpop.f32.mrf.mxu0
      %v2645 = vadd.f32 0.0, %v2644
      %v2646 = vpop.f32.mrf.mxu0
      %v2647 = vpop.f32.mrf.mxu0
      %v2648 = vadd.f32 0.0, %v2647
      %v2649 = vpop.f32.mrf.mxu0
      %2650 = vmatprep.mubr.bf16.mxu0 0
      %2651 = vmatmul.mubr.bf16.gmra.mxu0 %v2599
      %v2652 = vpop.f32.mrf.mxu0
      %v2653 = vadd.f32 0.0, %v2652
      %v2654 = vpop.f32.mrf.mxu0
      %v2655 = vpop.f32.mrf.mxu0
      %v2656 = vadd.f32 0.0, %v2655
      %v2657 = vpop.f32.mrf.mxu0
      %2658 = vmatprep.mubr.bf16.mxu0 0
      %2659 = vmatmul.mubr.bf16.gmra.mxu0 %v2602
      %v2660 = vpop.f32.mrf.mxu0
      %v2661 = vadd.f32 0.0, %v2660
      %v2662 = vpop.f32.mrf.mxu0
      %v2663 = vpop.f32.mrf.mxu0
      %v2664 = vadd.f32 0.0, %v2663
      %v2665 = vpop.f32.mrf.mxu0
      %2666 = vmatprep.mubr.bf16.mxu0 0
      %2667 = vmatmul.mubr.bf16.gmra.mxu0 %v2605
      %v2668 = vpop.f32.mrf.mxu0
      %v2669 = vadd.f32 0.0, %v2668
      %v2670 = vpop.f32.mrf.mxu0
      %v2671 = vpop.f32.mrf.mxu0
      %v2672 = vadd.f32 0.0, %v2671
      %v2673 = vpop.f32.mrf.mxu0
      %2674 = vdwg.mxu0
      %v2675 = vadd.f32 %v1304, %v2385
      %v2676 = vadd.f32 %v1305, %v2388
      %v2677 = vadd.f32 %v1306, %v2393
      %v2678 = vadd.f32 %v1307, %v2396
      %v2679 = vadd.f32 %v1308, %v2401
      %v2680 = vadd.f32 %v1309, %v2404
      %v2681 = vadd.f32 %v1310, %v2409
      %v2682 = vadd.f32 %v1311, %v2412
      %v2683 = vadd.f32 %v1312, %v2645
      %v2684 = vadd.f32 %v1313, %v2648
      %v2685 = vadd.f32 %v1314, %v2653
      %v2686 = vadd.f32 %v1315, %v2656
      %v2687 = vadd.f32 %v1316, %v2661
      %v2688 = vadd.f32 %v1317, %v2664
      %v2689 = vadd.f32 %v1318, %v2669
      %v2690 = vadd.f32 %v1319, %v2672
      %v2691 = vpack.c.bf16 %v2676, %v2675
      %v2692 = vpack.c.bf16 %v2678, %v2677
      %v2693 = vpack.c.bf16 %v2680, %v2679
      %v2694 = vpack.c.bf16 %v2682, %v2681
      %v2695 = vpack.c.bf16 %v2684, %v2683
      %v2696 = vpack.c.bf16 %v2686, %v2685
      %v2697 = vpack.c.bf16 %v2688, %v2687
      %v2698 = vpack.c.bf16 %v2690, %v2689
      %v2699 = vld [vmem:[%s10] sm:$0xff]
      %v2700 = vld [vmem:[%s10 + $0x8] sm:$0xff]
      %v2701 = vld [vmem:[%s10 + $0x10] sm:$0xff]
      %v2702 = vld [vmem:[%s10 + $0x18] sm:$0xff]
      %v2703 = vld [vmem:[%s11] sm:$0x3]
      %v2705 = vlaneseq
      %v2706 = vshrl.u32 %v2705, 7
      %v2707 = vsub.s32 0, %v2706
      %v2708 = vrot.slane %v2703, %v2707
      %v2709 = vlaneseq
      %v2710 = vshrl.u32 %v2709, 7
      %v2711 = vsub.s32 1, %v2710
      %v2712 = vrot.slane %v2703, %v2711
      %v2719 = vunpack.c.l.b16 %v2699
      %v2720 = vunpack.c.h.b16 %v2699
      %v2721 = vunpack.c.l.b16 %v2700
      %v2722 = vunpack.c.h.b16 %v2700
      %v2723 = vunpack.c.l.b16 %v2701
      %v2724 = vunpack.c.h.b16 %v2701
      %v2725 = vunpack.c.l.b16 %v2702
      %v2726 = vunpack.c.h.b16 %v2702
      %v2727 = vpack.c.b16 %v2721, %v2719
      %v2728 = vpack.c.b16 %v2722, %v2720
      %v2729 = vpack.c.b16 %v2725, %v2723
      %v2730 = vpack.c.b16 %v2726, %v2724
      %v2736 = vsel %vm609, %v2691, 0
      %v2739 = vsel %vm609, %v2692, 0
      %v2742 = vsel %vm609, %v2693, 0
      %v2745 = vsel %vm609, %v2694, 0
      %v2748 = vsel %vm609, %v2695, 0
      %v2751 = vsel %vm609, %v2696, 0
      %v2754 = vsel %vm609, %v2697, 0
      %v2757 = vsel %vm609, %v2698, 0
      %2759 = vmatprep.subr.bf16.mxu0 0
      %2760 = vmatpush1.bf16.msra.mxu0 0
      %2761 = vmatprep.subr.bf16.mxu0 0
      %2762 = vmatpush1.bf16.msra.mxu0 0
      %2763 = vmatprep.subr.bf16.mxu0 0
      %2764 = vmatpush1.bf16.msra.mxu0 0
      %2765 = vmatprep.subr.bf16.mxu0 0
      %2766 = vmatpush1.bf16.msra.mxu0 0
      %2767 = vmatprep.subr.bf16.mxu0 0
      %2768 = vmatpush1.bf16.msra.mxu0 0
      %2769 = vmatprep.subr.bf16.mxu0 0
      %2770 = vmatpush1.bf16.msra.mxu0 0
      %2771 = vmatprep.subr.bf16.mxu0 %v2730
      %2772 = vmatpush1.bf16.msra.mxu0 %v2729
      %2773 = vmatprep.subr.bf16.mxu0 %v2728
      %2774 = vmatpush1.bf16.msra.mxu0 %v2727
      %2775 = vmatprep.subr.bf16.mxu0 0
      %2776 = vmatpush2.bf16.msra.mxu0 0
      %2777 = vmatprep.subr.bf16.mxu0 0
      %2778 = vmatpush2.bf16.msra.mxu0 0
      %2779 = vmatprep.subr.bf16.mxu0 0
      %2780 = vmatpush2.bf16.msra.mxu0 0
      %2781 = vmatprep.subr.bf16.mxu0 0
      %2782 = vmatpush2.bf16.msra.mxu0 0
      %2783 = vmatprep.subr.bf16.mxu0 0
      %2784 = vmatpush2.bf16.msra.mxu0 0
      %2785 = vmatprep.subr.bf16.mxu0 0
      %2786 = vmatpush2.bf16.msra.mxu0 0
      %2787 = vmatprep.subr.bf16.mxu0 0
      %2788 = vmatpush2.bf16.msra.mxu0 0
      %2789 = vmatprep.subr.bf16.mxu0 0
      %2790 = vmatpush2.bf16.msra.mxu0 0
      %2791 = vmatprep.mubr.bf16.mxu0 0
      %2792 = vmatmul.mubr.bf16.gmra.mxu0 %v2736
      %v2793 = vpop.f32.mrf.mxu0
      %v2794 = vadd.f32 %v2708, %v2793
      %v2795 = vpop.f32.mrf.mxu0
      %v2796 = vadd.f32 %v2712, %v2795
      %v2797 = vpop.f32.mrf.mxu0
      %v2798 = vadd.f32 %v2708, %v2797
      %v2799 = vpop.f32.mrf.mxu0
      %v2800 = vadd.f32 %v2712, %v2799
      %2801 = vmatprep.mubr.bf16.mxu0 0
      %2802 = vmatmul.mubr.bf16.gmra.mxu0 %v2739
      %v2803 = vpop.f32.mrf.mxu0
      %v2804 = vadd.f32 %v2708, %v2803
      %v2805 = vpop.f32.mrf.mxu0
      %v2806 = vadd.f32 %v2712, %v2805
      %v2807 = vpop.f32.mrf.mxu0
      %v2808 = vadd.f32 %v2708, %v2807
      %v2809 = vpop.f32.mrf.mxu0
      %v2810 = vadd.f32 %v2712, %v2809
      %2811 = vmatprep.mubr.bf16.mxu0 0
      %2812 = vmatmul.mubr.bf16.gmra.mxu0 %v2742
      %v2813 = vpop.f32.mrf.mxu0
      %v2814 = vadd.f32 %v2708, %v2813
      %v2815 = vpop.f32.mrf.mxu0
      %v2816 = vadd.f32 %v2712, %v2815
      %v2817 = vpop.f32.mrf.mxu0
      %v2818 = vadd.f32 %v2708, %v2817
      %v2819 = vpop.f32.mrf.mxu0
      %v2820 = vadd.f32 %v2712, %v2819
      %2821 = vmatprep.mubr.bf16.mxu0 0
      %2822 = vmatmul.mubr.bf16.gmra.mxu0 %v2745
      %v2823 = vpop.f32.mrf.mxu0
      %v2824 = vadd.f32 %v2708, %v2823
      %v2825 = vpop.f32.mrf.mxu0
      %v2826 = vadd.f32 %v2712, %v2825
      %v2827 = vpop.f32.mrf.mxu0
      %v2828 = vadd.f32 %v2708, %v2827
      %v2829 = vpop.f32.mrf.mxu0
      %v2830 = vadd.f32 %v2712, %v2829
      %2831 = vmatprep.mubr.bf16.mxu0 0
      %2832 = vmatmul.mubr.bf16.gmra.mxu0 %v2748
      %v2833 = vpop.f32.mrf.mxu0
      %v2834 = vadd.f32 %v2708, %v2833
      %v2835 = vpop.f32.mrf.mxu0
      %v2836 = vadd.f32 %v2712, %v2835
      %v2837 = vpop.f32.mrf.mxu0
      %v2838 = vadd.f32 %v2708, %v2837
      %v2839 = vpop.f32.mrf.mxu0
      %v2840 = vadd.f32 %v2712, %v2839
      %2841 = vmatprep.mubr.bf16.mxu0 0
      %2842 = vmatmul.mubr.bf16.gmra.mxu0 %v2751
      %v2843 = vpop.f32.mrf.mxu0
      %v2844 = vadd.f32 %v2708, %v2843
      %v2845 = vpop.f32.mrf.mxu0
      %v2846 = vadd.f32 %v2712, %v2845
      %v2847 = vpop.f32.mrf.mxu0
      %v2848 = vadd.f32 %v2708, %v2847
      %v2849 = vpop.f32.mrf.mxu0
      %v2850 = vadd.f32 %v2712, %v2849
      %2851 = vmatprep.mubr.bf16.mxu0 0
      %2852 = vmatmul.mubr.bf16.gmra.mxu0 %v2754
      %v2853 = vpop.f32.mrf.mxu0
      %v2854 = vadd.f32 %v2708, %v2853
      %v2855 = vpop.f32.mrf.mxu0
      %v2856 = vadd.f32 %v2712, %v2855
      %v2857 = vpop.f32.mrf.mxu0
      %v2858 = vadd.f32 %v2708, %v2857
      %v2859 = vpop.f32.mrf.mxu0
      %v2860 = vadd.f32 %v2712, %v2859
      %2861 = vmatprep.mubr.bf16.mxu0 0
      %2862 = vmatmul.mubr.bf16.gmra.mxu0 %v2757
      %v2863 = vpop.f32.mrf.mxu0
      %v2864 = vadd.f32 %v2708, %v2863
      %v2865 = vpop.f32.mrf.mxu0
      %v2866 = vadd.f32 %v2712, %v2865
      %v2867 = vpop.f32.mrf.mxu0
      %v2868 = vadd.f32 %v2708, %v2867
      %v2869 = vpop.f32.mrf.mxu0
      %v2870 = vadd.f32 %v2712, %v2869
      %2871 = vdwg.mxu0
      %v2872 = vmul.f32 %v2794, 0.5
      %v2873 = vmul.f32 %v2796, 0.5
      %v2874 = vmul.f32 %v2798, 0.5
      %v2875 = vmul.f32 %v2800, 0.5
      %v2876 = vmul.f32 %v2804, 0.5
      %v2877 = vmul.f32 %v2806, 0.5
      %v2878 = vmul.f32 %v2808, 0.5
      %v2879 = vmul.f32 %v2810, 0.5
      %v2880 = vmul.f32 %v2814, 0.5
      %v2881 = vmul.f32 %v2816, 0.5
      %v2882 = vmul.f32 %v2818, 0.5
      %v2883 = vmul.f32 %v2820, 0.5
      %v2884 = vmul.f32 %v2824, 0.5
      %v2885 = vmul.f32 %v2826, 0.5
      %v2886 = vmul.f32 %v2828, 0.5
      %v2887 = vmul.f32 %v2830, 0.5
      %v2888 = vmul.f32 %v2834, 0.5
      %v2889 = vmul.f32 %v2836, 0.5
      %v2890 = vmul.f32 %v2838, 0.5
      %v2891 = vmul.f32 %v2840, 0.5
      %v2892 = vmul.f32 %v2844, 0.5
      %v2893 = vmul.f32 %v2846, 0.5
      %v2894 = vmul.f32 %v2848, 0.5
      %v2895 = vmul.f32 %v2850, 0.5
      %v2896 = vmul.f32 %v2854, 0.5
      %v2897 = vmul.f32 %v2856, 0.5
      %v2898 = vmul.f32 %v2858, 0.5
      %v2899 = vmul.f32 %v2860, 0.5
      %v2900 = vmul.f32 %v2864, 0.5
      %v2901 = vmul.f32 %v2866, 0.5
      %v2902 = vmul.f32 %v2868, 0.5
      %v2903 = vmul.f32 %v2870, 0.5
      %v2904 = vmul.f32 %v2794, 0.70710677
      %v2905 = vmul.f32 %v2796, 0.70710677
      %v2906 = vmul.f32 %v2798, 0.70710677
      %v2907 = vmul.f32 %v2800, 0.70710677
      %v2908 = vmul.f32 %v2804, 0.70710677
      %v2909 = vmul.f32 %v2806, 0.70710677
      %v2910 = vmul.f32 %v2808, 0.70710677
      %v2911 = vmul.f32 %v2810, 0.70710677
      %v2912 = vmul.f32 %v2814, 0.70710677
      %v2913 = vmul.f32 %v2816, 0.70710677
      %v2914 = vmul.f32 %v2818, 0.70710677
      %v2915 = vmul.f32 %v2820, 0.70710677
      %v2916 = vmul.f32 %v2824, 0.70710677
      %v2917 = vmul.f32 %v2826, 0.70710677
      %v2918 = vmul.f32 %v2828, 0.70710677
      %v2919 = vmul.f32 %v2830, 0.70710677
      %v2920 = vmul.f32 %v2834, 0.70710677
      %v2921 = vmul.f32 %v2836, 0.70710677
      %v2922 = vmul.f32 %v2838, 0.70710677
      %v2923 = vmul.f32 %v2840, 0.70710677
      %v2924 = vmul.f32 %v2844, 0.70710677
      %v2925 = vmul.f32 %v2846, 0.70710677
      %v2926 = vmul.f32 %v2848, 0.70710677
      %v2927 = vmul.f32 %v2850, 0.70710677
      %v2928 = vmul.f32 %v2854, 0.70710677
      %v2929 = vmul.f32 %v2856, 0.70710677
      %v2930 = vmul.f32 %v2858, 0.70710677
      %v2931 = vmul.f32 %v2860, 0.70710677
      %v2932 = vmul.f32 %v2864, 0.70710677
      %v2933 = vmul.f32 %v2866, 0.70710677
      %v2934 = vmul.f32 %v2868, 0.70710677
      %v2935 = vmul.f32 %v2870, 0.70710677
      %v2936 = verf.f32.pop %v2904
      %v2937 = verf.f32.pop %v2905
      %v2938 = verf.f32.pop %v2906
      %v2939 = verf.f32.pop %v2907
      %v2940 = verf.f32.pop %v2908
      %v2941 = verf.f32.pop %v2909
      %v2942 = verf.f32.pop %v2910
      %v2943 = verf.f32.pop %v2911
      %v2944 = verf.f32.pop %v2912
      %v2945 = verf.f32.pop %v2913
      %v2946 = verf.f32.pop %v2914
      %v2947 = verf.f32.pop %v2915
      %v2948 = verf.f32.pop %v2916
      %v2949 = verf.f32.pop %v2917
      %v2950 = verf.f32.pop %v2918
      %v2951 = verf.f32.pop %v2919
      %v2952 = verf.f32.pop %v2920
      %v2953 = verf.f32.pop %v2921
      %v2954 = verf.f32.pop %v2922
      %v2955 = verf.f32.pop %v2923
      %v2956 = verf.f32.pop %v2924
      %v2957 = verf.f32.pop %v2925
      %v2958 = verf.f32.pop %v2926
      %v2959 = verf.f32.pop %v2927
      %v2960 = verf.f32.pop %v2928
      %v2961 = verf.f32.pop %v2929
      %v2962 = verf.f32.pop %v2930
      %v2963 = verf.f32.pop %v2931
      %v2964 = verf.f32.pop %v2932
      %v2965 = verf.f32.pop %v2933
      %v2966 = verf.f32.pop %v2934
      %v2967 = verf.f32.pop %v2935
      %v2968 = vadd.f32 %v2936, 1.0
      %v2969 = vadd.f32 %v2937, 1.0
      %v2970 = vadd.f32 %v2938, 1.0
      %v2971 = vadd.f32 %v2939, 1.0
      %v2972 = vadd.f32 %v2940, 1.0
      %v2973 = vadd.f32 %v2941, 1.0
      %v2974 = vadd.f32 %v2942, 1.0
      %v2975 = vadd.f32 %v2943, 1.0
      %v2976 = vadd.f32 %v2944, 1.0
      %v2977 = vadd.f32 %v2945, 1.0
      %v2978 = vadd.f32 %v2946, 1.0
      %v2979 = vadd.f32 %v2947, 1.0
      %v2980 = vadd.f32 %v2948, 1.0
      %v2981 = vadd.f32 %v2949, 1.0
      %v2982 = vadd.f32 %v2950, 1.0
      %v2983 = vadd.f32 %v2951, 1.0
      %v2984 = vadd.f32 %v2952, 1.0
      %v2985 = vadd.f32 %v2953, 1.0
      %v2986 = vadd.f32 %v2954, 1.0
      %v2987 = vadd.f32 %v2955, 1.0
      %v2988 = vadd.f32 %v2956, 1.0
      %v2989 = vadd.f32 %v2957, 1.0
      %v2990 = vadd.f32 %v2958, 1.0
      %v2991 = vadd.f32 %v2959, 1.0
      %v2992 = vadd.f32 %v2960, 1.0
      %v2993 = vadd.f32 %v2961, 1.0
      %v2994 = vadd.f32 %v2962, 1.0
      %v2995 = vadd.f32 %v2963, 1.0
      %v2996 = vadd.f32 %v2964, 1.0
      %v2997 = vadd.f32 %v2965, 1.0
      %v2998 = vadd.f32 %v2966, 1.0
      %v2999 = vadd.f32 %v2967, 1.0
      %v3000 = vmul.f32 %v2872, %v2968
      %v3001 = vmul.f32 %v2873, %v2969
      %v3002 = vmul.f32 %v2874, %v2970
      %v3003 = vmul.f32 %v2875, %v2971
      %v3004 = vmul.f32 %v2876, %v2972
      %v3005 = vmul.f32 %v2877, %v2973
      %v3006 = vmul.f32 %v2878, %v2974
      %v3007 = vmul.f32 %v2879, %v2975
      %v3008 = vmul.f32 %v2880, %v2976
      %v3009 = vmul.f32 %v2881, %v2977
      %v3010 = vmul.f32 %v2882, %v2978
      %v3011 = vmul.f32 %v2883, %v2979
      %v3012 = vmul.f32 %v2884, %v2980
      %v3013 = vmul.f32 %v2885, %v2981
      %v3014 = vmul.f32 %v2886, %v2982
      %v3015 = vmul.f32 %v2887, %v2983
      %v3016 = vmul.f32 %v2888, %v2984
      %v3017 = vmul.f32 %v2889, %v2985
      %v3018 = vmul.f32 %v2890, %v2986
      %v3019 = vmul.f32 %v2891, %v2987
      %v3020 = vmul.f32 %v2892, %v2988
      %v3021 = vmul.f32 %v2893, %v2989
      %v3022 = vmul.f32 %v2894, %v2990
      %v3023 = vmul.f32 %v2895, %v2991
      %v3024 = vmul.f32 %v2896, %v2992
      %v3025 = vmul.f32 %v2897, %v2993
      %v3026 = vmul.f32 %v2898, %v2994
      %v3027 = vmul.f32 %v2899, %v2995
      %v3028 = vmul.f32 %v2900, %v2996
      %v3029 = vmul.f32 %v2901, %v2997
      %v3030 = vmul.f32 %v2902, %v2998
      %v3031 = vmul.f32 %v2903, %v2999
      %v3032 = vpack.c.bf16 %v3002, %v3000
      %v3033 = vpack.c.bf16 %v3003, %v3001
      %v3034 = vpack.c.bf16 %v3006, %v3004
      %v3035 = vpack.c.bf16 %v3007, %v3005
      %v3036 = vpack.c.bf16 %v3010, %v3008
      %v3037 = vpack.c.bf16 %v3011, %v3009
      %v3038 = vpack.c.bf16 %v3014, %v3012
      %v3039 = vpack.c.bf16 %v3015, %v3013
      %v3040 = vpack.c.bf16 %v3018, %v3016
      %v3041 = vpack.c.bf16 %v3019, %v3017
      %v3042 = vpack.c.bf16 %v3022, %v3020
      %v3043 = vpack.c.bf16 %v3023, %v3021
      %v3044 = vpack.c.bf16 %v3026, %v3024
      %v3045 = vpack.c.bf16 %v3027, %v3025
      %v3046 = vpack.c.bf16 %v3030, %v3028
      %v3047 = vpack.c.bf16 %v3031, %v3029
      %v3048 = vld [vmem:[%s12] sm:$0xf]
      %v3049 = vld [vmem:[%s12 + $0x4] sm:$0xf]
      %v3050 = vld [vmem:[%s12 + $0x8] sm:$0xf]
      %v3051 = vld [vmem:[%s12 + $0xc] sm:$0xf]
      %v3052 = vld [vmem:[%s12 + $0x10] sm:$0xf]
      %v3053 = vld [vmem:[%s12 + $0x14] sm:$0xf]
      %v3054 = vld [vmem:[%s12 + $0x18] sm:$0xf]
      %v3055 = vld [vmem:[%s12 + $0x1c] sm:$0xf]
      %v3056 = vld [vmem:[%s12 + $0x20] sm:$0xf]
      %v3057 = vld [vmem:[%s12 + $0x24] sm:$0xf]
      %v3058 = vld [vmem:[%s12 + $0x28] sm:$0xf]
      %v3059 = vld [vmem:[%s12 + $0x2c] sm:$0xf]
      %v3060 = vld [vmem:[%s12 + $0x30] sm:$0xf]
      %v3061 = vld [vmem:[%s12 + $0x34] sm:$0xf]
      %v3062 = vld [vmem:[%s12 + $0x38] sm:$0xf]
      %v3063 = vld [vmem:[%s12 + $0x3c] sm:$0xf]
      %v3064 = vld [vmem:[%s12 + $0x40] sm:$0xf]
      %v3065 = vld [vmem:[%s12 + $0x44] sm:$0xf]
      %v3066 = vld [vmem:[%s12 + $0x48] sm:$0xf]
      %v3067 = vld [vmem:[%s12 + $0x4c] sm:$0xf]
      %v3068 = vld [vmem:[%s12 + $0x50] sm:$0xf]
      %v3069 = vld [vmem:[%s12 + $0x54] sm:$0xf]
      %v3070 = vld [vmem:[%s12 + $0x58] sm:$0xf]
      %v3071 = vld [vmem:[%s12 + $0x5c] sm:$0xf]
      %v3072 = vld [vmem:[%s12 + $0x60] sm:$0xf]
      %v3073 = vld [vmem:[%s12 + $0x64] sm:$0xf]
      %v3074 = vld [vmem:[%s12 + $0x68] sm:$0xf]
      %v3075 = vld [vmem:[%s12 + $0x6c] sm:$0xf]
      %v3076 = vld [vmem:[%s12 + $0x70] sm:$0xf]
      %v3077 = vld [vmem:[%s12 + $0x74] sm:$0xf]
      %v3078 = vld [vmem:[%s12 + $0x78] sm:$0xf]
      %v3079 = vld [vmem:[%s12 + $0x7c] sm:$0xf]
      %v3080 = vld [vmem:[%s13] sm:$0x1]
      %v3082 = vlaneseq
      %v3083 = vshrl.u32 %v3082, 7
      %v3084 = vsub.s32 0, %v3083
      %v3085 = vrot.slane %v3080, %v3084
      %v3119 = vunpack.c.l.b16 %v3048
      %v3120 = vunpack.c.l.b16 %v3049
      %v3121 = vunpack.c.l.b16 %v3050
      %v3122 = vunpack.c.l.b16 %v3051
      %v3123 = vunpack.c.l.b16 %v3052
      %v3124 = vunpack.c.l.b16 %v3053
      %v3125 = vunpack.c.l.b16 %v3054
      %v3126 = vunpack.c.l.b16 %v3055
      %v3127 = vunpack.c.l.b16 %v3056
      %v3128 = vunpack.c.l.b16 %v3057
      %v3129 = vunpack.c.l.b16 %v3058
      %v3130 = vunpack.c.l.b16 %v3059
      %v3131 = vunpack.c.l.b16 %v3060
      %v3132 = vunpack.c.l.b16 %v3061
      %v3133 = vunpack.c.l.b16 %v3062
      %v3134 = vunpack.c.l.b16 %v3063
      %v3135 = vunpack.c.l.b16 %v3064
      %v3136 = vunpack.c.l.b16 %v3065
      %v3137 = vunpack.c.l.b16 %v3066
      %v3138 = vunpack.c.l.b16 %v3067
      %v3139 = vunpack.c.l.b16 %v3068
      %v3140 = vunpack.c.l.b16 %v3069
      %v3141 = vunpack.c.l.b16 %v3070
      %v3142 = vunpack.c.l.b16 %v3071
      %v3143 = vunpack.c.l.b16 %v3072
      %v3144 = vunpack.c.l.b16 %v3073
      %v3145 = vunpack.c.l.b16 %v3074
      %v3146 = vunpack.c.l.b16 %v3075
      %v3147 = vunpack.c.l.b16 %v3076
      %v3148 = vunpack.c.l.b16 %v3077
      %v3149 = vunpack.c.l.b16 %v3078
      %v3150 = vunpack.c.l.b16 %v3079
      %v3151 = vpack.c.b16 %v3120, %v3119
      %v3152 = vpack.c.b16 %v3122, %v3121
      %v3153 = vpack.c.b16 %v3124, %v3123
      %v3154 = vpack.c.b16 %v3126, %v3125
      %v3155 = vpack.c.b16 %v3128, %v3127
      %v3156 = vpack.c.b16 %v3130, %v3129
      %v3157 = vpack.c.b16 %v3132, %v3131
      %v3158 = vpack.c.b16 %v3134, %v3133
      %v3159 = vpack.c.b16 %v3136, %v3135
      %v3160 = vpack.c.b16 %v3138, %v3137
      %v3161 = vpack.c.b16 %v3140, %v3139
      %v3162 = vpack.c.b16 %v3142, %v3141
      %v3163 = vpack.c.b16 %v3144, %v3143
      %v3164 = vpack.c.b16 %v3146, %v3145
      %v3165 = vpack.c.b16 %v3148, %v3147
      %v3166 = vpack.c.b16 %v3150, %v3149
      %3183 = vmatprep.subr.bf16.mxu0 0
      %3184 = vmatpush1.bf16.msra.mxu0 %v3158
      %3185 = vmatprep.subr.bf16.mxu0 0
      %3186 = vmatpush1.bf16.msra.mxu0 %v3157
      %3187 = vmatprep.subr.bf16.mxu0 0
      %3188 = vmatpush1.bf16.msra.mxu0 %v3156
      %3189 = vmatprep.subr.bf16.mxu0 0
      %3190 = vmatpush1.bf16.msra.mxu0 %v3155
      %3191 = vmatprep.subr.bf16.mxu0 0
      %3192 = vmatpush1.bf16.msra.mxu0 %v3154
      %3193 = vmatprep.subr.bf16.mxu0 0
      %3194 = vmatpush1.bf16.msra.mxu0 %v3153
      %3195 = vmatprep.subr.bf16.mxu0 0
      %3196 = vmatpush1.bf16.msra.mxu0 %v3152
      %3197 = vmatprep.subr.bf16.mxu0 0
      %3198 = vmatpush1.bf16.msra.mxu0 %v3151
      %3199 = vmatprep.subr.bf16.mxu0 0
      %3200 = vmatpush2.bf16.msra.mxu0 %v3166
      %3201 = vmatprep.subr.bf16.mxu0 0
      %3202 = vmatpush2.bf16.msra.mxu0 %v3165
      %3203 = vmatprep.subr.bf16.mxu0 0
      %3204 = vmatpush2.bf16.msra.mxu0 %v3164
      %3205 = vmatprep.subr.bf16.mxu0 0
      %3206 = vmatpush2.bf16.msra.mxu0 %v3163
      %3207 = vmatprep.subr.bf16.mxu0 0
      %3208 = vmatpush2.bf16.msra.mxu0 %v3162
      %3209 = vmatprep.subr.bf16.mxu0 0
      %3210 = vmatpush2.bf16.msra.mxu0 %v3161
      %3211 = vmatprep.subr.bf16.mxu0 0
      %3212 = vmatpush2.bf16.msra.mxu0 %v3160
      %3213 = vmatprep.subr.bf16.mxu0 0
      %3214 = vmatpush2.bf16.msra.mxu0 %v3159
      %3215 = vmatprep.mubr.bf16.mxu0 %v3033
      %3216 = vmatmul.mubr.bf16.gmra.mxu0 %v3032
      %v3217 = vpop.f32.mrf.mxu0
      %v3218 = vadd.f32 %v3085, %v3217
      %v3219 = vpop.f32.mrf.mxu0
      %v3220 = vpop.f32.mrf.mxu0
      %v3221 = vadd.f32 %v3085, %v3220
      %v3222 = vpop.f32.mrf.mxu0
      %3223 = vmatprep.mubr.bf16.mxu0 %v3035
      %3224 = vmatmul.mubr.bf16.gmra.mxu0 %v3034
      %v3225 = vpop.f32.mrf.mxu0
      %v3226 = vadd.f32 %v3085, %v3225
      %v3227 = vpop.f32.mrf.mxu0
      %v3228 = vpop.f32.mrf.mxu0
      %v3229 = vadd.f32 %v3085, %v3228
      %v3230 = vpop.f32.mrf.mxu0
      %3231 = vmatprep.mubr.bf16.mxu0 %v3037
      %3232 = vmatmul.mubr.bf16.gmra.mxu0 %v3036
      %v3233 = vpop.f32.mrf.mxu0
      %v3234 = vadd.f32 %v3085, %v3233
      %v3235 = vpop.f32.mrf.mxu0
      %v3236 = vpop.f32.mrf.mxu0
      %v3237 = vadd.f32 %v3085, %v3236
      %v3238 = vpop.f32.mrf.mxu0
      %3239 = vmatprep.mubr.bf16.mxu0 %v3039
      %3240 = vmatmul.mubr.bf16.gmra.mxu0 %v3038
      %v3241 = vpop.f32.mrf.mxu0
      %v3242 = vadd.f32 %v3085, %v3241
      %v3243 = vpop.f32.mrf.mxu0
      %v3244 = vpop.f32.mrf.mxu0
      %v3245 = vadd.f32 %v3085, %v3244
      %v3246 = vpop.f32.mrf.mxu0
      %3247 = vmatprep.mubr.bf16.mxu0 %v3041
      %3248 = vmatmul.mubr.bf16.gmra.mxu0 %v3040
      %v3249 = vpop.f32.mrf.mxu0
      %v3250 = vadd.f32 %v3085, %v3249
      %v3251 = vpop.f32.mrf.mxu0
      %v3252 = vpop.f32.mrf.mxu0
      %v3253 = vadd.f32 %v3085, %v3252
      %v3254 = vpop.f32.mrf.mxu0
      %3255 = vmatprep.mubr.bf16.mxu0 %v3043
      %3256 = vmatmul.mubr.bf16.gmra.mxu0 %v3042
      %v3257 = vpop.f32.mrf.mxu0
      %v3258 = vadd.f32 %v3085, %v3257
      %v3259 = vpop.f32.mrf.mxu0
      %v3260 = vpop.f32.mrf.mxu0
      %v3261 = vadd.f32 %v3085, %v3260
      %v3262 = vpop.f32.mrf.mxu0
      %3263 = vmatprep.mubr.bf16.mxu0 %v3045
      %3264 = vmatmul.mubr.bf16.gmra.mxu0 %v3044
      %v3265 = vpop.f32.mrf.mxu0
      %v3266 = vadd.f32 %v3085, %v3265
      %v3267 = vpop.f32.mrf.mxu0
      %v3268 = vpop.f32.mrf.mxu0
      %v3269 = vadd.f32 %v3085, %v3268
      %v3270 = vpop.f32.mrf.mxu0
      %3271 = vmatprep.mubr.bf16.mxu0 %v3047
      %3272 = vmatmul.mubr.bf16.gmra.mxu0 %v3046
      %v3273 = vpop.f32.mrf.mxu0
      %v3274 = vadd.f32 %v3085, %v3273
      %v3275 = vpop.f32.mrf.mxu0
      %v3276 = vpop.f32.mrf.mxu0
      %v3277 = vadd.f32 %v3085, %v3276
      %v3278 = vpop.f32.mrf.mxu0
      %3279 = vdwg.mxu0
      %v3280 = vadd.f32 %v3218, %v2675
      %v3281 = vadd.f32 %v3221, %v2676
      %v3282 = vadd.f32 %v3226, %v2677
      %v3283 = vadd.f32 %v3229, %v2678
      %v3284 = vadd.f32 %v3234, %v2679
      %v3285 = vadd.f32 %v3237, %v2680
      %v3286 = vadd.f32 %v3242, %v2681
      %v3287 = vadd.f32 %v3245, %v2682
      %v3288 = vadd.f32 %v3250, %v2683
      %v3289 = vadd.f32 %v3253, %v2684
      %v3290 = vadd.f32 %v3258, %v2685
      %v3291 = vadd.f32 %v3261, %v2686
      %v3292 = vadd.f32 %v3266, %v2687
      %v3293 = vadd.f32 %v3269, %v2688
      %v3294 = vadd.f32 %v3274, %v2689
      %v3295 = vadd.f32 %v3277, %v2690
      %3296 = vst.msk [vmem:[#allocation2] sm:$0xff] %vm609, %v3280
      %3297 = vst.msk [vmem:[#allocation2 + $0x8] sm:$0xff] %vm609, %v3281
      %3298 = vst.msk [vmem:[#allocation2 + $0x10] sm:$0xff] %vm609, %v3282
      %3299 = vst.msk [vmem:[#allocation2 + $0x18] sm:$0xff] %vm609, %v3283
      %3300 = vst.msk [vmem:[#allocation2 + $0x20] sm:$0xff] %vm609, %v3284
      %3301 = vst.msk [vmem:[#allocation2 + $0x28] sm:$0xff] %vm609, %v3285
      %3302 = vst.msk [vmem:[#allocation2 + $0x30] sm:$0xff] %vm609, %v3286
      %3303 = vst.msk [vmem:[#allocation2 + $0x38] sm:$0xff] %vm609, %v3287
      %3304 = vst.msk [vmem:[#allocation2 + $0x40] sm:$0xff] %vm609, %v3288
      %3305 = vst.msk [vmem:[#allocation2 + $0x48] sm:$0xff] %vm609, %v3289
      %3306 = vst.msk [vmem:[#allocation2 + $0x50] sm:$0xff] %vm609, %v3290
      %3307 = vst.msk [vmem:[#allocation2 + $0x58] sm:$0xff] %vm609, %v3291
      %3308 = vst.msk [vmem:[#allocation2 + $0x60] sm:$0xff] %vm609, %v3292
      %3309 = vst.msk [vmem:[#allocation2 + $0x68] sm:$0xff] %vm609, %v3293
      %3310 = vst.msk [vmem:[#allocation2 + $0x70] sm:$0xff] %vm609, %v3294
      %3311 = vst.msk [vmem:[#allocation2 + $0x78] sm:$0xff] %vm609, %v3295
      %v3312 = vld [vmem:[%s14] sm:$0xf]
      %v3313 = vld [vmem:[%s14 + $0x4] sm:$0xf]
      %v3314 = vld [vmem:[%s14 + $0x8] sm:$0xf]
      %v3315 = vld [vmem:[%s14 + $0xc] sm:$0xf]
      %v3316 = vld [vmem:[%s15] sm:$0xff]
      %v3317 = vld [vmem:[%s15 + $0x8] sm:$0xff]
      %v3318 = vld [vmem:[%s15 + $0x10] sm:$0xff]
      %v3319 = vld [vmem:[%s15 + $0x18] sm:$0xff]
      %v3320 = vld [vmem:[#allocation2] ss:$2 sm:$0xff]
      %s3321 = scalar_lea.vmem [#allocation2], 16
      %v3322 = vld [vmem:[%s3321] ss:$2 sm:$0xff]
      %s3323 = scalar_lea.vmem [#allocation2], 32
      %v3324 = vld [vmem:[%s3323] ss:$2 sm:$0xff]
      %s3325 = scalar_lea.vmem [#allocation2], 48
      %v3326 = vld [vmem:[%s3325] ss:$2 sm:$0xff]
      %v3327 = vpack.c.bf16 %v3322, %v3320
      %v3328 = vpack.c.bf16 %v3326, %v3324
      %3330 = vset.pattern.permute.xlu0 0
      %3331 = vperm.xlu0 %3330, %v3316
      %v3332 = vpop.permute.xlu0 %3331
      %3335 = vset.pattern.permute.xlu0 0
      %3336 = vperm.xlu0 %3335, %v3317
      %v3337 = vpop.permute.xlu0 %3336
      %3340 = vset.pattern.permute.xlu0 0
      %3341 = vperm.xlu0 %3340, %v3318
      %v3342 = vpop.permute.xlu0 %3341
      %3345 = vset.pattern.permute.xlu0 0
      %3346 = vperm.xlu0 %3345, %v3319
      %v3347 = vpop.permute.xlu0 %3346
      %v3353 = vunpack.c.l.b16 %v3312
      %v3354 = vunpack.c.l.b16 %v3313
      %v3355 = vunpack.c.l.b16 %v3314
      %v3356 = vunpack.c.l.b16 %v3315
      %v3357 = vpack.c.b16 %v3354, %v3353
      %v3358 = vpack.c.b16 %v3356, %v3355
      %v3360 = vsel %vm609, %v3357, 0
      %v3363 = vsel %vm609, %v3358, 0
      %3365 = vmatprep.subr.bf16.mxu0 0
      %3366 = vmatpush1.bf16.msra.mxu0 0
      %3367 = vmatprep.subr.bf16.mxu0 0
      %3368 = vmatpush1.bf16.msra.mxu0 0
      %3369 = vmatprep.subr.bf16.mxu0 0
      %3370 = vmatpush1.bf16.msra.mxu0 0
      %3371 = vmatprep.subr.bf16.mxu0 0
      %3372 = vmatpush1.bf16.msra.mxu0 0
      %3373 = vmatprep.subr.bf16.mxu0 0
      %3374 = vmatpush1.bf16.msra.mxu0 0
      %3375 = vmatprep.subr.bf16.mxu0 0
      %3376 = vmatpush1.bf16.msra.mxu0 0
      %3377 = vmatprep.subr.bf16.mxu0 0
      %3378 = vmatpush1.bf16.msra.mxu0 %v3328
      %3379 = vmatprep.subr.bf16.mxu0 0
      %3380 = vmatpush1.bf16.msra.mxu0 %v3327
      %3381 = vmatprep.subr.bf16.mxu0 0
      %3382 = vmatpush2.bf16.msra.mxu0 0
      %3383 = vmatprep.subr.bf16.mxu0 0
      %3384 = vmatpush2.bf16.msra.mxu0 0
      %3385 = vmatprep.subr.bf16.mxu0 0
      %3386 = vmatpush2.bf16.msra.mxu0 0
      %3387 = vmatprep.subr.bf16.mxu0 0
      %3388 = vmatpush2.bf16.msra.mxu0 0
      %3389 = vmatprep.subr.bf16.mxu0 0
      %3390 = vmatpush2.bf16.msra.mxu0 0
      %3391 = vmatprep.subr.bf16.mxu0 0
      %3392 = vmatpush2.bf16.msra.mxu0 0
      %3393 = vmatprep.subr.bf16.mxu0 0
      %3394 = vmatpush2.bf16.msra.mxu0 0
      %3395 = vmatprep.subr.bf16.mxu0 0
      %3396 = vmatpush2.bf16.msra.mxu0 0
      %3397 = vmatprep.mubr.bf16.mxu0 0
      %3398 = vmatmul.mubr.bf16.gmra.mxu0 %v3360
      %v3399 = vpop.f32.mrf.mxu0
      %v3400 = vadd.f32 %v3332, %v3399
      %v3401 = vpop.f32.mrf.mxu0
      %v3402 = vpop.f32.mrf.mxu0
      %v3403 = vadd.f32 %v3337, %v3402
      %v3404 = vpop.f32.mrf.mxu0
      %3405 = vmatprep.mubr.bf16.mxu0 0
      %3406 = vmatmul.mubr.bf16.gmra.mxu0 %v3363
      %v3407 = vpop.f32.mrf.mxu0
      %v3408 = vadd.f32 %v3342, %v3407
      %v3409 = vpop.f32.mrf.mxu0
      %v3410 = vpop.f32.mrf.mxu0
      %v3411 = vadd.f32 %v3347, %v3410
      %v3412 = vpop.f32.mrf.mxu0
      %3413 = vdwg.mxu0
      %3414 = vst.msk [vmem:[%s548] sm:$0xff] %vm609, %v3400
      %3415 = vst.msk [vmem:[%s548 + $0x8] sm:$0xff] %vm609, %v3403
      %3416 = vst.msk [vmem:[%s548 + $0x10] sm:$0xff] %vm609, %v3408
      %3417 = vst.msk [vmem:[%s548 + $0x18] sm:$0xff] %vm609, %v3411
      %s3418 = scalar_lea.vmem [#allocation2], 1
      %v3419 = vld [vmem:[%s3418] ss:$2 sm:$0xff]
      %s3420 = scalar_lea.vmem [#allocation2], 17
      %v3421 = vld [vmem:[%s3420] ss:$2 sm:$0xff]
      %s3422 = scalar_lea.vmem [#allocation2], 33
      %v3423 = vld [vmem:[%s3422] ss:$2 sm:$0xff]
      %s3424 = scalar_lea.vmem [#allocation2], 49
      %v3425 = vld [vmem:[%s3424] ss:$2 sm:$0xff]
      %v3426 = vpack.c.bf16 %v3421, %v3419
      %v3427 = vpack.c.bf16 %v3425, %v3423
      %3428 = vmatprep.subr.bf16.mxu0 0
      %3429 = vmatpush1.bf16.msra.mxu0 0
      %3430 = vmatprep.subr.bf16.mxu0 0
      %3431 = vmatpush1.bf16.msra.mxu0 0
      %3432 = vmatprep.subr.bf16.mxu0 0
      %3433 = vmatpush1.bf16.msra.mxu0 0
      %3434 = vmatprep.subr.bf16.mxu0 0
      %3435 = vmatpush1.bf16.msra.mxu0 0
      %3436 = vmatprep.subr.bf16.mxu0 0
      %3437 = vmatpush1.bf16.msra.mxu0 0
      %3438 = vmatprep.subr.bf16.mxu0 0
      %3439 = vmatpush1.bf16.msra.mxu0 0
      %3440 = vmatprep.subr.bf16.mxu0 0
      %3441 = vmatpush1.bf16.msra.mxu0 %v3427
      %3442 = vmatprep.subr.bf16.mxu0 0
      %3443 = vmatpush1.bf16.msra.mxu0 %v3426
      %3444 = vmatprep.subr.bf16.mxu0 0
      %3445 = vmatpush2.bf16.msra.mxu0 0
      %3446 = vmatprep.subr.bf16.mxu0 0
      %3447 = vmatpush2.bf16.msra.mxu0 0
      %3448 = vmatprep.subr.bf16.mxu0 0
      %3449 = vmatpush2.bf16.msra.mxu0 0
      %3450 = vmatprep.subr.bf16.mxu0 0
      %3451 = vmatpush2.bf16.msra.mxu0 0
      %3452 = vmatprep.subr.bf16.mxu0 0
      %3453 = vmatpush2.bf16.msra.mxu0 0
      %3454 = vmatprep.subr.bf16.mxu0 0
      %3455 = vmatpush2.bf16.msra.mxu0 0
      %3456 = vmatprep.subr.bf16.mxu0 0
      %3457 = vmatpush2.bf16.msra.mxu0 0
      %3458 = vmatprep.subr.bf16.mxu0 0
      %3459 = vmatpush2.bf16.msra.mxu0 0
      %3460 = vmatprep.mubr.bf16.mxu0 0
      %3461 = vmatmul.mubr.bf16.gmra.mxu0 %v3360
      %v3462 = vpop.f32.mrf.mxu0
      %v3463 = vadd.f32 %v3332, %v3462
      %v3464 = vpop.f32.mrf.mxu0
      %v3465 = vpop.f32.mrf.mxu0
      %v3466 = vadd.f32 %v3337, %v3465
      %v3467 = vpop.f32.mrf.mxu0
      %3468 = vmatprep.mubr.bf16.mxu0 0
      %3469 = vmatmul.mubr.bf16.gmra.mxu0 %v3363
      %v3470 = vpop.f32.mrf.mxu0
      %v3471 = vadd.f32 %v3342, %v3470
      %v3472 = vpop.f32.mrf.mxu0
      %v3473 = vpop.f32.mrf.mxu0
      %v3474 = vadd.f32 %v3347, %v3473
      %v3475 = vpop.f32.mrf.mxu0
      %3476 = vdwg.mxu0
      %3481 = vrot.lane.b32.xlu0 %v3463, 32
      %v3482 = vpop.permute.xlu0 %3481
      %3483 = vrot.lane.b32.xlu0 %v3466, 32
      %v3484 = vpop.permute.xlu0 %3483
      %3485 = vrot.lane.b32.xlu0 %v3471, 32
      %v3486 = vpop.permute.xlu0 %3485
      %3487 = vrot.lane.b32.xlu0 %v3474, 32
      %v3488 = vpop.permute.xlu0 %3487
      %vm3493 = vcmask 523520
      %3494 = vst.msk [vmem:[%s548] sm:$0xff] %vm3493, %v3482
      %3495 = vst.msk [vmem:[%s548 + $0x8] sm:$0xff] %vm3493, %v3484
      %3496 = vst.msk [vmem:[%s548 + $0x10] sm:$0xff] %vm3493, %v3486
      %3497 = vst.msk [vmem:[%s548 + $0x18] sm:$0xff] %vm3493, %v3488
      %s3498 = scalar_lea.vmem [#allocation2], 64
      %v3499 = vld [vmem:[%s3498] ss:$2 sm:$0xff]
      %s3500 = scalar_lea.vmem [#allocation2], 80
      %v3501 = vld [vmem:[%s3500] ss:$2 sm:$0xff]
      %s3502 = scalar_lea.vmem [#allocation2], 96
      %v3503 = vld [vmem:[%s3502] ss:$2 sm:$0xff]
      %s3504 = scalar_lea.vmem [#allocation2], 112
      %v3505 = vld [vmem:[%s3504] ss:$2 sm:$0xff]
      %v3506 = vpack.c.bf16 %v3501, %v3499
      %v3507 = vpack.c.bf16 %v3505, %v3503
      %3508 = vmatprep.subr.bf16.mxu0 0
      %3509 = vmatpush1.bf16.msra.mxu0 0
      %3510 = vmatprep.subr.bf16.mxu0 0
      %3511 = vmatpush1.bf16.msra.mxu0 0
      %3512 = vmatprep.subr.bf16.mxu0 0
      %3513 = vmatpush1.bf16.msra.mxu0 0
      %3514 = vmatprep.subr.bf16.mxu0 0
      %3515 = vmatpush1.bf16.msra.mxu0 0
      %3516 = vmatprep.subr.bf16.mxu0 0
      %3517 = vmatpush1.bf16.msra.mxu0 0
      %3518 = vmatprep.subr.bf16.mxu0 0
      %3519 = vmatpush1.bf16.msra.mxu0 0
      %3520 = vmatprep.subr.bf16.mxu0 0
      %3521 = vmatpush1.bf16.msra.mxu0 %v3507
      %3522 = vmatprep.subr.bf16.mxu0 0
      %3523 = vmatpush1.bf16.msra.mxu0 %v3506
      %3524 = vmatprep.subr.bf16.mxu0 0
      %3525 = vmatpush2.bf16.msra.mxu0 0
      %3526 = vmatprep.subr.bf16.mxu0 0
      %3527 = vmatpush2.bf16.msra.mxu0 0
      %3528 = vmatprep.subr.bf16.mxu0 0
      %3529 = vmatpush2.bf16.msra.mxu0 0
      %3530 = vmatprep.subr.bf16.mxu0 0
      %3531 = vmatpush2.bf16.msra.mxu0 0
      %3532 = vmatprep.subr.bf16.mxu0 0
      %3533 = vmatpush2.bf16.msra.mxu0 0
      %3534 = vmatprep.subr.bf16.mxu0 0
      %3535 = vmatpush2.bf16.msra.mxu0 0
      %3536 = vmatprep.subr.bf16.mxu0 0
      %3537 = vmatpush2.bf16.msra.mxu0 0
      %3538 = vmatprep.subr.bf16.mxu0 0
      %3539 = vmatpush2.bf16.msra.mxu0 0
      %3540 = vmatprep.mubr.bf16.mxu0 0
      %3541 = vmatmul.mubr.bf16.gmra.mxu0 %v3360
      %v3542 = vpop.f32.mrf.mxu0
      %v3543 = vadd.f32 %v3332, %v3542
      %v3544 = vpop.f32.mrf.mxu0
      %v3545 = vpop.f32.mrf.mxu0
      %v3546 = vadd.f32 %v3337, %v3545
      %v3547 = vpop.f32.mrf.mxu0
      %3548 = vmatprep.mubr.bf16.mxu0 0
      %3549 = vmatmul.mubr.bf16.gmra.mxu0 %v3363
      %v3550 = vpop.f32.mrf.mxu0
      %v3551 = vadd.f32 %v3342, %v3550
      %v3552 = vpop.f32.mrf.mxu0
      %v3553 = vpop.f32.mrf.mxu0
      %v3554 = vadd.f32 %v3347, %v3553
      %v3555 = vpop.f32.mrf.mxu0
      %3556 = vdwg.mxu0
      %3561 = vrot.lane.b32.xlu0 %v3543, 64
      %v3562 = vpop.permute.xlu0 %3561
      %3563 = vrot.lane.b32.xlu0 %v3546, 64
      %v3564 = vpop.permute.xlu0 %3563
      %3565 = vrot.lane.b32.xlu0 %v3551, 64
      %v3566 = vpop.permute.xlu0 %3565
      %3567 = vrot.lane.b32.xlu0 %v3554, 64
      %v3568 = vpop.permute.xlu0 %3567
      %vm3573 = vcmask 785920
      %3574 = vst.msk [vmem:[%s548] sm:$0xff] %vm3573, %v3562
      %3575 = vst.msk [vmem:[%s548 + $0x8] sm:$0xff] %vm3573, %v3564
      %3576 = vst.msk [vmem:[%s548 + $0x10] sm:$0xff] %vm3573, %v3566
      %3577 = vst.msk [vmem:[%s548 + $0x18] sm:$0xff] %vm3573, %v3568
      %s3578 = scalar_lea.vmem [#allocation2], 65
      %v3579 = vld [vmem:[%s3578] ss:$2 sm:$0xff]
      %s3580 = scalar_lea.vmem [#allocation2], 81
      %v3581 = vld [vmem:[%s3580] ss:$2 sm:$0xff]
      %s3582 = scalar_lea.vmem [#allocation2], 97
      %v3583 = vld [vmem:[%s3582] ss:$2 sm:$0xff]
      %s3584 = scalar_lea.vmem [#allocation2], 113
      %v3585 = vld [vmem:[%s3584] ss:$2 sm:$0xff]
      %v3586 = vpack.c.bf16 %v3581, %v3579
      %v3587 = vpack.c.bf16 %v3585, %v3583
      %3588 = vmatprep.subr.bf16.mxu0 0
      %3589 = vmatpush1.bf16.msra.mxu0 0
      %3590 = vmatprep.subr.bf16.mxu0 0
      %3591 = vmatpush1.bf16.msra.mxu0 0
      %3592 = vmatprep.subr.bf16.mxu0 0
      %3593 = vmatpush1.bf16.msra.mxu0 0
      %3594 = vmatprep.subr.bf16.mxu0 0
      %3595 = vmatpush1.bf16.msra.mxu0 0
      %3596 = vmatprep.subr.bf16.mxu0 0
      %3597 = vmatpush1.bf16.msra.mxu0 0
      %3598 = vmatprep.subr.bf16.mxu0 0
      %3599 = vmatpush1.bf16.msra.mxu0 0
      %3600 = vmatprep.subr.bf16.mxu0 0
      %3601 = vmatpush1.bf16.msra.mxu0 %v3587
      %3602 = vmatprep.subr.bf16.mxu0 0
      %3603 = vmatpush1.bf16.msra.mxu0 %v3586
      %3604 = vmatprep.subr.bf16.mxu0 0
      %3605 = vmatpush2.bf16.msra.mxu0 0
      %3606 = vmatprep.subr.bf16.mxu0 0
      %3607 = vmatpush2.bf16.msra.mxu0 0
      %3608 = vmatprep.subr.bf16.mxu0 0
      %3609 = vmatpush2.bf16.msra.mxu0 0
      %3610 = vmatprep.subr.bf16.mxu0 0
      %3611 = vmatpush2.bf16.msra.mxu0 0
      %3612 = vmatprep.subr.bf16.mxu0 0
      %3613 = vmatpush2.bf16.msra.mxu0 0
      %3614 = vmatprep.subr.bf16.mxu0 0
      %3615 = vmatpush2.bf16.msra.mxu0 0
      %3616 = vmatprep.subr.bf16.mxu0 0
      %3617 = vmatpush2.bf16.msra.mxu0 0
      %3618 = vmatprep.subr.bf16.mxu0 0
      %3619 = vmatpush2.bf16.msra.mxu0 0
      %3620 = vmatprep.mubr.bf16.mxu0 0
      %3621 = vmatmul.mubr.bf16.gmra.mxu0 %v3360
      %v3622 = vpop.f32.mrf.mxu0
      %v3623 = vadd.f32 %v3332, %v3622
      %v3624 = vpop.f32.mrf.mxu0
      %v3625 = vpop.f32.mrf.mxu0
      %v3626 = vadd.f32 %v3337, %v3625
      %v3627 = vpop.f32.mrf.mxu0
      %3628 = vmatprep.mubr.bf16.mxu0 0
      %3629 = vmatmul.mubr.bf16.gmra.mxu0 %v3363
      %v3630 = vpop.f32.mrf.mxu0
      %v3631 = vadd.f32 %v3342, %v3630
      %v3632 = vpop.f32.mrf.mxu0
      %v3633 = vpop.f32.mrf.mxu0
      %v3634 = vadd.f32 %v3347, %v3633
      %v3635 = vpop.f32.mrf.mxu0
      %3636 = vdwg.mxu0
      %3641 = vrot.lane.b32.xlu0 %v3623, 96
      %v3642 = vpop.permute.xlu0 %3641
      %3643 = vrot.lane.b32.xlu0 %v3626, 96
      %v3644 = vpop.permute.xlu0 %3643
      %3645 = vrot.lane.b32.xlu0 %v3631, 96
      %v3646 = vpop.permute.xlu0 %3645
      %3647 = vrot.lane.b32.xlu0 %v3634, 96
      %v3648 = vpop.permute.xlu0 %3647
      %vm3653 = vcmask 1048320
      %3654 = vst.msk [vmem:[%s548] sm:$0xff] %vm3653, %v3642
      %3655 = vst.msk [vmem:[%s548 + $0x8] sm:$0xff] %vm3653, %v3644
      %3656 = vst.msk [vmem:[%s548 + $0x10] sm:$0xff] %vm3653, %v3646
      %3657 = vst.msk [vmem:[%s548 + $0x18] sm:$0xff] %vm3653, %v3648
      %p3658 = scmp.lt.s32.totalorder %s27, 1
      %s3659 = scalar_select %p3658, %s27, 1
      %s3660 = smul.addr %s3659, 4
      %s3661 = smul.addr %s3660, 8
      %s3662 = scalar_lea.vmem %s16, %s3661
      // Predicated region
      $region85: #{transformer_forward.1} parent=83 // pred_check
        %p3663 = pneg %p391
      $region86: #{transformer_forward.1} parent=83 // pred_check_branch
        %3665 = sbr.rel (%p3663) target = $region88
      $region87: #{transformer_forward.1} parent=83 // pred_region
        _
      $region88: #{transformer_forward.1} parent=83 // pred_fallthru
        _
    $region84: #{transformer_forward.1} parent=5 // pred_fallthru
      _
    %p3666 = scmp.le.s32.totalorder 2, %s22
    // Predicated region
    $region89: #{transformer_forward.1} parent=5 // pred_check
      %p3667 = pneg %p3666
    $region90: #{transformer_forward.1} parent=5 // pred_check_branch
      %3669 = sbr.rel (%p3667) target = $region92
    $region91: #{transformer_forward.1} parent=5 // pred_region
      %s3670 = ssub.s32 %s22, 2
      // Predicated region
      $region93: #{transformer_forward.1} parent=91 // pred_check
        %p3671 = pneg %p397
      $region94: #{transformer_forward.1} parent=91 // pred_check_branch
        %3673 = sbr.rel (%p3671) target = $region96
      $region95: #{transformer_forward.1} parent=91 // pred_region
        %p3674 = scmp.lt.s32.totalorder %s28, 1
        %s3675 = scalar_select %p3674, %s28, 1
        %s3676 = smul.addr %s3675, 4
        %s3677 = smul.addr %s3676, 8
        %s3678 = scalar_lea.vmem %s16, %s3677
      $region96: #{transformer_forward.1} parent=91 // pred_fallthru
        _
    $region92: #{transformer_forward.1} parent=5 // pred_fallthru
      _
  $region6: #{transformer_forward.1} parent=0 // loop_footer
    %s26 = sadd.s32 1, %s22
  $region7: #{transformer_forward.1} parent=0 // loop_footer_branch
    %21 = sbr.rel target = $region3
  $region8: #{transformer_forward.1} parent=0 // loop_exit
    _

</llo_original>
